<compile_context>
chip_gen: v7x
topology: tpu7x:2x2x1
jax: 0.10.0
libtpu: 0.0.40
codegen_flags: <defaults>
</compile_context>

<pallas_src>
import functools
import math

import jax
import jax.numpy as jnp
from jax.experimental import pallas as pl
from jax.experimental.pallas import tpu as pltpu

HIDDEN = 750   # hidden width hardcoded by the PyTorch module
H_PAD = 768    # 6 x 128 lanes: exact vreg / MXU tiling
LANE = 128


def _round_up(x, m):
    return (x + m - 1) // m * m


def _vae_actor_kernel(acts_ref, w_in_ref, b_ref, w_out_ref, e2_ref, d2_ref,
                      out_ref, *, obs_dim, action_dim, latent_dim):
    SA = obs_dim + action_dim
    SA8 = _round_up(SA, 8)
    OBS8 = _round_up(obs_dim, 8)
    L = latent_dim
    A = action_dim
    bf16 = jnp.bfloat16
    f32 = jnp.float32

    # ---- unpack activations (one lane-aligned slab: [state|action| pad |eps]) -
    sa = acts_ref[:, :SA]                      # state || action (f32)
    s = acts_ref[:, :obs_dim]                  # state
    eps = acts_ref[:, LANE:LANE + L]           # reparameterization noise

    # ---- unpack input-side weights (one slab, 8-row aligned sections) --------
    e1_w = w_in_ref[0:SA, :].astype(bf16)                          # (SA, H)
    d1_ws = w_in_ref[SA8:SA8 + obs_dim, :].astype(bf16)            # (obs, H)
    d1_wz = w_in_ref[SA8 + OBS8:SA8 + OBS8 + L, :].astype(bf16)    # (L, H)

    # ---- unpack biases (one f32 slab) -----------------------------------------
    e1_b = b_ref[0:1, :]
    e2_b = b_ref[1:2, :]
    d1_b = b_ref[2:3, :]
    d2_b = b_ref[3:4, :]
    head_b = b_ref[4:5, :2 * LANE]                  # mean_b | log_std_b (aligned)
    d3_b = b_ref[4:5, 2 * LANE:2 * LANE + A]

    # ---- unpack output-side weights (bf16 slab, lane-aligned sections) --------
    head_w = w_out_ref[:, :2 * LANE]                # mean_w | log_std_w
    d3_w = w_out_ref[:, 2 * LANE:2 * LANE + A]

    # ---- encoder: h = relu(e2(relu(e1([s, a])))) -------------------------------
    h = jnp.dot(sa.astype(bf16), e1_w, preferred_element_type=f32) + e1_b
    h = jnp.maximum(h, 0.0)
    h = jnp.dot(h.astype(bf16), e2_ref[...], preferred_element_type=f32) + e2_b
    h = jnp.maximum(h, 0.0)

    # ---- fused mean / log_std heads + reparameterization -----------------------
    heads = jnp.dot(h.astype(bf16), head_w, preferred_element_type=f32) + head_b
    mean = heads[:, :L]
    log_std = jnp.clip(heads[:, LANE:LANE + L], -4.0, 15.0)
    std = jnp.exp(log_std)
    z = mean + std * eps

    # ---- decoder: u = d3(relu(d2(relu(d1([s, z]))))) (raw d3, no tanh) ---------
    d = jnp.dot(s.astype(bf16), d1_ws, preferred_element_type=f32)
    d = d + jnp.dot(z.astype(bf16), d1_wz, preferred_element_type=f32)
    d = jnp.maximum(d + d1_b, 0.0)
    d = jnp.dot(d.astype(bf16), d2_ref[...], preferred_element_type=f32) + d2_b
    d = jnp.maximum(d, 0.0)
    u = jnp.dot(d.astype(bf16), d3_w, preferred_element_type=f32) + d3_b

    # ---- single packed, lane-aligned output: [u | mean | std] ------------------
    out_ref[...] = jnp.zeros_like(out_ref)
    out_ref[:, :A] = u.astype(out_ref.dtype)
    out_ref[:, LANE:LANE + L] = mean.astype(out_ref.dtype)
    out_ref[:, 2 * LANE:2 * LANE + L] = std.astype(out_ref.dtype)


def init_params(key, obs_dim, action_dim, latent_dim, dtype=jnp.float32):
    """torch.nn.Linear-style init; weights stored (in, out)."""
    def linear(k, fan_in, fan_out):
        kw, kb = jax.random.split(k)
        bound = 1.0 / math.sqrt(fan_in)
        w = jax.random.uniform(kw, (fan_in, fan_out), dtype, -bound, bound)
        b = jax.random.uniform(kb, (fan_out,), dtype, -bound, bound)
        return w, b

    keys = jax.random.split(key, 7)
    e1_w, e1_b = linear(keys[0], obs_dim + action_dim, HIDDEN)
    e2_w, e2_b = linear(keys[1], HIDDEN, HIDDEN)
    mean_w, mean_b = linear(keys[2], HIDDEN, latent_dim)
    ls_w, ls_b = linear(keys[3], HIDDEN, latent_dim)
    d1_w, d1_b = linear(keys[4], obs_dim + latent_dim, HIDDEN)
    d2_w, d2_b = linear(keys[5], HIDDEN, HIDDEN)
    d3_w, d3_b = linear(keys[6], HIDDEN, action_dim)
    return dict(e1_w=e1_w, e1_b=e1_b, e2_w=e2_w, e2_b=e2_b,
                mean_w=mean_w, mean_b=mean_b, ls_w=ls_w, ls_b=ls_b,
                d1_w=d1_w, d1_b=d1_b, d2_w=d2_w, d2_b=d2_b,
                d3_w=d3_w, d3_b=d3_b)


def pack_params(params, obs_dim, action_dim, latent_dim):
    """Pack the 14 parameter tensors into 5 padded HBM slabs for the kernel."""
    f32, bf16 = jnp.float32, jnp.bfloat16
    SA = obs_dim + action_dim
    SA8 = _round_up(SA, 8)
    OBS8 = _round_up(obs_dim, 8)
    L8 = _round_up(latent_dim, 8)

    def pad_h(w):  # (in, HIDDEN) -> (in, H_PAD)
        return jnp.pad(w.astype(f32), ((0, 0), (0, H_PAD - HIDDEN)))

    # input-side weights (f32 slab; cast to bf16 in-kernel), 8-row sections
    w_in = jnp.zeros((SA8 + OBS8 + L8, H_PAD), f32)
    w_in = w_in.at[0:SA].set(pad_h(params["e1_w"]))
    w_in = w_in.at[SA8:SA8 + obs_dim].set(pad_h(params["d1_w"][:obs_dim]))
    w_in = w_in.at[SA8 + OBS8:SA8 + OBS8 + latent_dim].set(
        pad_h(params["d1_w"][obs_dim:]))

    # bias slab (f32)
    b = jnp.zeros((8, H_PAD), f32)
    b = b.at[0, :HIDDEN].set(params["e1_b"])
    b = b.at[1, :HIDDEN].set(params["e2_b"])
    b = b.at[2, :HIDDEN].set(params["d1_b"])
    b = b.at[3, :HIDDEN].set(params["d2_b"])
    b = b.at[4, :latent_dim].set(params["mean_b"])
    b = b.at[4, LANE:LANE + latent_dim].set(params["ls_b"])
    b = b.at[4, 2 * LANE:2 * LANE + action_dim].set(params["d3_b"])

    # output-side weights (bf16 slab, lane-aligned sections: mean | log_std | d3)
    w_out = jnp.zeros((H_PAD, 3 * LANE), f32)
    w_out = w_out.at[:HIDDEN, :latent_dim].set(params["mean_w"])
    w_out = w_out.at[:HIDDEN, LANE:LANE + latent_dim].set(params["ls_w"])
    w_out = w_out.at[:HIDDEN, 2 * LANE:2 * LANE + action_dim].set(params["d3_w"])

    def pad_hh(w):  # (HIDDEN, HIDDEN) -> (H_PAD, H_PAD), bf16
        return jnp.pad(w, ((0, H_PAD - HIDDEN), (0, H_PAD - HIDDEN))).astype(bf16)

    return {"w_in": w_in, "b": b, "w_out": w_out.astype(bf16),
            "e2_w": pad_hh(params["e2_w"]), "d2_w": pad_hh(params["d2_w"])}


def reverse_vae_actor_forward(packed, next_state, action, eps, *,
                              obs_dim, action_dim, latent_dim):
    """Pallas equivalent of RerverseVaeActor.forward(next_state, action).

    Returns (u, mean, std).  The Gaussian noise (torch drew it host-side with
    np.random) is supplied explicitly as `eps` of shape (batch, latent_dim).
    """
    batch = next_state.shape[0]
    B = max(8, _round_up(batch, 8))  # fill at least one f32 sublane tile
    f32 = jnp.float32

    # single lane-aligned activation slab: [state | action | pad | eps]
    acts = jnp.zeros((B, 2 * LANE), f32)
    acts = acts.at[:batch, :obs_dim].set(next_state.astype(f32))
    acts = acts.at[:batch, obs_dim:obs_dim + action_dim].set(action.astype(f32))
    acts = acts.at[:batch, LANE:LANE + latent_dim].set(eps.astype(f32))

    kernel = functools.partial(_vae_actor_kernel, obs_dim=obs_dim,
                               action_dim=action_dim, latent_dim=latent_dim)
    vmem = pl.BlockSpec(memory_space=pltpu.MemorySpace.VMEM)

    out = pl.pallas_call(
        kernel,
        out_shape=jax.ShapeDtypeStruct((B, 3 * LANE), f32),
        in_specs=[vmem] * 6,
        out_specs=vmem,
        compiler_params=pltpu.CompilerParams(vmem_limit_bytes=16 * 1024 * 1024),
    )(acts, packed["w_in"], packed["b"], packed["w_out"],
      packed["e2_w"], packed["d2_w"])

    u = out[:batch, :action_dim]
    mean = out[:batch, LANE:LANE + latent_dim]
    std = out[:batch, 2 * LANE:2 * LANE + latent_dim]
    return u, mean, std


def _ref_forward(p, s, a, eps):
    """Pure-JAX reference mirroring the torch forward with the kernel's
    bf16-weight / f32-accumulate numerics."""
    bf16 = jnp.bfloat16

    def mm(x, w):
        return jnp.dot(x.astype(bf16), w.astype(bf16),
                       preferred_element_type=jnp.float32)

    h = jax.nn.relu(mm(jnp.concatenate([s, a], axis=1), p["e1_w"]) + p["e1_b"])
    h = jax.nn.relu(mm(h, p["e2_w"]) + p["e2_b"])
    mean = mm(h, p["mean_w"]) + p["mean_b"]
    log_std = jnp.clip(mm(h, p["ls_w"]) + p["ls_b"], -4.0, 15.0)
    std = jnp.exp(log_std)
    z = mean + std * eps
    d = jax.nn.relu(mm(jnp.concatenate([s, z], axis=1), p["d1_w"]) + p["d1_b"])
    d = jax.nn.relu(mm(d, p["d2_w"]) + p["d2_b"])
    u = mm(d, p["d3_w"]) + p["d3_b"]
    return u, mean, std


if __name__ == "__main__":
    key = jax.random.PRNGKey(0)
    k_param, k_state, k_action, k_eps = jax.random.split(key, 4)

    batch, obs_dim, action_dim, latent_dim = 2, 17, 6, 12

    params = init_params(k_param, obs_dim, action_dim, latent_dim)
    packed = pack_params(params, obs_dim, action_dim, latent_dim)

    next_state = jax.random.normal(k_state, (batch, obs_dim), dtype=jnp.float32)
    action = jax.random.normal(k_action, (batch, action_dim), dtype=jnp.float32)
    # TODO(synk): torch drew this noise host-side with np.random; here it is an
    # explicit deterministic jax.random input to keep the kernel reproducible.
    eps = jax.random.normal(k_eps, (batch, latent_dim), dtype=jnp.float32)

    u, mean, std = reverse_vae_actor_forward(
        packed, next_state, action, eps,
        obs_dim=obs_dim, action_dim=action_dim, latent_dim=latent_dim)
    jax.block_until_ready((u, mean, std))

    u_ref, mean_ref, std_ref = _ref_forward(params, next_state, action, eps)

    assert u.shape == (batch, action_dim)
    assert mean.shape == (batch, latent_dim)
    assert std.shape == (batch, latent_dim)
    assert jnp.allclose(u, u_ref, atol=1e-2, rtol=1e-2)
    assert jnp.allclose(mean, mean_ref, atol=1e-2, rtol=1e-2)
    assert jnp.allclose(std, std_ref, atol=1e-2, rtol=1e-2)

    print("KERNEL_OK")
</pallas_src>

<mosaic_0001>
module attributes {stable_mosaic.version = 11 : i64} {
  func.func @_vae_actor_kernel(%arg0: memref<8x256xf32, #tpu.memory_space<vmem>>, %arg1: memref<64x768xf32, #tpu.memory_space<vmem>>, %arg2: memref<8x768xf32, #tpu.memory_space<vmem>>, %arg3: memref<768x384xbf16, #tpu.memory_space<vmem>>, %arg4: memref<768x768xbf16, #tpu.memory_space<vmem>>, %arg5: memref<768x768xbf16, #tpu.memory_space<vmem>>, %arg6: memref<8x384xf32, #tpu.memory_space<vmem>>) attributes {dimension_semantics = [], scalar_prefetch = 0 : i64, scratch_operands = 0 : i64, tpu.core_type = #tpu.core_type<tc>} {
    %c0 = arith.constant 0 : index
    %c0_0 = arith.constant 0 : index
    %0 = vector.load %arg0[%c0, %c0_0] : memref<8x256xf32, #tpu.memory_space<vmem>>, vector<8x23xf32>
    %c0_1 = arith.constant 0 : index
    %c0_2 = arith.constant 0 : index
    %1 = vector.load %arg0[%c0_1, %c0_2] : memref<8x256xf32, #tpu.memory_space<vmem>>, vector<8x17xf32>
    %c0_3 = arith.constant 0 : index
    %c128 = arith.constant 128 : index
    %2 = vector.load %arg0[%c0_3, %c128] : memref<8x256xf32, #tpu.memory_space<vmem>>, vector<8x12xf32>
    %c0_4 = arith.constant 0 : index
    %c0_5 = arith.constant 0 : index
    %3 = vector.load %arg1[%c0_4, %c0_5] : memref<64x768xf32, #tpu.memory_space<vmem>>, vector<23x768xf32>
    %4 = arith.truncf %3 : vector<23x768xf32> to vector<23x768xbf16>
    %c24 = arith.constant 24 : index
    %c0_6 = arith.constant 0 : index
    %5 = vector.load %arg1[%c24, %c0_6] : memref<64x768xf32, #tpu.memory_space<vmem>>, vector<17x768xf32>
    %6 = arith.truncf %5 : vector<17x768xf32> to vector<17x768xbf16>
    %c48 = arith.constant 48 : index
    %c0_7 = arith.constant 0 : index
    %7 = vector.load %arg1[%c48, %c0_7] : memref<64x768xf32, #tpu.memory_space<vmem>>, vector<12x768xf32>
    %8 = arith.truncf %7 : vector<12x768xf32> to vector<12x768xbf16>
    %c0_8 = arith.constant 0 : index
    %c0_9 = arith.constant 0 : index
    %9 = vector.load %arg2[%c0_8, %c0_9] : memref<8x768xf32, #tpu.memory_space<vmem>>, vector<1x768xf32>
    %c1 = arith.constant 1 : index
    %c0_10 = arith.constant 0 : index
    %10 = vector.load %arg2[%c1, %c0_10] : memref<8x768xf32, #tpu.memory_space<vmem>>, vector<1x768xf32>
    %c2 = arith.constant 2 : index
    %c0_11 = arith.constant 0 : index
    %11 = vector.load %arg2[%c2, %c0_11] : memref<8x768xf32, #tpu.memory_space<vmem>>, vector<1x768xf32>
    %c3 = arith.constant 3 : index
    %c0_12 = arith.constant 0 : index
    %12 = vector.load %arg2[%c3, %c0_12] : memref<8x768xf32, #tpu.memory_space<vmem>>, vector<1x768xf32>
    %c4 = arith.constant 4 : index
    %c0_13 = arith.constant 0 : index
    %13 = vector.load %arg2[%c4, %c0_13] : memref<8x768xf32, #tpu.memory_space<vmem>>, vector<1x256xf32>
    %c4_14 = arith.constant 4 : index
    %c256 = arith.constant 256 : index
    %14 = vector.load %arg2[%c4_14, %c256] : memref<8x768xf32, #tpu.memory_space<vmem>>, vector<1x6xf32>
    %c0_15 = arith.constant 0 : index
    %c0_16 = arith.constant 0 : index
    %15 = vector.load %arg3[%c0_15, %c0_16] : memref<768x384xbf16, #tpu.memory_space<vmem>>, vector<768x256xbf16>
    %c0_17 = arith.constant 0 : index
    %c256_18 = arith.constant 256 : index
    %16 = vector.load %arg3[%c0_17, %c256_18] : memref<768x384xbf16, #tpu.memory_space<vmem>>, vector<768x6xbf16>
    %17 = arith.truncf %0 : vector<8x23xf32> to vector<8x23xbf16>
    %cst = arith.constant dense<0.000000e+00> : vector<8x768xf32>
    %18 = tpu.matmul %17, %4, %cst {dimension_numbers = #tpu.dot_dimension_numbers<[1], [0], [0], [1], [0, 0, 1, 1], [], []>} : vector<8x23xbf16>, vector<23x768xbf16>, vector<8x768xf32> -> vector<8x768xf32>
    %19 = vector.broadcast %9 : vector<1x768xf32> to vector<8x768xf32>
    %20 = arith.addf %18, %19 : vector<8x768xf32>
    %cst_19 = arith.constant 0.000000e+00 : f32
    %21 = vector.broadcast %cst_19 : f32 to vector<8x768xf32>
    %22 = arith.maximumf %20, %21 : vector<8x768xf32>
    %23 = arith.truncf %22 : vector<8x768xf32> to vector<8x768xbf16>
    %c0_20 = arith.constant 0 : index
    %c0_21 = arith.constant 0 : index
    %24 = vector.load %arg4[%c0_20, %c0_21] : memref<768x768xbf16, #tpu.memory_space<vmem>>, vector<768x768xbf16>
    %cst_22 = arith.constant dense<0.000000e+00> : vector<8x768xf32>
    %25 = tpu.matmul %23, %24, %cst_22 {dimension_numbers = #tpu.dot_dimension_numbers<[1], [0], [0], [1], [0, 0, 1, 1], [], []>} : vector<8x768xbf16>, vector<768x768xbf16>, vector<8x768xf32> -> vector<8x768xf32>
    %26 = vector.broadcast %10 : vector<1x768xf32> to vector<8x768xf32>
    %27 = arith.addf %25, %26 : vector<8x768xf32>
    %cst_23 = arith.constant 0.000000e+00 : f32
    %28 = vector.broadcast %cst_23 : f32 to vector<8x768xf32>
    %29 = arith.maximumf %27, %28 : vector<8x768xf32>
    %30 = arith.truncf %29 : vector<8x768xf32> to vector<8x768xbf16>
    %cst_24 = arith.constant dense<0.000000e+00> : vector<8x256xf32>
    %31 = tpu.matmul %30, %15, %cst_24 {dimension_numbers = #tpu.dot_dimension_numbers<[1], [0], [0], [1], [0, 0, 1, 1], [], []>} : vector<8x768xbf16>, vector<768x256xbf16>, vector<8x256xf32> -> vector<8x256xf32>
    %32 = vector.broadcast %13 : vector<1x256xf32> to vector<8x256xf32>
    %33 = arith.addf %31, %32 : vector<8x256xf32>
    %34 = vector.extract_strided_slice %33 {offsets = [0, 0], sizes = [8, 12], strides = [1, 1]} : vector<8x256xf32> to vector<8x12xf32>
    %35 = vector.extract_strided_slice %33 {offsets = [0, 128], sizes = [8, 12], strides = [1, 1]} : vector<8x256xf32> to vector<8x12xf32>
    %cst_25 = arith.constant -4.000000e+00 : f32
    %cst_26 = arith.constant 1.500000e+01 : f32
    %36 = vector.broadcast %cst_25 : f32 to vector<8x12xf32>
    %37 = arith.maximumf %36, %35 : vector<8x12xf32>
    %38 = vector.broadcast %cst_26 : f32 to vector<8x12xf32>
    %39 = arith.minimumf %38, %37 : vector<8x12xf32>
    %40 = math.exp %39 : vector<8x12xf32>
    %41 = arith.mulf %40, %2 : vector<8x12xf32>
    %42 = arith.addf %34, %41 : vector<8x12xf32>
    %43 = arith.truncf %1 : vector<8x17xf32> to vector<8x17xbf16>
    %cst_27 = arith.constant dense<0.000000e+00> : vector<8x768xf32>
    %44 = tpu.matmul %43, %6, %cst_27 {dimension_numbers = #tpu.dot_dimension_numbers<[1], [0], [0], [1], [0, 0, 1, 1], [], []>} : vector<8x17xbf16>, vector<17x768xbf16>, vector<8x768xf32> -> vector<8x768xf32>
    %45 = arith.truncf %42 : vector<8x12xf32> to vector<8x12xbf16>
    %cst_28 = arith.constant dense<0.000000e+00> : vector<8x768xf32>
    %46 = tpu.matmul %45, %8, %cst_28 {dimension_numbers = #tpu.dot_dimension_numbers<[1], [0], [0], [1], [0, 0, 1, 1], [], []>} : vector<8x12xbf16>, vector<12x768xbf16>, vector<8x768xf32> -> vector<8x768xf32>
    %47 = arith.addf %44, %46 : vector<8x768xf32>
    %48 = vector.broadcast %11 : vector<1x768xf32> to vector<8x768xf32>
    %49 = arith.addf %47, %48 : vector<8x768xf32>
    %cst_29 = arith.constant 0.000000e+00 : f32
    %50 = vector.broadcast %cst_29 : f32 to vector<8x768xf32>
    %51 = arith.maximumf %49, %50 : vector<8x768xf32>
    %52 = arith.truncf %51 : vector<8x768xf32> to vector<8x768xbf16>
    %c0_30 = arith.constant 0 : index
    %c0_31 = arith.constant 0 : index
    %53 = vector.load %arg5[%c0_30, %c0_31] : memref<768x768xbf16, #tpu.memory_space<vmem>>, vector<768x768xbf16>
    %cst_32 = arith.constant dense<0.000000e+00> : vector<8x768xf32>
    %54 = tpu.matmul %52, %53, %cst_32 {dimension_numbers = #tpu.dot_dimension_numbers<[1], [0], [0], [1], [0, 0, 1, 1], [], []>} : vector<8x768xbf16>, vector<768x768xbf16>, vector<8x768xf32> -> vector<8x768xf32>
    %55 = vector.broadcast %12 : vector<1x768xf32> to vector<8x768xf32>
    %56 = arith.addf %54, %55 : vector<8x768xf32>
    %cst_33 = arith.constant 0.000000e+00 : f32
    %57 = vector.broadcast %cst_33 : f32 to vector<8x768xf32>
    %58 = arith.maximumf %56, %57 : vector<8x768xf32>
    %59 = arith.truncf %58 : vector<8x768xf32> to vector<8x768xbf16>
    %cst_34 = arith.constant dense<0.000000e+00> : vector<8x6xf32>
    %60 = tpu.matmul %59, %16, %cst_34 {dimension_numbers = #tpu.dot_dimension_numbers<[1], [0], [0], [1], [0, 0, 1, 1], [], []>} : vector<8x768xbf16>, vector<768x6xbf16>, vector<8x6xf32> -> vector<8x6xf32>
    %61 = vector.broadcast %14 : vector<1x6xf32> to vector<8x6xf32>
    %62 = arith.addf %60, %61 : vector<8x6xf32>
    %cst_35 = arith.constant 0.000000e+00 : f32
    %63 = vector.broadcast %cst_35 : f32 to vector<8x384xf32>
    %c0_36 = arith.constant 0 : index
    %c0_37 = arith.constant 0 : index
    %64 = vector.load %arg6[%c0_36, %c0_37] : memref<8x384xf32, #tpu.memory_space<vmem>>, vector<8x384xf32>
    tpu.vector_store %arg6[%c0_36, %c0_37], %63 {strides = array<i32>} : memref<8x384xf32, #tpu.memory_space<vmem>>, vector<8x384xf32>,
    %c0_38 = arith.constant 0 : index
    %c0_39 = arith.constant 0 : index
    %65 = vector.load %arg6[%c0_38, %c0_39] : memref<8x384xf32, #tpu.memory_space<vmem>>, vector<8x6xf32>
    tpu.vector_store %arg6[%c0_38, %c0_39], %62 {strides = array<i32>} : memref<8x384xf32, #tpu.memory_space<vmem>>, vector<8x6xf32>,
    %c0_40 = arith.constant 0 : index
    %c128_41 = arith.constant 128 : index
    %66 = vector.load %arg6[%c0_40, %c128_41] : memref<8x384xf32, #tpu.memory_space<vmem>>, vector<8x12xf32>
    tpu.vector_store %arg6[%c0_40, %c128_41], %34 {strides = array<i32>} : memref<8x384xf32, #tpu.memory_space<vmem>>, vector<8x12xf32>,
    %c0_42 = arith.constant 0 : index
    %c256_43 = arith.constant 256 : index
    %67 = vector.load %arg6[%c0_42, %c256_43] : memref<8x384xf32, #tpu.memory_space<vmem>>, vector<8x12xf32>
    tpu.vector_store %arg6[%c0_42, %c256_43], %40 {strides = array<i32>} : memref<8x384xf32, #tpu.memory_space<vmem>>, vector<8x12xf32>,
    return
  }
}

</mosaic_0001>

<llo_original>
// kernel: tpu_custom_call.1
$region0: #{tpu_custom_call.1}
  #allocation0 [shape = 'u32[]', space=smem, size = 0x4, offset = 0x4, fixed_abs, tag = 'smem constant byte address 0x4 - core index']
  #allocation1 [shape = 'u32[144,128]{1,0:T(1,128)}', space=vmem, size = 0x12000, scoped, tag = 'internal scratch']
  %s0 = inlined_call_operand.hbm [shape: f32[8,256], index: 0, kind: input, shape index: {}]
  %s1 = inlined_call_operand.hbm [shape: f32[64,768], index: 1, kind: input, shape index: {}]
  %s2 = inlined_call_operand.hbm [shape: f32[8,768], index: 2, kind: input, shape index: {}]
  %s3 = inlined_call_operand.hbm [shape: bf16[768,384], index: 3, kind: input, shape index: {}]
  %s4 = inlined_call_operand.hbm [shape: bf16[768,768], index: 4, kind: input, shape index: {}]
  %s5 = inlined_call_operand.hbm [shape: bf16[768,768], index: 5, kind: input, shape index: {}]
  %s6 = inlined_call_operand.hbm [shape: f32[8,384], index: 6, kind: output, shape index: {}]
  %s7 = sld [smem:[#allocation0]]
  $region58: #{tpu_custom_call.1} parent=0
    _
  %s9 = ssub.s32 1, %s7
  %s10 = scalar_select 0, %s9, %s7
  $region1: #{tpu_custom_call.1} parent=0
    #allocation2 [shape = 'u8[8192]{0}', space=vmem, size = 0x2000, scoped, tag = 'input window, operand 0, single buffered']
    #allocation3 [shape = 's32[1]{0}', space=sflag, size = 0x4, scoped, tag = 'scoped memory for tpu_custom_call.1']
    #allocation4 [shape = 's32[1]{0}', space=sflag, size = 0x4, scoped, tag = 'scoped memory for tpu_custom_call.1']
    #allocation5 [shape = 'u8[196608]{0}', space=vmem, size = 0x30000, scoped, tag = 'input window, operand 1, single buffered']
    #allocation6 [shape = 's32[1]{0}', space=sflag, size = 0x4, scoped, tag = 'scoped memory for tpu_custom_call.1']
    #allocation7 [shape = 'u8[24576]{0}', space=vmem, size = 0x6000, scoped, tag = 'input window, operand 2, single buffered']
    #allocation8 [shape = 'u8[589824]{0}', space=vmem, size = 0x90000, scoped, tag = 'input window, operand 3, single buffered']
    #allocation9 [shape = 's32[1]{0}', space=sflag, size = 0x4, scoped, tag = 'scoped memory for tpu_custom_call.1']
    #allocation10 [shape = 'u8[1179648]{0}', space=vmem, size = 0x120000, scoped, tag = 'input window, operand 4, single buffered']
    #allocation11 [shape = 'u8[1179648]{0}', space=vmem, size = 0x120000, scoped, tag = 'input window, operand 5, single buffered']
    #allocation12 [shape = 's32[1]{0}', space=sflag, size = 0x4, scoped, tag = 'scoped memory for tpu_custom_call.1']
    #allocation13 [shape = 'u8[12288]{0}', space=vmem, size = 0x3000, scoped, tag = 'output window, operand 0, single buffered']
    %11 = vsyncpa [#allocation3], 0
    %12 = vsyncpa [#allocation6], 0
    %13 = vsyncpa [#allocation9], 0
    %14 = vsyncpa [#allocation12], 0
    %15 = vsyncpa [#allocation4], 0
    // Predicated region
    $region2: #{tpu_custom_call.1} parent=1 // pred_check
      _
    $region3: #{tpu_custom_call.1} parent=1 // pred_check_branch
      %17 = sbr.rel (0) target = $region5
    $region4: #{tpu_custom_call.1} parent=1 // pred_region
      %s19 = ssub.s32 256, 256
      %20 = vsyncadd [#allocation3], %s19
      %s22 = sshll.u32 [#allocation2], 4
      %s23 = int_to_ptr.vmem [resolvable:$true] %s22
      %25 = dma.hbm_to_vmem [thread:$0]  %s0, 256, %s23, [#allocation3]
    $region5: #{tpu_custom_call.1} parent=1 // pred_fallthru
      _
    // Predicated region
    $region6: #{tpu_custom_call.1} parent=1 // pred_check
      _
    $region7: #{tpu_custom_call.1} parent=1 // pred_check_branch
      %27 = sbr.rel (0) target = $region9
    $region8: #{tpu_custom_call.1} parent=1 // pred_region
      %s29 = ssub.s32 6144, 6144
      %30 = vsyncadd [#allocation6], %s29
      %s31 = sshll.u32 [#allocation5], 4
      %s32 = int_to_ptr.vmem [resolvable:$true] %s31
      %37 = dma.hbm_to_vmem [thread:$0]  %s1, 6144, %s32, [#allocation6], 768, 768, 48
    $region9: #{tpu_custom_call.1} parent=1 // pred_fallthru
      _
    // Predicated region
    $region10: #{tpu_custom_call.1} parent=1 // pred_check
      _
    $region11: #{tpu_custom_call.1} parent=1 // pred_check_branch
      %39 = sbr.rel (0) target = $region13
    $region12: #{tpu_custom_call.1} parent=1 // pred_region
      %s41 = ssub.s32 768, 768
      %42 = vsyncadd [#allocation6], %s41
      %s44 = sshll.u32 [#allocation7], 4
      %s45 = int_to_ptr.vmem [resolvable:$true] %s44
      %47 = dma.hbm_to_vmem [thread:$0]  %s2, 768, %s45, [#allocation6]
    $region13: #{tpu_custom_call.1} parent=1 // pred_fallthru
      _
    // Predicated region
    $region14: #{tpu_custom_call.1} parent=1 // pred_check
      _
    $region15: #{tpu_custom_call.1} parent=1 // pred_check_branch
      %49 = sbr.rel (0) target = $region17
    $region16: #{tpu_custom_call.1} parent=1 // pred_region
      %s51 = ssub.s32 18432, 18432
      %52 = vsyncadd [#allocation9], %s51
      %s53 = sshll.u32 [#allocation8], 4
      %s54 = int_to_ptr.vmem [resolvable:$true] %s53
      %59 = dma.hbm_to_vmem [thread:$0]  %s3, 18432, %s54, [#allocation9], 192, 192, 12
    $region17: #{tpu_custom_call.1} parent=1 // pred_fallthru
      _
    // Predicated region
    $region18: #{tpu_custom_call.1} parent=1 // pred_check
      _
    $region19: #{tpu_custom_call.1} parent=1 // pred_check_branch
      %61 = sbr.rel (0) target = $region21
    $region20: #{tpu_custom_call.1} parent=1 // pred_region
      %s63 = ssub.s32 36864, 36864
      %64 = vsyncadd [#allocation9], %s63
      %s65 = sshll.u32 [#allocation10], 4
      %s66 = int_to_ptr.vmem [resolvable:$true] %s65
      %71 = dma.hbm_to_vmem [thread:$0]  %s4, 36864, %s66, [#allocation9], 384, 384, 24
    $region21: #{tpu_custom_call.1} parent=1 // pred_fallthru
      _
    // Predicated region
    $region22: #{tpu_custom_call.1} parent=1 // pred_check
      _
    $region23: #{tpu_custom_call.1} parent=1 // pred_check_branch
      %73 = sbr.rel (0) target = $region25
    $region24: #{tpu_custom_call.1} parent=1 // pred_region
      %s75 = ssub.s32 36864, 36864
      %76 = vsyncadd [#allocation12], %s75
      %s77 = sshll.u32 [#allocation11], 4
      %s78 = int_to_ptr.vmem [resolvable:$true] %s77
      %83 = dma.hbm_to_vmem [thread:$0]  %s5, 36864, %s78, [#allocation12], 384, 384, 24
    $region25: #{tpu_custom_call.1} parent=1 // pred_fallthru
      _
    // Predicated region
    $region26: #{tpu_custom_call.1} parent=1 // pred_check
      _
    $region27: #{tpu_custom_call.1} parent=1 // pred_check_branch
      %85 = sbr.rel (0) target = $region29
    $region28: #{tpu_custom_call.1} parent=1 // pred_region
      %86 = dma.done [#allocation3], 256
    $region29: #{tpu_custom_call.1} parent=1 // pred_fallthru
      _
    // Predicated region
    $region30: #{tpu_custom_call.1} parent=1 // pred_check
      _
    $region31: #{tpu_custom_call.1} parent=1 // pred_check_branch
      %88 = sbr.rel (0) target = $region33
    $region32: #{tpu_custom_call.1} parent=1 // pred_region
      %89 = dma.done [#allocation6], 6144
    $region33: #{tpu_custom_call.1} parent=1 // pred_fallthru
      _
    // Predicated region
    $region34: #{tpu_custom_call.1} parent=1 // pred_check
      _
    $region35: #{tpu_custom_call.1} parent=1 // pred_check_branch
      %91 = sbr.rel (0) target = $region37
    $region36: #{tpu_custom_call.1} parent=1 // pred_region
      %92 = dma.done [#allocation6], 768
    $region37: #{tpu_custom_call.1} parent=1 // pred_fallthru
      _
    // Predicated region
    $region38: #{tpu_custom_call.1} parent=1 // pred_check
      _
    $region39: #{tpu_custom_call.1} parent=1 // pred_check_branch
      %94 = sbr.rel (0) target = $region41
    $region40: #{tpu_custom_call.1} parent=1 // pred_region
      %95 = dma.done [#allocation9], 18432
    $region41: #{tpu_custom_call.1} parent=1 // pred_fallthru
      _
    // Predicated region
    $region42: #{tpu_custom_call.1} parent=1 // pred_check
      _
    $region43: #{tpu_custom_call.1} parent=1 // pred_check_branch
      %97 = sbr.rel (0) target = $region45
    $region44: #{tpu_custom_call.1} parent=1 // pred_region
      %98 = dma.done [#allocation9], 36864
    $region45: #{tpu_custom_call.1} parent=1 // pred_fallthru
      _
    // Predicated region
    $region46: #{tpu_custom_call.1} parent=1 // pred_check
      _
    $region47: #{tpu_custom_call.1} parent=1 // pred_check_branch
      %100 = sbr.rel (0) target = $region49
    $region48: #{tpu_custom_call.1} parent=1 // pred_region
      %101 = dma.done [#allocation12], 36864
    $region49: #{tpu_custom_call.1} parent=1 // pred_fallthru
      _
    %v103 = vld [vmem:[#allocation2] sm:$0xff]
    %v104 = vld [vmem:[#allocation2 + $0x8] sm:$0xff]
    %v105 = vld [vmem:[#allocation5] sm:$0xff]
    %v106 = vld [vmem:[#allocation5 + $0x8] sm:$0xff]
    %v107 = vld [vmem:[#allocation5 + $0x10] sm:$0xff]
    %v108 = vld [vmem:[#allocation5 + $0x18] sm:$0xff]
    %v109 = vld [vmem:[#allocation5 + $0x20] sm:$0xff]
    %v110 = vld [vmem:[#allocation5 + $0x28] sm:$0xff]
    %v111 = vld [vmem:[#allocation5 + $0x30] sm:$0xff]
    %v112 = vld [vmem:[#allocation5 + $0x38] sm:$0xff]
    %v113 = vld [vmem:[#allocation5 + $0x40] sm:$0xff]
    %v114 = vld [vmem:[#allocation5 + $0x48] sm:$0xff]
    %v115 = vld [vmem:[#allocation5 + $0x50] sm:$0xff]
    %v116 = vld [vmem:[#allocation5 + $0x58] sm:$0xff]
    %v117 = vld [vmem:[#allocation5 + $0x60] sm:$0x7f]
    %v118 = vld [vmem:[#allocation5 + $0x68] sm:$0x7f]
    %v119 = vld [vmem:[#allocation5 + $0x70] sm:$0x7f]
    %v120 = vld [vmem:[#allocation5 + $0x78] sm:$0x7f]
    %v121 = vld [vmem:[#allocation5 + $0x80] sm:$0x7f]
    %v122 = vld [vmem:[#allocation5 + $0x88] sm:$0x7f]
    %v123 = vpack.c.bf16 %v111, %v105
    %v124 = vpack.c.bf16 %v112, %v106
    %v125 = vpack.c.bf16 %v113, %v107
    %v126 = vpack.c.bf16 %v114, %v108
    %v127 = vpack.c.bf16 %v115, %v109
    %v128 = vpack.c.bf16 %v116, %v110
    %v129 = vpack.c.bf16 %v117, %v117
    %v130 = vpack.c.bf16 %v118, %v118
    %v131 = vpack.c.bf16 %v119, %v119
    %v132 = vpack.c.bf16 %v120, %v120
    %v133 = vpack.c.bf16 %v121, %v121
    %v134 = vpack.c.bf16 %v122, %v122
    %v135 = vld [vmem:[#allocation5 + $0x90] sm:$0xff]
    %v136 = vld [vmem:[#allocation5 + $0x98] sm:$0xff]
    %v137 = vld [vmem:[#allocation5 + $0xa0] sm:$0xff]
    %v138 = vld [vmem:[#allocation5 + $0xa8] sm:$0xff]
    %v139 = vld [vmem:[#allocation5 + $0xb0] sm:$0xff]
    %v140 = vld [vmem:[#allocation5 + $0xb8] sm:$0xff]
    %v141 = vld [vmem:[#allocation5 + $0xc0] sm:$0xff]
    %v142 = vld [vmem:[#allocation5 + $0xc8] sm:$0xff]
    %v143 = vld [vmem:[#allocation5 + $0xd0] sm:$0xff]
    %v144 = vld [vmem:[#allocation5 + $0xd8] sm:$0xff]
    %v145 = vld [vmem:[#allocation5 + $0xe0] sm:$0xff]
    %v146 = vld [vmem:[#allocation5 + $0xe8] sm:$0xff]
    %v147 = vld [vmem:[#allocation5 + $0xf0] sm:$0x1]
    %v148 = vld [vmem:[#allocation5 + $0xf8] sm:$0x1]
    %v149 = vld [vmem:[#allocation5 + $0x100] sm:$0x1]
    %v150 = vld [vmem:[#allocation5 + $0x108] sm:$0x1]
    %v151 = vld [vmem:[#allocation5 + $0x110] sm:$0x1]
    %v152 = vld [vmem:[#allocation5 + $0x118] sm:$0x1]
    %v153 = vpack.c.bf16 %v141, %v135
    %v154 = vpack.c.bf16 %v142, %v136
    %v155 = vpack.c.bf16 %v143, %v137
    %v156 = vpack.c.bf16 %v144, %v138
    %v157 = vpack.c.bf16 %v145, %v139
    %v158 = vpack.c.bf16 %v146, %v140
    %v159 = vpack.c.bf16 %v147, %v147
    %v160 = vpack.c.bf16 %v148, %v148
    %v161 = vpack.c.bf16 %v149, %v149
    %v162 = vpack.c.bf16 %v150, %v150
    %v163 = vpack.c.bf16 %v151, %v151
    %v164 = vpack.c.bf16 %v152, %v152
    %v165 = vld [vmem:[#allocation5 + $0x120] sm:$0xff]
    %v166 = vld [vmem:[#allocation5 + $0x128] sm:$0xff]
    %v167 = vld [vmem:[#allocation5 + $0x130] sm:$0xff]
    %v168 = vld [vmem:[#allocation5 + $0x138] sm:$0xff]
    %v169 = vld [vmem:[#allocation5 + $0x140] sm:$0xff]
    %v170 = vld [vmem:[#allocation5 + $0x148] sm:$0xff]
    %v171 = vld [vmem:[#allocation5 + $0x150] sm:$0xf]
    %v172 = vld [vmem:[#allocation5 + $0x158] sm:$0xf]
    %v173 = vld [vmem:[#allocation5 + $0x160] sm:$0xf]
    %v174 = vld [vmem:[#allocation5 + $0x168] sm:$0xf]
    %v175 = vld [vmem:[#allocation5 + $0x170] sm:$0xf]
    %v176 = vld [vmem:[#allocation5 + $0x178] sm:$0xf]
    %v177 = vpack.c.bf16 %v171, %v165
    %v178 = vpack.c.bf16 %v172, %v166
    %v179 = vpack.c.bf16 %v173, %v167
    %v180 = vpack.c.bf16 %v174, %v168
    %v181 = vpack.c.bf16 %v175, %v169
    %v182 = vpack.c.bf16 %v176, %v170
    %v183 = vld [vmem:[#allocation7] ss:$8 sm:$0xf]
    %v184 = vld [vmem:[#allocation7] ss:$8 sm:$0x30]
    %v185 = vor.u32 %v183, %v184
    %s186 = scalar_lea.vmem [#allocation7], 1
    %v187 = vld [vmem:[%s186] ss:$8 sm:$0xf]
    %v188 = vld [vmem:[%s186] ss:$8 sm:$0x30]
    %v189 = vor.u32 %v187, %v188
    %s190 = scalar_lea.vmem [#allocation7], 2
    %v191 = vld [vmem:[%s190] ss:$8 sm:$0xf]
    %v192 = vld [vmem:[%s190] ss:$8 sm:$0x30]
    %v193 = vor.u32 %v191, %v192
    %s194 = scalar_lea.vmem [#allocation7], 3
    %v195 = vld [vmem:[%s194] ss:$8 sm:$0xf]
    %v196 = vld [vmem:[%s194] ss:$8 sm:$0x30]
    %v197 = vor.u32 %v195, %v196
    %s198 = scalar_lea.vmem [#allocation7], 4
    %v199 = vld [vmem:[%s198] ss:$8 sm:$0x3]
    %v200 = vld [vmem:[#allocation7 + $0x14] ss:$0 sm:$0xff]
    %v201 = vld [vmem:[#allocation8] sm:$0xff]
    %v202 = vld [vmem:[#allocation8 + $0xc] sm:$0xff]
    %v203 = vld [vmem:[#allocation8 + $0x18] sm:$0xff]
    %v204 = vld [vmem:[#allocation8 + $0x24] sm:$0xff]
    %v205 = vld [vmem:[#allocation8 + $0x30] sm:$0xff]
    %v206 = vld [vmem:[#allocation8 + $0x3c] sm:$0xff]
    %v207 = vld [vmem:[#allocation8 + $0x48] sm:$0xff]
    %v208 = vld [vmem:[#allocation8 + $0x54] sm:$0xff]
    %v209 = vld [vmem:[#allocation8 + $0x60] sm:$0xff]
    %v210 = vld [vmem:[#allocation8 + $0x6c] sm:$0xff]
    %v211 = vld [vmem:[#allocation8 + $0x78] sm:$0xff]
    %v212 = vld [vmem:[#allocation8 + $0x84] sm:$0xff]
    %v213 = vld [vmem:[#allocation8 + $0x90] sm:$0xff]
    %v214 = vld [vmem:[#allocation8 + $0x9c] sm:$0xff]
    %v215 = vld [vmem:[#allocation8 + $0xa8] sm:$0xff]
    %v216 = vld [vmem:[#allocation8 + $0xb4] sm:$0xff]
    %v217 = vld [vmem:[#allocation8 + $0xc0] sm:$0xff]
    %v218 = vld [vmem:[#allocation8 + $0xcc] sm:$0xff]
    %v219 = vld [vmem:[#allocation8 + $0xd8] sm:$0xff]
    %v220 = vld [vmem:[#allocation8 + $0xe4] sm:$0xff]
    %v221 = vld [vmem:[#allocation8 + $0xf0] sm:$0xff]
    %v222 = vld [vmem:[#allocation8 + $0xfc] sm:$0xff]
    %v223 = vld [vmem:[#allocation8 + $0x108] sm:$0xff]
    %v224 = vld [vmem:[#allocation8 + $0x114] sm:$0xff]
    %v225 = vld [vmem:[#allocation8 + $0x120] sm:$0xff]
    %v226 = vld [vmem:[#allocation8 + $0x12c] sm:$0xff]
    %v227 = vld [vmem:[#allocation8 + $0x138] sm:$0xff]
    %v228 = vld [vmem:[#allocation8 + $0x144] sm:$0xff]
    %v229 = vld [vmem:[#allocation8 + $0x150] sm:$0xff]
    %v230 = vld [vmem:[#allocation8 + $0x15c] sm:$0xff]
    %v231 = vld [vmem:[#allocation8 + $0x168] sm:$0xff]
    %v232 = vld [vmem:[#allocation8 + $0x174] sm:$0xff]
    %v233 = vld [vmem:[#allocation8 + $0x180] sm:$0xff]
    %v234 = vld [vmem:[#allocation8 + $0x18c] sm:$0xff]
    %v235 = vld [vmem:[#allocation8 + $0x198] sm:$0xff]
    %v236 = vld [vmem:[#allocation8 + $0x1a4] sm:$0xff]
    %v237 = vld [vmem:[#allocation8 + $0x1b0] sm:$0xff]
    %v238 = vld [vmem:[#allocation8 + $0x1bc] sm:$0xff]
    %v239 = vld [vmem:[#allocation8 + $0x1c8] sm:$0xff]
    %v240 = vld [vmem:[#allocation8 + $0x1d4] sm:$0xff]
    %v241 = vld [vmem:[#allocation8 + $0x1e0] sm:$0xff]
    %v242 = vld [vmem:[#allocation8 + $0x1ec] sm:$0xff]
    %v243 = vld [vmem:[#allocation8 + $0x1f8] sm:$0xff]
    %v244 = vld [vmem:[#allocation8 + $0x204] sm:$0xff]
    %v245 = vld [vmem:[#allocation8 + $0x210] sm:$0xff]
    %v246 = vld [vmem:[#allocation8 + $0x21c] sm:$0xff]
    %v247 = vld [vmem:[#allocation8 + $0x228] sm:$0xff]
    %v248 = vld [vmem:[#allocation8 + $0x234] sm:$0xff]
    %v249 = vld [vmem:[#allocation8 + $0x240] sm:$0xff]
    %v250 = vld [vmem:[#allocation8 + $0x24c] sm:$0xff]
    %v251 = vld [vmem:[#allocation8 + $0x258] sm:$0xff]
    %v252 = vld [vmem:[#allocation8 + $0x264] sm:$0xff]
    %v253 = vld [vmem:[#allocation8 + $0x270] sm:$0xff]
    %v254 = vld [vmem:[#allocation8 + $0x27c] sm:$0xff]
    %v255 = vld [vmem:[#allocation8 + $0x288] sm:$0xff]
    %v256 = vld [vmem:[#allocation8 + $0x294] sm:$0xff]
    %v257 = vld [vmem:[#allocation8 + $0x2a0] sm:$0xff]
    %v258 = vld [vmem:[#allocation8 + $0x2ac] sm:$0xff]
    %v259 = vld [vmem:[#allocation8 + $0x2b8] sm:$0xff]
    %v260 = vld [vmem:[#allocation8 + $0x2c4] sm:$0xff]
    %v261 = vld [vmem:[#allocation8 + $0x2d0] sm:$0xff]
    %v262 = vld [vmem:[#allocation8 + $0x2dc] sm:$0xff]
    %v263 = vld [vmem:[#allocation8 + $0x2e8] sm:$0xff]
    %v264 = vld [vmem:[#allocation8 + $0x2f4] sm:$0xff]
    %v265 = vld [vmem:[#allocation8 + $0x300] sm:$0xff]
    %v266 = vld [vmem:[#allocation8 + $0x30c] sm:$0xff]
    %v267 = vld [vmem:[#allocation8 + $0x318] sm:$0xff]
    %v268 = vld [vmem:[#allocation8 + $0x324] sm:$0xff]
    %v269 = vld [vmem:[#allocation8 + $0x330] sm:$0xff]
    %v270 = vld [vmem:[#allocation8 + $0x33c] sm:$0xff]
    %v271 = vld [vmem:[#allocation8 + $0x348] sm:$0xff]
    %v272 = vld [vmem:[#allocation8 + $0x354] sm:$0xff]
    %v273 = vld [vmem:[#allocation8 + $0x360] sm:$0xff]
    %v274 = vld [vmem:[#allocation8 + $0x36c] sm:$0xff]
    %v275 = vld [vmem:[#allocation8 + $0x378] sm:$0xff]
    %v276 = vld [vmem:[#allocation8 + $0x384] sm:$0xff]
    %v277 = vld [vmem:[#allocation8 + $0x390] sm:$0xff]
    %v278 = vld [vmem:[#allocation8 + $0x39c] sm:$0xff]
    %v279 = vld [vmem:[#allocation8 + $0x3a8] sm:$0xff]
    %v280 = vld [vmem:[#allocation8 + $0x3b4] sm:$0xff]
    %v281 = vld [vmem:[#allocation8 + $0x3c0] sm:$0xff]
    %v282 = vld [vmem:[#allocation8 + $0x3cc] sm:$0xff]
    %v283 = vld [vmem:[#allocation8 + $0x3d8] sm:$0xff]
    %v284 = vld [vmem:[#allocation8 + $0x3e4] sm:$0xff]
    %v285 = vld [vmem:[#allocation8 + $0x3f0] sm:$0xff]
    %v286 = vld [vmem:[#allocation8 + $0x3fc] sm:$0xff]
    %v287 = vld [vmem:[#allocation8 + $0x408] sm:$0xff]
    %v288 = vld [vmem:[#allocation8 + $0x414] sm:$0xff]
    %v289 = vld [vmem:[#allocation8 + $0x420] sm:$0xff]
    %v290 = vld [vmem:[#allocation8 + $0x42c] sm:$0xff]
    %v291 = vld [vmem:[#allocation8 + $0x438] sm:$0xff]
    %v292 = vld [vmem:[#allocation8 + $0x444] sm:$0xff]
    %v293 = vld [vmem:[#allocation8 + $0x450] sm:$0xff]
    %v294 = vld [vmem:[#allocation8 + $0x45c] sm:$0xff]
    %v295 = vld [vmem:[#allocation8 + $0x468] sm:$0xff]
    %v296 = vld [vmem:[#allocation8 + $0x474] sm:$0xff]
    %v297 = vld [vmem:[#allocation8 + $0x8] sm:$0xf]
    %v298 = vld [vmem:[#allocation8 + $0x14] sm:$0xf]
    %v299 = vld [vmem:[#allocation8 + $0x20] sm:$0xf]
    %v300 = vld [vmem:[#allocation8 + $0x2c] sm:$0xf]
    %v301 = vld [vmem:[#allocation8 + $0x38] sm:$0xf]
    %v302 = vld [vmem:[#allocation8 + $0x44] sm:$0xf]
    %v303 = vld [vmem:[#allocation8 + $0x50] sm:$0xf]
    %v304 = vld [vmem:[#allocation8 + $0x5c] sm:$0xf]
    %v305 = vld [vmem:[#allocation8 + $0x68] sm:$0xf]
    %v306 = vld [vmem:[#allocation8 + $0x74] sm:$0xf]
    %v307 = vld [vmem:[#allocation8 + $0x80] sm:$0xf]
    %v308 = vld [vmem:[#allocation8 + $0x8c] sm:$0xf]
    %v309 = vld [vmem:[#allocation8 + $0x98] sm:$0xf]
    %v310 = vld [vmem:[#allocation8 + $0xa4] sm:$0xf]
    %v311 = vld [vmem:[#allocation8 + $0xb0] sm:$0xf]
    %v312 = vld [vmem:[#allocation8 + $0xbc] sm:$0xf]
    %v313 = vld [vmem:[#allocation8 + $0xc8] sm:$0xf]
    %v314 = vld [vmem:[#allocation8 + $0xd4] sm:$0xf]
    %v315 = vld [vmem:[#allocation8 + $0xe0] sm:$0xf]
    %v316 = vld [vmem:[#allocation8 + $0xec] sm:$0xf]
    %v317 = vld [vmem:[#allocation8 + $0xf8] sm:$0xf]
    %v318 = vld [vmem:[#allocation8 + $0x104] sm:$0xf]
    %v319 = vld [vmem:[#allocation8 + $0x110] sm:$0xf]
    %v320 = vld [vmem:[#allocation8 + $0x11c] sm:$0xf]
    %v321 = vld [vmem:[#allocation8 + $0x128] sm:$0xf]
    %v322 = vld [vmem:[#allocation8 + $0x134] sm:$0xf]
    %v323 = vld [vmem:[#allocation8 + $0x140] sm:$0xf]
    %v324 = vld [vmem:[#allocation8 + $0x14c] sm:$0xf]
    %v325 = vld [vmem:[#allocation8 + $0x158] sm:$0xf]
    %v326 = vld [vmem:[#allocation8 + $0x164] sm:$0xf]
    %v327 = vld [vmem:[#allocation8 + $0x170] sm:$0xf]
    %v328 = vld [vmem:[#allocation8 + $0x17c] sm:$0xf]
    %v329 = vld [vmem:[#allocation8 + $0x188] sm:$0xf]
    %v330 = vld [vmem:[#allocation8 + $0x194] sm:$0xf]
    %v331 = vld [vmem:[#allocation8 + $0x1a0] sm:$0xf]
    %v332 = vld [vmem:[#allocation8 + $0x1ac] sm:$0xf]
    %v333 = vld [vmem:[#allocation8 + $0x1b8] sm:$0xf]
    %v334 = vld [vmem:[#allocation8 + $0x1c4] sm:$0xf]
    %v335 = vld [vmem:[#allocation8 + $0x1d0] sm:$0xf]
    %v336 = vld [vmem:[#allocation8 + $0x1dc] sm:$0xf]
    %v337 = vld [vmem:[#allocation8 + $0x1e8] sm:$0xf]
    %v338 = vld [vmem:[#allocation8 + $0x1f4] sm:$0xf]
    %v339 = vld [vmem:[#allocation8 + $0x200] sm:$0xf]
    %v340 = vld [vmem:[#allocation8 + $0x20c] sm:$0xf]
    %v341 = vld [vmem:[#allocation8 + $0x218] sm:$0xf]
    %v342 = vld [vmem:[#allocation8 + $0x224] sm:$0xf]
    %v343 = vld [vmem:[#allocation8 + $0x230] sm:$0xf]
    %v344 = vld [vmem:[#allocation8 + $0x23c] sm:$0xf]
    %v345 = vld [vmem:[#allocation8 + $0x248] sm:$0xf]
    %v346 = vld [vmem:[#allocation8 + $0x254] sm:$0xf]
    %v347 = vld [vmem:[#allocation8 + $0x260] sm:$0xf]
    %v348 = vld [vmem:[#allocation8 + $0x26c] sm:$0xf]
    %v349 = vld [vmem:[#allocation8 + $0x278] sm:$0xf]
    %v350 = vld [vmem:[#allocation8 + $0x284] sm:$0xf]
    %v351 = vld [vmem:[#allocation8 + $0x290] sm:$0xf]
    %v352 = vld [vmem:[#allocation8 + $0x29c] sm:$0xf]
    %v353 = vld [vmem:[#allocation8 + $0x2a8] sm:$0xf]
    %v354 = vld [vmem:[#allocation8 + $0x2b4] sm:$0xf]
    %v355 = vld [vmem:[#allocation8 + $0x2c0] sm:$0xf]
    %v356 = vld [vmem:[#allocation8 + $0x2cc] sm:$0xf]
    %v357 = vld [vmem:[#allocation8 + $0x2d8] sm:$0xf]
    %v358 = vld [vmem:[#allocation8 + $0x2e4] sm:$0xf]
    %v359 = vld [vmem:[#allocation8 + $0x2f0] sm:$0xf]
    %v360 = vld [vmem:[#allocation8 + $0x2fc] sm:$0xf]
    %v361 = vld [vmem:[#allocation8 + $0x308] sm:$0xf]
    %v362 = vld [vmem:[#allocation8 + $0x314] sm:$0xf]
    %v363 = vld [vmem:[#allocation8 + $0x320] sm:$0xf]
    %v364 = vld [vmem:[#allocation8 + $0x32c] sm:$0xf]
    %v365 = vld [vmem:[#allocation8 + $0x338] sm:$0xf]
    %v366 = vld [vmem:[#allocation8 + $0x344] sm:$0xf]
    %v367 = vld [vmem:[#allocation8 + $0x350] sm:$0xf]
    %v368 = vld [vmem:[#allocation8 + $0x35c] sm:$0xf]
    %v369 = vld [vmem:[#allocation8 + $0x368] sm:$0xf]
    %v370 = vld [vmem:[#allocation8 + $0x374] sm:$0xf]
    %v371 = vld [vmem:[#allocation8 + $0x380] sm:$0xf]
    %v372 = vld [vmem:[#allocation8 + $0x38c] sm:$0xf]
    %v373 = vld [vmem:[#allocation8 + $0x398] sm:$0xf]
    %v374 = vld [vmem:[#allocation8 + $0x3a4] sm:$0xf]
    %v375 = vld [vmem:[#allocation8 + $0x3b0] sm:$0xf]
    %v376 = vld [vmem:[#allocation8 + $0x3bc] sm:$0xf]
    %v377 = vld [vmem:[#allocation8 + $0x3c8] sm:$0xf]
    %v378 = vld [vmem:[#allocation8 + $0x3d4] sm:$0xf]
    %v379 = vld [vmem:[#allocation8 + $0x3e0] sm:$0xf]
    %v380 = vld [vmem:[#allocation8 + $0x3ec] sm:$0xf]
    %v381 = vld [vmem:[#allocation8 + $0x3f8] sm:$0xf]
    %v382 = vld [vmem:[#allocation8 + $0x404] sm:$0xf]
    %v383 = vld [vmem:[#allocation8 + $0x410] sm:$0xf]
    %v384 = vld [vmem:[#allocation8 + $0x41c] sm:$0xf]
    %v385 = vld [vmem:[#allocation8 + $0x428] sm:$0xf]
    %v386 = vld [vmem:[#allocation8 + $0x434] sm:$0xf]
    %v387 = vld [vmem:[#allocation8 + $0x440] sm:$0xf]
    %v388 = vld [vmem:[#allocation8 + $0x44c] sm:$0xf]
    %v389 = vld [vmem:[#allocation8 + $0x458] sm:$0xf]
    %v390 = vld [vmem:[#allocation8 + $0x464] sm:$0xf]
    %v391 = vld [vmem:[#allocation8 + $0x470] sm:$0xf]
    %v392 = vld [vmem:[#allocation8 + $0x47c] sm:$0xf]
    %v393 = vpack.c.bf16 %v103, %v103
    %v395 = vlaneseq
    %v396 = vshrl.u32 %v395, 7
    %v397 = vsub.s32 0, %v396
    %v398 = vrot.slane %v185, %v397
    %v399 = vlaneseq
    %v400 = vshrl.u32 %v399, 7
    %v401 = vsub.s32 1, %v400
    %v402 = vrot.slane %v185, %v401
    %v403 = vlaneseq
    %v404 = vshrl.u32 %v403, 7
    %v405 = vsub.s32 2, %v404
    %v406 = vrot.slane %v185, %v405
    %v407 = vlaneseq
    %v408 = vshrl.u32 %v407, 7
    %v409 = vsub.s32 3, %v408
    %v410 = vrot.slane %v185, %v409
    %v411 = vlaneseq
    %v412 = vshrl.u32 %v411, 7
    %v413 = vsub.s32 4, %v412
    %v414 = vrot.slane %v185, %v413
    %v415 = vlaneseq
    %v416 = vshrl.u32 %v415, 7
    %v417 = vsub.s32 5, %v416
    %v418 = vrot.slane %v185, %v417
    %vm425 = vcmask 187392
    %v427 = vsel %vm425, %v393, 0
    %vm429 = vcmask 1042432
    %vm430 = vcmask 1043456
    %v431 = vsel %vm429, 4294967295, 65535
    %v432 = vsel %vm430, %v431, 0
    %v434 = vand.u32 %v129, %v432
    %v437 = vand.u32 %v130, %v432
    %v440 = vand.u32 %v131, %v432
    %v443 = vand.u32 %v132, %v432
    %v446 = vand.u32 %v133, %v432
    %v449 = vand.u32 %v134, %v432
    %451 = vmatprep.subr.bf16.mxu0 %v124
    %452 = vmatpush1.bf16.msra.mxu0 %v123
    %453 = vmatprep.subr.bf16.mxu0 %v437
    %454 = vmatpush1.bf16.msra.mxu0 %v434
    %455 = vmatprep.subr.bf16.mxu0 0
    %456 = vmatpush1.bf16.msra.mxu0 0
    %457 = vmatprep.subr.bf16.mxu0 0
    %458 = vmatpush1.bf16.msra.mxu0 0
    %459 = vmatprep.subr.bf16.mxu0 0
    %460 = vmatpush1.bf16.msra.mxu0 0
    %461 = vmatprep.subr.bf16.mxu0 0
    %462 = vmatpush1.bf16.msra.mxu0 0
    %463 = vmatprep.subr.bf16.mxu0 0
    %464 = vmatpush1.bf16.msra.mxu0 0
    %465 = vmatprep.subr.bf16.mxu0 0
    %466 = vmatpush1.bf16.msra.mxu0 0
    %467 = vmatprep.subr.bf16.mxu0 0
    %468 = vmatpush1.bf16.msra.mxu0 0
    %469 = vmatprep.subr.bf16.mxu0 0
    %470 = vmatpush1.bf16.msra.mxu0 0
    %471 = vmatprep.subr.bf16.mxu0 0
    %472 = vmatpush1.bf16.msra.mxu0 0
    %473 = vmatprep.subr.bf16.mxu0 0
    %474 = vmatpush1.bf16.msra.mxu0 0
    %475 = vmatprep.subr.bf16.mxu0 0
    %476 = vmatpush1.bf16.msra.mxu0 0
    %477 = vmatprep.subr.bf16.mxu0 0
    %478 = vmatpush1.bf16.msra.mxu0 0
    %479 = vmatprep.subr.bf16.mxu0 0
    %480 = vmatpush1.bf16.msra.mxu0 0
    %481 = vmatprep.subr.bf16.mxu0 0
    %482 = vmatpush1.bf16.msra.mxu0 0
    %483 = vmatprep.mubr.bf16.mxu0 0
    %484 = vmatmul.mubr.bf16.gmra.mrb[0].mxu0 %v427
    %v485 = vpop.f32.mrb[0].mxu0
    %v486 = vadd.f32 %v398, %v485
    %v487 = vpop.f32.mrb[0].mxu0
    %v488 = vadd.f32 %v402, %v487
    %v489 = vpop.f32.mrb[0].mxu0
    %v490 = vpop.f32.mrb[0].mxu0
    %491 = vdwg.mxu0
    %492 = vmatprep.subr.bf16.mxu0 %v126
    %493 = vmatpush1.bf16.msra.mxu0 %v125
    %494 = vmatprep.subr.bf16.mxu0 %v443
    %495 = vmatpush1.bf16.msra.mxu0 %v440
    %496 = vmatprep.subr.bf16.mxu0 0
    %497 = vmatpush1.bf16.msra.mxu0 0
    %498 = vmatprep.subr.bf16.mxu0 0
    %499 = vmatpush1.bf16.msra.mxu0 0
    %500 = vmatprep.subr.bf16.mxu0 0
    %501 = vmatpush1.bf16.msra.mxu0 0
    %502 = vmatprep.subr.bf16.mxu0 0
    %503 = vmatpush1.bf16.msra.mxu0 0
    %504 = vmatprep.subr.bf16.mxu0 0
    %505 = vmatpush1.bf16.msra.mxu0 0
    %506 = vmatprep.subr.bf16.mxu0 0
    %507 = vmatpush1.bf16.msra.mxu0 0
    %508 = vmatprep.subr.bf16.mxu0 0
    %509 = vmatpush1.bf16.msra.mxu0 0
    %510 = vmatprep.subr.bf16.mxu0 0
    %511 = vmatpush1.bf16.msra.mxu0 0
    %512 = vmatprep.subr.bf16.mxu0 0
    %513 = vmatpush1.bf16.msra.mxu0 0
    %514 = vmatprep.subr.bf16.mxu0 0
    %515 = vmatpush1.bf16.msra.mxu0 0
    %516 = vmatprep.subr.bf16.mxu0 0
    %517 = vmatpush1.bf16.msra.mxu0 0
    %518 = vmatprep.subr.bf16.mxu0 0
    %519 = vmatpush1.bf16.msra.mxu0 0
    %520 = vmatprep.subr.bf16.mxu0 0
    %521 = vmatpush1.bf16.msra.mxu0 0
    %522 = vmatprep.subr.bf16.mxu0 0
    %523 = vmatpush1.bf16.msra.mxu0 0
    %524 = vmatprep.mubr.bf16.mxu0 0
    %525 = vmatmul.mubr.bf16.gmra.mrb[0].mxu0 %v427
    %v526 = vpop.f32.mrb[0].mxu0
    %v527 = vadd.f32 %v406, %v526
    %v528 = vpop.f32.mrb[0].mxu0
    %v529 = vadd.f32 %v410, %v528
    %v530 = vpop.f32.mrb[0].mxu0
    %v531 = vpop.f32.mrb[0].mxu0
    %532 = vdwg.mxu0
    %533 = vmatprep.subr.bf16.mxu0 %v128
    %534 = vmatpush1.bf16.msra.mxu0 %v127
    %535 = vmatprep.subr.bf16.mxu0 %v449
    %536 = vmatpush1.bf16.msra.mxu0 %v446
    %537 = vmatprep.subr.bf16.mxu0 0
    %538 = vmatpush1.bf16.msra.mxu0 0
    %539 = vmatprep.subr.bf16.mxu0 0
    %540 = vmatpush1.bf16.msra.mxu0 0
    %541 = vmatprep.subr.bf16.mxu0 0
    %542 = vmatpush1.bf16.msra.mxu0 0
    %543 = vmatprep.subr.bf16.mxu0 0
    %544 = vmatpush1.bf16.msra.mxu0 0
    %545 = vmatprep.subr.bf16.mxu0 0
    %546 = vmatpush1.bf16.msra.mxu0 0
    %547 = vmatprep.subr.bf16.mxu0 0
    %548 = vmatpush1.bf16.msra.mxu0 0
    %549 = vmatprep.subr.bf16.mxu0 0
    %550 = vmatpush1.bf16.msra.mxu0 0
    %551 = vmatprep.subr.bf16.mxu0 0
    %552 = vmatpush1.bf16.msra.mxu0 0
    %553 = vmatprep.subr.bf16.mxu0 0
    %554 = vmatpush1.bf16.msra.mxu0 0
    %555 = vmatprep.subr.bf16.mxu0 0
    %556 = vmatpush1.bf16.msra.mxu0 0
    %557 = vmatprep.subr.bf16.mxu0 0
    %558 = vmatpush1.bf16.msra.mxu0 0
    %559 = vmatprep.subr.bf16.mxu0 0
    %560 = vmatpush1.bf16.msra.mxu0 0
    %561 = vmatprep.subr.bf16.mxu0 0
    %562 = vmatpush1.bf16.msra.mxu0 0
    %563 = vmatprep.subr.bf16.mxu0 0
    %564 = vmatpush1.bf16.msra.mxu0 0
    %565 = vmatprep.mubr.bf16.mxu0 0
    %566 = vmatmul.mubr.bf16.gmra.mrb[0].mxu0 %v427
    %v567 = vpop.f32.mrb[0].mxu0
    %v568 = vadd.f32 %v414, %v567
    %v569 = vpop.f32.mrb[0].mxu0
    %v570 = vadd.f32 %v418, %v569
    %v571 = vpop.f32.mrb[0].mxu0
    %v572 = vpop.f32.mrb[0].mxu0
    %573 = vdwg.mxu0
    %v574 = vmax.f32 %v486, 0.0
    %v575 = vmax.f32 %v488, 0.0
    %v576 = vmax.f32 %v527, 0.0
    %v577 = vmax.f32 %v529, 0.0
    %v578 = vmax.f32 %v568, 0.0
    %v579 = vmax.f32 %v570, 0.0
    %v580 = vpack.c.bf16 %v574, %v574
    %v581 = vpack.c.bf16 %v575, %v575
    %v582 = vpack.c.bf16 %v576, %v576
    %v583 = vpack.c.bf16 %v577, %v577
    %v584 = vpack.c.bf16 %v578, %v578
    %v585 = vpack.c.bf16 %v579, %v579
    %v586 = vld [vmem:[#allocation10] sm:$0xff]
    %v587 = vld [vmem:[#allocation10 + $0x8] sm:$0xff]
    %v588 = vld [vmem:[#allocation10 + $0x10] sm:$0xff]
    %v589 = vld [vmem:[#allocation10 + $0x18] sm:$0xff]
    %v590 = vld [vmem:[#allocation10 + $0x20] sm:$0xff]
    %v591 = vld [vmem:[#allocation10 + $0x28] sm:$0xff]
    %v592 = vld [vmem:[#allocation10 + $0x30] sm:$0xff]
    %v593 = vld [vmem:[#allocation10 + $0x38] sm:$0xff]
    %v594 = vld [vmem:[#allocation10 + $0x40] sm:$0xff]
    %v595 = vld [vmem:[#allocation10 + $0x48] sm:$0xff]
    %v596 = vld [vmem:[#allocation10 + $0x50] sm:$0xff]
    %v597 = vld [vmem:[#allocation10 + $0x58] sm:$0xff]
    %v598 = vld [vmem:[#allocation10 + $0x60] sm:$0xff]
    %v599 = vld [vmem:[#allocation10 + $0x68] sm:$0xff]
    %v600 = vld [vmem:[#allocation10 + $0x70] sm:$0xff]
    %v601 = vld [vmem:[#allocation10 + $0x78] sm:$0xff]
    %v602 = vld [vmem:[#allocation10 + $0x80] sm:$0xff]
    %v603 = vld [vmem:[#allocation10 + $0x88] sm:$0xff]
    %v604 = vld [vmem:[#allocation10 + $0x90] sm:$0xff]
    %v605 = vld [vmem:[#allocation10 + $0x98] sm:$0xff]
    %v606 = vld [vmem:[#allocation10 + $0xa0] sm:$0xff]
    %v607 = vld [vmem:[#allocation10 + $0xa8] sm:$0xff]
    %v608 = vld [vmem:[#allocation10 + $0xb0] sm:$0xff]
    %v609 = vld [vmem:[#allocation10 + $0xb8] sm:$0xff]
    %v610 = vld [vmem:[#allocation10 + $0xc0] sm:$0xff]
    %v611 = vld [vmem:[#allocation10 + $0xc8] sm:$0xff]
    %v612 = vld [vmem:[#allocation10 + $0xd0] sm:$0xff]
    %v613 = vld [vmem:[#allocation10 + $0xd8] sm:$0xff]
    %v614 = vld [vmem:[#allocation10 + $0xe0] sm:$0xff]
    %v615 = vld [vmem:[#allocation10 + $0xe8] sm:$0xff]
    %v616 = vld [vmem:[#allocation10 + $0xf0] sm:$0xff]
    %v617 = vld [vmem:[#allocation10 + $0xf8] sm:$0xff]
    %v618 = vld [vmem:[#allocation10 + $0x100] sm:$0xff]
    %v619 = vld [vmem:[#allocation10 + $0x108] sm:$0xff]
    %v620 = vld [vmem:[#allocation10 + $0x110] sm:$0xff]
    %v621 = vld [vmem:[#allocation10 + $0x118] sm:$0xff]
    %v622 = vld [vmem:[#allocation10 + $0x120] sm:$0xff]
    %v623 = vld [vmem:[#allocation10 + $0x128] sm:$0xff]
    %v624 = vld [vmem:[#allocation10 + $0x130] sm:$0xff]
    %v625 = vld [vmem:[#allocation10 + $0x138] sm:$0xff]
    %v626 = vld [vmem:[#allocation10 + $0x140] sm:$0xff]
    %v627 = vld [vmem:[#allocation10 + $0x148] sm:$0xff]
    %v628 = vld [vmem:[#allocation10 + $0x150] sm:$0xff]
    %v629 = vld [vmem:[#allocation10 + $0x158] sm:$0xff]
    %v630 = vld [vmem:[#allocation10 + $0x160] sm:$0xff]
    %v631 = vld [vmem:[#allocation10 + $0x168] sm:$0xff]
    %v632 = vld [vmem:[#allocation10 + $0x170] sm:$0xff]
    %v633 = vld [vmem:[#allocation10 + $0x178] sm:$0xff]
    %v634 = vld [vmem:[#allocation10 + $0x180] sm:$0xff]
    %v635 = vld [vmem:[#allocation10 + $0x188] sm:$0xff]
    %v636 = vld [vmem:[#allocation10 + $0x190] sm:$0xff]
    %v637 = vld [vmem:[#allocation10 + $0x198] sm:$0xff]
    %v638 = vld [vmem:[#allocation10 + $0x1a0] sm:$0xff]
    %v639 = vld [vmem:[#allocation10 + $0x1a8] sm:$0xff]
    %v640 = vld [vmem:[#allocation10 + $0x1b0] sm:$0xff]
    %v641 = vld [vmem:[#allocation10 + $0x1b8] sm:$0xff]
    %v642 = vld [vmem:[#allocation10 + $0x1c0] sm:$0xff]
    %v643 = vld [vmem:[#allocation10 + $0x1c8] sm:$0xff]
    %v644 = vld [vmem:[#allocation10 + $0x1d0] sm:$0xff]
    %v645 = vld [vmem:[#allocation10 + $0x1d8] sm:$0xff]
    %v646 = vld [vmem:[#allocation10 + $0x1e0] sm:$0xff]
    %v647 = vld [vmem:[#allocation10 + $0x1e8] sm:$0xff]
    %v648 = vld [vmem:[#allocation10 + $0x1f0] sm:$0xff]
    %v649 = vld [vmem:[#allocation10 + $0x1f8] sm:$0xff]
    %v650 = vld [vmem:[#allocation10 + $0x200] sm:$0xff]
    %v651 = vld [vmem:[#allocation10 + $0x208] sm:$0xff]
    %v652 = vld [vmem:[#allocation10 + $0x210] sm:$0xff]
    %v653 = vld [vmem:[#allocation10 + $0x218] sm:$0xff]
    %v654 = vld [vmem:[#allocation10 + $0x220] sm:$0xff]
    %v655 = vld [vmem:[#allocation10 + $0x228] sm:$0xff]
    %v656 = vld [vmem:[#allocation10 + $0x230] sm:$0xff]
    %v657 = vld [vmem:[#allocation10 + $0x238] sm:$0xff]
    %v658 = vld [vmem:[#allocation10 + $0x240] sm:$0xff]
    %v659 = vld [vmem:[#allocation10 + $0x248] sm:$0xff]
    %v660 = vld [vmem:[#allocation10 + $0x250] sm:$0xff]
    %v661 = vld [vmem:[#allocation10 + $0x258] sm:$0xff]
    %v662 = vld [vmem:[#allocation10 + $0x260] sm:$0xff]
    %v663 = vld [vmem:[#allocation10 + $0x268] sm:$0xff]
    %v664 = vld [vmem:[#allocation10 + $0x270] sm:$0xff]
    %v665 = vld [vmem:[#allocation10 + $0x278] sm:$0xff]
    %v666 = vld [vmem:[#allocation10 + $0x280] sm:$0xff]
    %v667 = vld [vmem:[#allocation10 + $0x288] sm:$0xff]
    %v668 = vld [vmem:[#allocation10 + $0x290] sm:$0xff]
    %v669 = vld [vmem:[#allocation10 + $0x298] sm:$0xff]
    %v670 = vld [vmem:[#allocation10 + $0x2a0] sm:$0xff]
    %v671 = vld [vmem:[#allocation10 + $0x2a8] sm:$0xff]
    %v672 = vld [vmem:[#allocation10 + $0x2b0] sm:$0xff]
    %v673 = vld [vmem:[#allocation10 + $0x2b8] sm:$0xff]
    %v674 = vld [vmem:[#allocation10 + $0x2c0] sm:$0xff]
    %v675 = vld [vmem:[#allocation10 + $0x2c8] sm:$0xff]
    %v676 = vld [vmem:[#allocation10 + $0x2d0] sm:$0xff]
    %v677 = vld [vmem:[#allocation10 + $0x2d8] sm:$0xff]
    %v678 = vld [vmem:[#allocation10 + $0x2e0] sm:$0xff]
    %v679 = vld [vmem:[#allocation10 + $0x2e8] sm:$0xff]
    %v680 = vld [vmem:[#allocation10 + $0x2f0] sm:$0xff]
    %v681 = vld [vmem:[#allocation10 + $0x2f8] sm:$0xff]
    %v682 = vld [vmem:[#allocation10 + $0x300] sm:$0xff]
    %v683 = vld [vmem:[#allocation10 + $0x308] sm:$0xff]
    %v684 = vld [vmem:[#allocation10 + $0x310] sm:$0xff]
    %v685 = vld [vmem:[#allocation10 + $0x318] sm:$0xff]
    %v686 = vld [vmem:[#allocation10 + $0x320] sm:$0xff]
    %v687 = vld [vmem:[#allocation10 + $0x328] sm:$0xff]
    %v688 = vld [vmem:[#allocation10 + $0x330] sm:$0xff]
    %v689 = vld [vmem:[#allocation10 + $0x338] sm:$0xff]
    %v690 = vld [vmem:[#allocation10 + $0x340] sm:$0xff]
    %v691 = vld [vmem:[#allocation10 + $0x348] sm:$0xff]
    %v692 = vld [vmem:[#allocation10 + $0x350] sm:$0xff]
    %v693 = vld [vmem:[#allocation10 + $0x358] sm:$0xff]
    %v694 = vld [vmem:[#allocation10 + $0x360] sm:$0xff]
    %v695 = vld [vmem:[#allocation10 + $0x368] sm:$0xff]
    %v696 = vld [vmem:[#allocation10 + $0x370] sm:$0xff]
    %v697 = vld [vmem:[#allocation10 + $0x378] sm:$0xff]
    %v698 = vld [vmem:[#allocation10 + $0x380] sm:$0xff]
    %v699 = vld [vmem:[#allocation10 + $0x388] sm:$0xff]
    %v700 = vld [vmem:[#allocation10 + $0x390] sm:$0xff]
    %v701 = vld [vmem:[#allocation10 + $0x398] sm:$0xff]
    %v702 = vld [vmem:[#allocation10 + $0x3a0] sm:$0xff]
    %v703 = vld [vmem:[#allocation10 + $0x3a8] sm:$0xff]
    %v704 = vld [vmem:[#allocation10 + $0x3b0] sm:$0xff]
    %v705 = vld [vmem:[#allocation10 + $0x3b8] sm:$0xff]
    %v706 = vld [vmem:[#allocation10 + $0x3c0] sm:$0xff]
    %v707 = vld [vmem:[#allocation10 + $0x3c8] sm:$0xff]
    %v708 = vld [vmem:[#allocation10 + $0x3d0] sm:$0xff]
    %v709 = vld [vmem:[#allocation10 + $0x3d8] sm:$0xff]
    %v710 = vld [vmem:[#allocation10 + $0x3e0] sm:$0xff]
    %v711 = vld [vmem:[#allocation10 + $0x3e8] sm:$0xff]
    %v712 = vld [vmem:[#allocation10 + $0x3f0] sm:$0xff]
    %v713 = vld [vmem:[#allocation10 + $0x3f8] sm:$0xff]
    %v714 = vld [vmem:[#allocation10 + $0x400] sm:$0xff]
    %v715 = vld [vmem:[#allocation10 + $0x408] sm:$0xff]
    %v716 = vld [vmem:[#allocation10 + $0x410] sm:$0xff]
    %v717 = vld [vmem:[#allocation10 + $0x418] sm:$0xff]
    %v718 = vld [vmem:[#allocation10 + $0x420] sm:$0xff]
    %v719 = vld [vmem:[#allocation10 + $0x428] sm:$0xff]
    %v720 = vld [vmem:[#allocation10 + $0x430] sm:$0xff]
    %v721 = vld [vmem:[#allocation10 + $0x438] sm:$0xff]
    %v722 = vld [vmem:[#allocation10 + $0x440] sm:$0xff]
    %v723 = vld [vmem:[#allocation10 + $0x448] sm:$0xff]
    %v724 = vld [vmem:[#allocation10 + $0x450] sm:$0xff]
    %v725 = vld [vmem:[#allocation10 + $0x458] sm:$0xff]
    %v726 = vld [vmem:[#allocation10 + $0x460] sm:$0xff]
    %v727 = vld [vmem:[#allocation10 + $0x468] sm:$0xff]
    %v728 = vld [vmem:[#allocation10 + $0x470] sm:$0xff]
    %v729 = vld [vmem:[#allocation10 + $0x478] sm:$0xff]
    %v730 = vld [vmem:[#allocation10 + $0x480] sm:$0xff]
    %v731 = vld [vmem:[#allocation10 + $0x488] sm:$0xff]
    %v732 = vld [vmem:[#allocation10 + $0x490] sm:$0xff]
    %v733 = vld [vmem:[#allocation10 + $0x498] sm:$0xff]
    %v734 = vld [vmem:[#allocation10 + $0x4a0] sm:$0xff]
    %v735 = vld [vmem:[#allocation10 + $0x4a8] sm:$0xff]
    %v736 = vld [vmem:[#allocation10 + $0x4b0] sm:$0xff]
    %v737 = vld [vmem:[#allocation10 + $0x4b8] sm:$0xff]
    %v738 = vld [vmem:[#allocation10 + $0x4c0] sm:$0xff]
    %v739 = vld [vmem:[#allocation10 + $0x4c8] sm:$0xff]
    %v740 = vld [vmem:[#allocation10 + $0x4d0] sm:$0xff]
    %v741 = vld [vmem:[#allocation10 + $0x4d8] sm:$0xff]
    %v742 = vld [vmem:[#allocation10 + $0x4e0] sm:$0xff]
    %v743 = vld [vmem:[#allocation10 + $0x4e8] sm:$0xff]
    %v744 = vld [vmem:[#allocation10 + $0x4f0] sm:$0xff]
    %v745 = vld [vmem:[#allocation10 + $0x4f8] sm:$0xff]
    %v746 = vld [vmem:[#allocation10 + $0x500] sm:$0xff]
    %v747 = vld [vmem:[#allocation10 + $0x508] sm:$0xff]
    %v748 = vld [vmem:[#allocation10 + $0x510] sm:$0xff]
    %v749 = vld [vmem:[#allocation10 + $0x518] sm:$0xff]
    %v750 = vld [vmem:[#allocation10 + $0x520] sm:$0xff]
    %v751 = vld [vmem:[#allocation10 + $0x528] sm:$0xff]
    %v752 = vld [vmem:[#allocation10 + $0x530] sm:$0xff]
    %v753 = vld [vmem:[#allocation10 + $0x538] sm:$0xff]
    %v754 = vld [vmem:[#allocation10 + $0x540] sm:$0xff]
    %v755 = vld [vmem:[#allocation10 + $0x548] sm:$0xff]
    %v756 = vld [vmem:[#allocation10 + $0x550] sm:$0xff]
    %v757 = vld [vmem:[#allocation10 + $0x558] sm:$0xff]
    %v758 = vld [vmem:[#allocation10 + $0x560] sm:$0xff]
    %v759 = vld [vmem:[#allocation10 + $0x568] sm:$0xff]
    %v760 = vld [vmem:[#allocation10 + $0x570] sm:$0xff]
    %v761 = vld [vmem:[#allocation10 + $0x578] sm:$0xff]
    %v762 = vld [vmem:[#allocation10 + $0x580] sm:$0xff]
    %v763 = vld [vmem:[#allocation10 + $0x588] sm:$0xff]
    %v764 = vld [vmem:[#allocation10 + $0x590] sm:$0xff]
    %v765 = vld [vmem:[#allocation10 + $0x598] sm:$0xff]
    %v766 = vld [vmem:[#allocation10 + $0x5a0] sm:$0xff]
    %v767 = vld [vmem:[#allocation10 + $0x5a8] sm:$0xff]
    %v768 = vld [vmem:[#allocation10 + $0x5b0] sm:$0xff]
    %v769 = vld [vmem:[#allocation10 + $0x5b8] sm:$0xff]
    %v770 = vld [vmem:[#allocation10 + $0x5c0] sm:$0xff]
    %v771 = vld [vmem:[#allocation10 + $0x5c8] sm:$0xff]
    %v772 = vld [vmem:[#allocation10 + $0x5d0] sm:$0xff]
    %v773 = vld [vmem:[#allocation10 + $0x5d8] sm:$0xff]
    %v774 = vld [vmem:[#allocation10 + $0x5e0] sm:$0xff]
    %v775 = vld [vmem:[#allocation10 + $0x5e8] sm:$0xff]
    %v776 = vld [vmem:[#allocation10 + $0x5f0] sm:$0xff]
    %v777 = vld [vmem:[#allocation10 + $0x5f8] sm:$0xff]
    %v778 = vld [vmem:[#allocation10 + $0x600] sm:$0xff]
    %v779 = vld [vmem:[#allocation10 + $0x608] sm:$0xff]
    %v780 = vld [vmem:[#allocation10 + $0x610] sm:$0xff]
    %v781 = vld [vmem:[#allocation10 + $0x618] sm:$0xff]
    %v782 = vld [vmem:[#allocation10 + $0x620] sm:$0xff]
    %v783 = vld [vmem:[#allocation10 + $0x628] sm:$0xff]
    %v784 = vld [vmem:[#allocation10 + $0x630] sm:$0xff]
    %v785 = vld [vmem:[#allocation10 + $0x638] sm:$0xff]
    %v786 = vld [vmem:[#allocation10 + $0x640] sm:$0xff]
    %v787 = vld [vmem:[#allocation10 + $0x648] sm:$0xff]
    %v788 = vld [vmem:[#allocation10 + $0x650] sm:$0xff]
    %v789 = vld [vmem:[#allocation10 + $0x658] sm:$0xff]
    %v790 = vld [vmem:[#allocation10 + $0x660] sm:$0xff]
    %v791 = vld [vmem:[#allocation10 + $0x668] sm:$0xff]
    %v792 = vld [vmem:[#allocation10 + $0x670] sm:$0xff]
    %v793 = vld [vmem:[#allocation10 + $0x678] sm:$0xff]
    %v794 = vld [vmem:[#allocation10 + $0x680] sm:$0xff]
    %v795 = vld [vmem:[#allocation10 + $0x688] sm:$0xff]
    %v796 = vld [vmem:[#allocation10 + $0x690] sm:$0xff]
    %v797 = vld [vmem:[#allocation10 + $0x698] sm:$0xff]
    %v798 = vld [vmem:[#allocation10 + $0x6a0] sm:$0xff]
    %v799 = vld [vmem:[#allocation10 + $0x6a8] sm:$0xff]
    %v800 = vld [vmem:[#allocation10 + $0x6b0] sm:$0xff]
    %v801 = vld [vmem:[#allocation10 + $0x6b8] sm:$0xff]
    %v802 = vld [vmem:[#allocation10 + $0x6c0] sm:$0xff]
    %v803 = vld [vmem:[#allocation10 + $0x6c8] sm:$0xff]
    %v804 = vld [vmem:[#allocation10 + $0x6d0] sm:$0xff]
    %v805 = vld [vmem:[#allocation10 + $0x6d8] sm:$0xff]
    %v806 = vld [vmem:[#allocation10 + $0x6e0] sm:$0xff]
    %v807 = vld [vmem:[#allocation10 + $0x6e8] sm:$0xff]
    %v808 = vld [vmem:[#allocation10 + $0x6f0] sm:$0xff]
    %v809 = vld [vmem:[#allocation10 + $0x6f8] sm:$0xff]
    %v810 = vld [vmem:[#allocation10 + $0x700] sm:$0xff]
    %v811 = vld [vmem:[#allocation10 + $0x708] sm:$0xff]
    %v812 = vld [vmem:[#allocation10 + $0x710] sm:$0xff]
    %v813 = vld [vmem:[#allocation10 + $0x718] sm:$0xff]
    %v814 = vld [vmem:[#allocation10 + $0x720] sm:$0xff]
    %v815 = vld [vmem:[#allocation10 + $0x728] sm:$0xff]
    %v816 = vld [vmem:[#allocation10 + $0x730] sm:$0xff]
    %v817 = vld [vmem:[#allocation10 + $0x738] sm:$0xff]
    %v818 = vld [vmem:[#allocation10 + $0x740] sm:$0xff]
    %v819 = vld [vmem:[#allocation10 + $0x748] sm:$0xff]
    %v820 = vld [vmem:[#allocation10 + $0x750] sm:$0xff]
    %v821 = vld [vmem:[#allocation10 + $0x758] sm:$0xff]
    %v822 = vld [vmem:[#allocation10 + $0x760] sm:$0xff]
    %v823 = vld [vmem:[#allocation10 + $0x768] sm:$0xff]
    %v824 = vld [vmem:[#allocation10 + $0x770] sm:$0xff]
    %v825 = vld [vmem:[#allocation10 + $0x778] sm:$0xff]
    %v826 = vld [vmem:[#allocation10 + $0x780] sm:$0xff]
    %v827 = vld [vmem:[#allocation10 + $0x788] sm:$0xff]
    %v828 = vld [vmem:[#allocation10 + $0x790] sm:$0xff]
    %v829 = vld [vmem:[#allocation10 + $0x798] sm:$0xff]
    %v830 = vld [vmem:[#allocation10 + $0x7a0] sm:$0xff]
    %v831 = vld [vmem:[#allocation10 + $0x7a8] sm:$0xff]
    %v832 = vld [vmem:[#allocation10 + $0x7b0] sm:$0xff]
    %v833 = vld [vmem:[#allocation10 + $0x7b8] sm:$0xff]
    %v834 = vld [vmem:[#allocation10 + $0x7c0] sm:$0xff]
    %v835 = vld [vmem:[#allocation10 + $0x7c8] sm:$0xff]
    %v836 = vld [vmem:[#allocation10 + $0x7d0] sm:$0xff]
    %v837 = vld [vmem:[#allocation10 + $0x7d8] sm:$0xff]
    %v838 = vld [vmem:[#allocation10 + $0x7e0] sm:$0xff]
    %v839 = vld [vmem:[#allocation10 + $0x7e8] sm:$0xff]
    %v840 = vld [vmem:[#allocation10 + $0x7f0] sm:$0xff]
    %v841 = vld [vmem:[#allocation10 + $0x7f8] sm:$0xff]
    %v842 = vld [vmem:[#allocation10 + $0x800] sm:$0xff]
    %v843 = vld [vmem:[#allocation10 + $0x808] sm:$0xff]
    %v844 = vld [vmem:[#allocation10 + $0x810] sm:$0xff]
    %v845 = vld [vmem:[#allocation10 + $0x818] sm:$0xff]
    %v846 = vld [vmem:[#allocation10 + $0x820] sm:$0xff]
    %v847 = vld [vmem:[#allocation10 + $0x828] sm:$0xff]
    %v848 = vld [vmem:[#allocation10 + $0x830] sm:$0xff]
    %v849 = vld [vmem:[#allocation10 + $0x838] sm:$0xff]
    %v850 = vld [vmem:[#allocation10 + $0x840] sm:$0xff]
    %v851 = vld [vmem:[#allocation10 + $0x848] sm:$0xff]
    %v852 = vld [vmem:[#allocation10 + $0x850] sm:$0xff]
    %v853 = vld [vmem:[#allocation10 + $0x858] sm:$0xff]
    %v854 = vld [vmem:[#allocation10 + $0x860] sm:$0xff]
    %v855 = vld [vmem:[#allocation10 + $0x868] sm:$0xff]
    %v856 = vld [vmem:[#allocation10 + $0x870] sm:$0xff]
    %v857 = vld [vmem:[#allocation10 + $0x878] sm:$0xff]
    %v858 = vld [vmem:[#allocation10 + $0x880] sm:$0xff]
    %v859 = vld [vmem:[#allocation10 + $0x888] sm:$0xff]
    %v860 = vld [vmem:[#allocation10 + $0x890] sm:$0xff]
    %v861 = vld [vmem:[#allocation10 + $0x898] sm:$0xff]
    %v862 = vld [vmem:[#allocation10 + $0x8a0] sm:$0xff]
    %v863 = vld [vmem:[#allocation10 + $0x8a8] sm:$0xff]
    %v864 = vld [vmem:[#allocation10 + $0x8b0] sm:$0xff]
    %v865 = vld [vmem:[#allocation10 + $0x8b8] sm:$0xff]
    %v866 = vld [vmem:[#allocation10 + $0x8c0] sm:$0xff]
    %v867 = vld [vmem:[#allocation10 + $0x8c8] sm:$0xff]
    %v868 = vld [vmem:[#allocation10 + $0x8d0] sm:$0xff]
    %v869 = vld [vmem:[#allocation10 + $0x8d8] sm:$0xff]
    %v870 = vld [vmem:[#allocation10 + $0x8e0] sm:$0xff]
    %v871 = vld [vmem:[#allocation10 + $0x8e8] sm:$0xff]
    %v872 = vld [vmem:[#allocation10 + $0x8f0] sm:$0xff]
    %v873 = vld [vmem:[#allocation10 + $0x8f8] sm:$0xff]
    %v875 = vlaneseq
    %v876 = vshrl.u32 %v875, 7
    %v877 = vsub.s32 0, %v876
    %v878 = vrot.slane %v189, %v877
    %v879 = vlaneseq
    %v880 = vshrl.u32 %v879, 7
    %v881 = vsub.s32 1, %v880
    %v882 = vrot.slane %v189, %v881
    %v883 = vlaneseq
    %v884 = vshrl.u32 %v883, 7
    %v885 = vsub.s32 2, %v884
    %v886 = vrot.slane %v189, %v885
    %v887 = vlaneseq
    %v888 = vshrl.u32 %v887, 7
    %v889 = vsub.s32 3, %v888
    %v890 = vrot.slane %v189, %v889
    %v891 = vlaneseq
    %v892 = vshrl.u32 %v891, 7
    %v893 = vsub.s32 4, %v892
    %v894 = vrot.slane %v189, %v893
    %v895 = vlaneseq
    %v896 = vshrl.u32 %v895, 7
    %v897 = vsub.s32 5, %v896
    %v898 = vrot.slane %v189, %v897
    %v1193 = vunpack.c.l.b16 %v586
    %v1194 = vunpack.c.h.b16 %v586
    %v1195 = vunpack.c.l.b16 %v587
    %v1196 = vunpack.c.h.b16 %v587
    %v1197 = vunpack.c.l.b16 %v588
    %v1198 = vunpack.c.h.b16 %v588
    %v1199 = vunpack.c.l.b16 %v589
    %v1200 = vunpack.c.h.b16 %v589
    %v1201 = vunpack.c.l.b16 %v590
    %v1202 = vunpack.c.h.b16 %v590
    %v1203 = vunpack.c.l.b16 %v591
    %v1204 = vunpack.c.h.b16 %v591
    %v1205 = vunpack.c.l.b16 %v592
    %v1206 = vunpack.c.h.b16 %v592
    %v1207 = vunpack.c.l.b16 %v593
    %v1208 = vunpack.c.h.b16 %v593
    %v1209 = vunpack.c.l.b16 %v594
    %v1210 = vunpack.c.h.b16 %v594
    %v1211 = vunpack.c.l.b16 %v595
    %v1212 = vunpack.c.h.b16 %v595
    %v1213 = vunpack.c.l.b16 %v596
    %v1214 = vunpack.c.h.b16 %v596
    %v1215 = vunpack.c.l.b16 %v597
    %v1216 = vunpack.c.h.b16 %v597
    %v1217 = vunpack.c.l.b16 %v598
    %v1218 = vunpack.c.h.b16 %v598
    %v1219 = vunpack.c.l.b16 %v599
    %v1220 = vunpack.c.h.b16 %v599
    %v1221 = vunpack.c.l.b16 %v600
    %v1222 = vunpack.c.h.b16 %v600
    %v1223 = vunpack.c.l.b16 %v601
    %v1224 = vunpack.c.h.b16 %v601
    %v1225 = vunpack.c.l.b16 %v602
    %v1226 = vunpack.c.h.b16 %v602
    %v1227 = vunpack.c.l.b16 %v603
    %v1228 = vunpack.c.h.b16 %v603
    %v1229 = vunpack.c.l.b16 %v604
    %v1230 = vunpack.c.h.b16 %v604
    %v1231 = vunpack.c.l.b16 %v605
    %v1232 = vunpack.c.h.b16 %v605
    %v1233 = vunpack.c.l.b16 %v606
    %v1234 = vunpack.c.h.b16 %v606
    %v1235 = vunpack.c.l.b16 %v607
    %v1236 = vunpack.c.h.b16 %v607
    %v1237 = vunpack.c.l.b16 %v608
    %v1238 = vunpack.c.h.b16 %v608
    %v1239 = vunpack.c.l.b16 %v609
    %v1240 = vunpack.c.h.b16 %v609
    %v1241 = vunpack.c.l.b16 %v610
    %v1242 = vunpack.c.h.b16 %v610
    %v1243 = vunpack.c.l.b16 %v611
    %v1244 = vunpack.c.h.b16 %v611
    %v1245 = vunpack.c.l.b16 %v612
    %v1246 = vunpack.c.h.b16 %v612
    %v1247 = vunpack.c.l.b16 %v613
    %v1248 = vunpack.c.h.b16 %v613
    %v1249 = vunpack.c.l.b16 %v614
    %v1250 = vunpack.c.h.b16 %v614
    %v1251 = vunpack.c.l.b16 %v615
    %v1252 = vunpack.c.h.b16 %v615
    %v1253 = vunpack.c.l.b16 %v616
    %v1254 = vunpack.c.h.b16 %v616
    %v1255 = vunpack.c.l.b16 %v617
    %v1256 = vunpack.c.h.b16 %v617
    %v1257 = vunpack.c.l.b16 %v618
    %v1258 = vunpack.c.h.b16 %v618
    %v1259 = vunpack.c.l.b16 %v619
    %v1260 = vunpack.c.h.b16 %v619
    %v1261 = vunpack.c.l.b16 %v620
    %v1262 = vunpack.c.h.b16 %v620
    %v1263 = vunpack.c.l.b16 %v621
    %v1264 = vunpack.c.h.b16 %v621
    %v1265 = vunpack.c.l.b16 %v622
    %v1266 = vunpack.c.h.b16 %v622
    %v1267 = vunpack.c.l.b16 %v623
    %v1268 = vunpack.c.h.b16 %v623
    %v1269 = vunpack.c.l.b16 %v624
    %v1270 = vunpack.c.h.b16 %v624
    %v1271 = vunpack.c.l.b16 %v625
    %v1272 = vunpack.c.h.b16 %v625
    %v1273 = vunpack.c.l.b16 %v626
    %v1274 = vunpack.c.h.b16 %v626
    %v1275 = vunpack.c.l.b16 %v627
    %v1276 = vunpack.c.h.b16 %v627
    %v1277 = vunpack.c.l.b16 %v628
    %v1278 = vunpack.c.h.b16 %v628
    %v1279 = vunpack.c.l.b16 %v629
    %v1280 = vunpack.c.h.b16 %v629
    %v1281 = vunpack.c.l.b16 %v630
    %v1282 = vunpack.c.h.b16 %v630
    %v1283 = vunpack.c.l.b16 %v631
    %v1284 = vunpack.c.h.b16 %v631
    %v1285 = vunpack.c.l.b16 %v632
    %v1286 = vunpack.c.h.b16 %v632
    %v1287 = vunpack.c.l.b16 %v633
    %v1288 = vunpack.c.h.b16 %v633
    %v1289 = vunpack.c.l.b16 %v634
    %v1290 = vunpack.c.h.b16 %v634
    %v1291 = vunpack.c.l.b16 %v635
    %v1292 = vunpack.c.h.b16 %v635
    %v1293 = vunpack.c.l.b16 %v636
    %v1294 = vunpack.c.h.b16 %v636
    %v1295 = vunpack.c.l.b16 %v637
    %v1296 = vunpack.c.h.b16 %v637
    %v1297 = vunpack.c.l.b16 %v638
    %v1298 = vunpack.c.h.b16 %v638
    %v1299 = vunpack.c.l.b16 %v639
    %v1300 = vunpack.c.h.b16 %v639
    %v1301 = vunpack.c.l.b16 %v640
    %v1302 = vunpack.c.h.b16 %v640
    %v1303 = vunpack.c.l.b16 %v641
    %v1304 = vunpack.c.h.b16 %v641
    %v1305 = vunpack.c.l.b16 %v642
    %v1306 = vunpack.c.h.b16 %v642
    %v1307 = vunpack.c.l.b16 %v643
    %v1308 = vunpack.c.h.b16 %v643
    %v1309 = vunpack.c.l.b16 %v644
    %v1310 = vunpack.c.h.b16 %v644
    %v1311 = vunpack.c.l.b16 %v645
    %v1312 = vunpack.c.h.b16 %v645
    %v1313 = vunpack.c.l.b16 %v646
    %v1314 = vunpack.c.h.b16 %v646
    %v1315 = vunpack.c.l.b16 %v647
    %v1316 = vunpack.c.h.b16 %v647
    %v1317 = vunpack.c.l.b16 %v648
    %v1318 = vunpack.c.h.b16 %v648
    %v1319 = vunpack.c.l.b16 %v649
    %v1320 = vunpack.c.h.b16 %v649
    %v1321 = vunpack.c.l.b16 %v650
    %v1322 = vunpack.c.h.b16 %v650
    %v1323 = vunpack.c.l.b16 %v651
    %v1324 = vunpack.c.h.b16 %v651
    %v1325 = vunpack.c.l.b16 %v652
    %v1326 = vunpack.c.h.b16 %v652
    %v1327 = vunpack.c.l.b16 %v653
    %v1328 = vunpack.c.h.b16 %v653
    %v1329 = vunpack.c.l.b16 %v654
    %v1330 = vunpack.c.h.b16 %v654
    %v1331 = vunpack.c.l.b16 %v655
    %v1332 = vunpack.c.h.b16 %v655
    %v1333 = vunpack.c.l.b16 %v656
    %v1334 = vunpack.c.h.b16 %v656
    %v1335 = vunpack.c.l.b16 %v657
    %v1336 = vunpack.c.h.b16 %v657
    %v1337 = vunpack.c.l.b16 %v658
    %v1338 = vunpack.c.h.b16 %v658
    %v1339 = vunpack.c.l.b16 %v659
    %v1340 = vunpack.c.h.b16 %v659
    %v1341 = vunpack.c.l.b16 %v660
    %v1342 = vunpack.c.h.b16 %v660
    %v1343 = vunpack.c.l.b16 %v661
    %v1344 = vunpack.c.h.b16 %v661
    %v1345 = vunpack.c.l.b16 %v662
    %v1346 = vunpack.c.h.b16 %v662
    %v1347 = vunpack.c.l.b16 %v663
    %v1348 = vunpack.c.h.b16 %v663
    %v1349 = vunpack.c.l.b16 %v664
    %v1350 = vunpack.c.h.b16 %v664
    %v1351 = vunpack.c.l.b16 %v665
    %v1352 = vunpack.c.h.b16 %v665
    %v1353 = vunpack.c.l.b16 %v666
    %v1354 = vunpack.c.h.b16 %v666
    %v1355 = vunpack.c.l.b16 %v667
    %v1356 = vunpack.c.h.b16 %v667
    %v1357 = vunpack.c.l.b16 %v668
    %v1358 = vunpack.c.h.b16 %v668
    %v1359 = vunpack.c.l.b16 %v669
    %v1360 = vunpack.c.h.b16 %v669
    %v1361 = vunpack.c.l.b16 %v670
    %v1362 = vunpack.c.h.b16 %v670
    %v1363 = vunpack.c.l.b16 %v671
    %v1364 = vunpack.c.h.b16 %v671
    %v1365 = vunpack.c.l.b16 %v672
    %v1366 = vunpack.c.h.b16 %v672
    %v1367 = vunpack.c.l.b16 %v673
    %v1368 = vunpack.c.h.b16 %v673
    %v1369 = vunpack.c.l.b16 %v674
    %v1370 = vunpack.c.h.b16 %v674
    %v1371 = vunpack.c.l.b16 %v675
    %v1372 = vunpack.c.h.b16 %v675
    %v1373 = vunpack.c.l.b16 %v676
    %v1374 = vunpack.c.h.b16 %v676
    %v1375 = vunpack.c.l.b16 %v677
    %v1376 = vunpack.c.h.b16 %v677
    %v1377 = vunpack.c.l.b16 %v678
    %v1378 = vunpack.c.h.b16 %v678
    %v1379 = vunpack.c.l.b16 %v679
    %v1380 = vunpack.c.h.b16 %v679
    %v1381 = vunpack.c.l.b16 %v680
    %v1382 = vunpack.c.h.b16 %v680
    %v1383 = vunpack.c.l.b16 %v681
    %v1384 = vunpack.c.h.b16 %v681
    %v1385 = vunpack.c.l.b16 %v682
    %v1386 = vunpack.c.h.b16 %v682
    %v1387 = vunpack.c.l.b16 %v683
    %v1388 = vunpack.c.h.b16 %v683
    %v1389 = vunpack.c.l.b16 %v684
    %v1390 = vunpack.c.h.b16 %v684
    %v1391 = vunpack.c.l.b16 %v685
    %v1392 = vunpack.c.h.b16 %v685
    %v1393 = vunpack.c.l.b16 %v686
    %v1394 = vunpack.c.h.b16 %v686
    %v1395 = vunpack.c.l.b16 %v687
    %v1396 = vunpack.c.h.b16 %v687
    %v1397 = vunpack.c.l.b16 %v688
    %v1398 = vunpack.c.h.b16 %v688
    %v1399 = vunpack.c.l.b16 %v689
    %v1400 = vunpack.c.h.b16 %v689
    %v1401 = vunpack.c.l.b16 %v690
    %v1402 = vunpack.c.h.b16 %v690
    %v1403 = vunpack.c.l.b16 %v691
    %v1404 = vunpack.c.h.b16 %v691
    %v1405 = vunpack.c.l.b16 %v692
    %v1406 = vunpack.c.h.b16 %v692
    %v1407 = vunpack.c.l.b16 %v693
    %v1408 = vunpack.c.h.b16 %v693
    %v1409 = vunpack.c.l.b16 %v694
    %v1410 = vunpack.c.h.b16 %v694
    %v1411 = vunpack.c.l.b16 %v695
    %v1412 = vunpack.c.h.b16 %v695
    %v1413 = vunpack.c.l.b16 %v696
    %v1414 = vunpack.c.h.b16 %v696
    %v1415 = vunpack.c.l.b16 %v697
    %v1416 = vunpack.c.h.b16 %v697
    %v1417 = vunpack.c.l.b16 %v698
    %v1418 = vunpack.c.h.b16 %v698
    %v1419 = vunpack.c.l.b16 %v699
    %v1420 = vunpack.c.h.b16 %v699
    %v1421 = vunpack.c.l.b16 %v700
    %v1422 = vunpack.c.h.b16 %v700
    %v1423 = vunpack.c.l.b16 %v701
    %v1424 = vunpack.c.h.b16 %v701
    %v1425 = vunpack.c.l.b16 %v702
    %v1426 = vunpack.c.h.b16 %v702
    %v1427 = vunpack.c.l.b16 %v703
    %v1428 = vunpack.c.h.b16 %v703
    %v1429 = vunpack.c.l.b16 %v704
    %v1430 = vunpack.c.h.b16 %v704
    %v1431 = vunpack.c.l.b16 %v705
    %v1432 = vunpack.c.h.b16 %v705
    %v1433 = vunpack.c.l.b16 %v706
    %v1434 = vunpack.c.h.b16 %v706
    %v1435 = vunpack.c.l.b16 %v707
    %v1436 = vunpack.c.h.b16 %v707
    %v1437 = vunpack.c.l.b16 %v708
    %v1438 = vunpack.c.h.b16 %v708
    %v1439 = vunpack.c.l.b16 %v709
    %v1440 = vunpack.c.h.b16 %v709
    %v1441 = vunpack.c.l.b16 %v710
    %v1442 = vunpack.c.h.b16 %v710
    %v1443 = vunpack.c.l.b16 %v711
    %v1444 = vunpack.c.h.b16 %v711
    %v1445 = vunpack.c.l.b16 %v712
    %v1446 = vunpack.c.h.b16 %v712
    %v1447 = vunpack.c.l.b16 %v713
    %v1448 = vunpack.c.h.b16 %v713
    %v1449 = vunpack.c.l.b16 %v714
    %v1450 = vunpack.c.h.b16 %v714
    %v1451 = vunpack.c.l.b16 %v715
    %v1452 = vunpack.c.h.b16 %v715
    %v1453 = vunpack.c.l.b16 %v716
    %v1454 = vunpack.c.h.b16 %v716
    %v1455 = vunpack.c.l.b16 %v717
    %v1456 = vunpack.c.h.b16 %v717
    %v1457 = vunpack.c.l.b16 %v718
    %v1458 = vunpack.c.h.b16 %v718
    %v1459 = vunpack.c.l.b16 %v719
    %v1460 = vunpack.c.h.b16 %v719
    %v1461 = vunpack.c.l.b16 %v720
    %v1462 = vunpack.c.h.b16 %v720
    %v1463 = vunpack.c.l.b16 %v721
    %v1464 = vunpack.c.h.b16 %v721
    %v1465 = vunpack.c.l.b16 %v722
    %v1466 = vunpack.c.h.b16 %v722
    %v1467 = vunpack.c.l.b16 %v723
    %v1468 = vunpack.c.h.b16 %v723
    %v1469 = vunpack.c.l.b16 %v724
    %v1470 = vunpack.c.h.b16 %v724
    %v1471 = vunpack.c.l.b16 %v725
    %v1472 = vunpack.c.h.b16 %v725
    %v1473 = vunpack.c.l.b16 %v726
    %v1474 = vunpack.c.h.b16 %v726
    %v1475 = vunpack.c.l.b16 %v727
    %v1476 = vunpack.c.h.b16 %v727
    %v1477 = vunpack.c.l.b16 %v728
    %v1478 = vunpack.c.h.b16 %v728
    %v1479 = vunpack.c.l.b16 %v729
    %v1480 = vunpack.c.h.b16 %v729
    %v1481 = vunpack.c.l.b16 %v730
    %v1482 = vunpack.c.h.b16 %v730
    %v1483 = vunpack.c.l.b16 %v731
    %v1484 = vunpack.c.h.b16 %v731
    %v1485 = vunpack.c.l.b16 %v732
    %v1486 = vunpack.c.h.b16 %v732
    %v1487 = vunpack.c.l.b16 %v733
    %v1488 = vunpack.c.h.b16 %v733
    %v1489 = vunpack.c.l.b16 %v734
    %v1490 = vunpack.c.h.b16 %v734
    %v1491 = vunpack.c.l.b16 %v735
    %v1492 = vunpack.c.h.b16 %v735
    %v1493 = vunpack.c.l.b16 %v736
    %v1494 = vunpack.c.h.b16 %v736
    %v1495 = vunpack.c.l.b16 %v737
    %v1496 = vunpack.c.h.b16 %v737
    %v1497 = vunpack.c.l.b16 %v738
    %v1498 = vunpack.c.h.b16 %v738
    %v1499 = vunpack.c.l.b16 %v739
    %v1500 = vunpack.c.h.b16 %v739
    %v1501 = vunpack.c.l.b16 %v740
    %v1502 = vunpack.c.h.b16 %v740
    %v1503 = vunpack.c.l.b16 %v741
    %v1504 = vunpack.c.h.b16 %v741
    %v1505 = vunpack.c.l.b16 %v742
    %v1506 = vunpack.c.h.b16 %v742
    %v1507 = vunpack.c.l.b16 %v743
    %v1508 = vunpack.c.h.b16 %v743
    %v1509 = vunpack.c.l.b16 %v744
    %v1510 = vunpack.c.h.b16 %v744
    %v1511 = vunpack.c.l.b16 %v745
    %v1512 = vunpack.c.h.b16 %v745
    %v1513 = vunpack.c.l.b16 %v746
    %v1514 = vunpack.c.h.b16 %v746
    %v1515 = vunpack.c.l.b16 %v747
    %v1516 = vunpack.c.h.b16 %v747
    %v1517 = vunpack.c.l.b16 %v748
    %v1518 = vunpack.c.h.b16 %v748
    %v1519 = vunpack.c.l.b16 %v749
    %v1520 = vunpack.c.h.b16 %v749
    %v1521 = vunpack.c.l.b16 %v750
    %v1522 = vunpack.c.h.b16 %v750
    %v1523 = vunpack.c.l.b16 %v751
    %v1524 = vunpack.c.h.b16 %v751
    %v1525 = vunpack.c.l.b16 %v752
    %v1526 = vunpack.c.h.b16 %v752
    %v1527 = vunpack.c.l.b16 %v753
    %v1528 = vunpack.c.h.b16 %v753
    %v1529 = vunpack.c.l.b16 %v754
    %v1530 = vunpack.c.h.b16 %v754
    %v1531 = vunpack.c.l.b16 %v755
    %v1532 = vunpack.c.h.b16 %v755
    %v1533 = vunpack.c.l.b16 %v756
    %v1534 = vunpack.c.h.b16 %v756
    %v1535 = vunpack.c.l.b16 %v757
    %v1536 = vunpack.c.h.b16 %v757
    %v1537 = vunpack.c.l.b16 %v758
    %v1538 = vunpack.c.h.b16 %v758
    %v1539 = vunpack.c.l.b16 %v759
    %v1540 = vunpack.c.h.b16 %v759
    %v1541 = vunpack.c.l.b16 %v760
    %v1542 = vunpack.c.h.b16 %v760
    %v1543 = vunpack.c.l.b16 %v761
    %v1544 = vunpack.c.h.b16 %v761
    %v1545 = vunpack.c.l.b16 %v762
    %v1546 = vunpack.c.h.b16 %v762
    %v1547 = vunpack.c.l.b16 %v763
    %v1548 = vunpack.c.h.b16 %v763
    %v1549 = vunpack.c.l.b16 %v764
    %v1550 = vunpack.c.h.b16 %v764
    %v1551 = vunpack.c.l.b16 %v765
    %v1552 = vunpack.c.h.b16 %v765
    %v1553 = vunpack.c.l.b16 %v766
    %v1554 = vunpack.c.h.b16 %v766
    %v1555 = vunpack.c.l.b16 %v767
    %v1556 = vunpack.c.h.b16 %v767
    %v1557 = vunpack.c.l.b16 %v768
    %v1558 = vunpack.c.h.b16 %v768
    %v1559 = vunpack.c.l.b16 %v769
    %v1560 = vunpack.c.h.b16 %v769
    %v1561 = vunpack.c.l.b16 %v770
    %v1562 = vunpack.c.h.b16 %v770
    %v1563 = vunpack.c.l.b16 %v771
    %v1564 = vunpack.c.h.b16 %v771
    %v1565 = vunpack.c.l.b16 %v772
    %v1566 = vunpack.c.h.b16 %v772
    %v1567 = vunpack.c.l.b16 %v773
    %v1568 = vunpack.c.h.b16 %v773
    %v1569 = vunpack.c.l.b16 %v774
    %v1570 = vunpack.c.h.b16 %v774
    %v1571 = vunpack.c.l.b16 %v775
    %v1572 = vunpack.c.h.b16 %v775
    %v1573 = vunpack.c.l.b16 %v776
    %v1574 = vunpack.c.h.b16 %v776
    %v1575 = vunpack.c.l.b16 %v777
    %v1576 = vunpack.c.h.b16 %v777
    %v1577 = vunpack.c.l.b16 %v778
    %v1578 = vunpack.c.h.b16 %v778
    %v1579 = vunpack.c.l.b16 %v779
    %v1580 = vunpack.c.h.b16 %v779
    %v1581 = vunpack.c.l.b16 %v780
    %v1582 = vunpack.c.h.b16 %v780
    %v1583 = vunpack.c.l.b16 %v781
    %v1584 = vunpack.c.h.b16 %v781
    %v1585 = vunpack.c.l.b16 %v782
    %v1586 = vunpack.c.h.b16 %v782
    %v1587 = vunpack.c.l.b16 %v783
    %v1588 = vunpack.c.h.b16 %v783
    %v1589 = vunpack.c.l.b16 %v784
    %v1590 = vunpack.c.h.b16 %v784
    %v1591 = vunpack.c.l.b16 %v785
    %v1592 = vunpack.c.h.b16 %v785
    %v1593 = vunpack.c.l.b16 %v786
    %v1594 = vunpack.c.h.b16 %v786
    %v1595 = vunpack.c.l.b16 %v787
    %v1596 = vunpack.c.h.b16 %v787
    %v1597 = vunpack.c.l.b16 %v788
    %v1598 = vunpack.c.h.b16 %v788
    %v1599 = vunpack.c.l.b16 %v789
    %v1600 = vunpack.c.h.b16 %v789
    %v1601 = vunpack.c.l.b16 %v790
    %v1602 = vunpack.c.h.b16 %v790
    %v1603 = vunpack.c.l.b16 %v791
    %v1604 = vunpack.c.h.b16 %v791
    %v1605 = vunpack.c.l.b16 %v792
    %v1606 = vunpack.c.h.b16 %v792
    %v1607 = vunpack.c.l.b16 %v793
    %v1608 = vunpack.c.h.b16 %v793
    %v1609 = vunpack.c.l.b16 %v794
    %v1610 = vunpack.c.h.b16 %v794
    %v1611 = vunpack.c.l.b16 %v795
    %v1612 = vunpack.c.h.b16 %v795
    %v1613 = vunpack.c.l.b16 %v796
    %v1614 = vunpack.c.h.b16 %v796
    %v1615 = vunpack.c.l.b16 %v797
    %v1616 = vunpack.c.h.b16 %v797
    %v1617 = vunpack.c.l.b16 %v798
    %v1618 = vunpack.c.h.b16 %v798
    %v1619 = vunpack.c.l.b16 %v799
    %v1620 = vunpack.c.h.b16 %v799
    %v1621 = vunpack.c.l.b16 %v800
    %v1622 = vunpack.c.h.b16 %v800
    %v1623 = vunpack.c.l.b16 %v801
    %v1624 = vunpack.c.h.b16 %v801
    %v1625 = vunpack.c.l.b16 %v802
    %v1626 = vunpack.c.h.b16 %v802
    %v1627 = vunpack.c.l.b16 %v803
    %v1628 = vunpack.c.h.b16 %v803
    %v1629 = vunpack.c.l.b16 %v804
    %v1630 = vunpack.c.h.b16 %v804
    %v1631 = vunpack.c.l.b16 %v805
    %v1632 = vunpack.c.h.b16 %v805
    %v1633 = vunpack.c.l.b16 %v806
    %v1634 = vunpack.c.h.b16 %v806
    %v1635 = vunpack.c.l.b16 %v807
    %v1636 = vunpack.c.h.b16 %v807
    %v1637 = vunpack.c.l.b16 %v808
    %v1638 = vunpack.c.h.b16 %v808
    %v1639 = vunpack.c.l.b16 %v809
    %v1640 = vunpack.c.h.b16 %v809
    %v1641 = vunpack.c.l.b16 %v810
    %v1642 = vunpack.c.h.b16 %v810
    %v1643 = vunpack.c.l.b16 %v811
    %v1644 = vunpack.c.h.b16 %v811
    %v1645 = vunpack.c.l.b16 %v812
    %v1646 = vunpack.c.h.b16 %v812
    %v1647 = vunpack.c.l.b16 %v813
    %v1648 = vunpack.c.h.b16 %v813
    %v1649 = vunpack.c.l.b16 %v814
    %v1650 = vunpack.c.h.b16 %v814
    %v1651 = vunpack.c.l.b16 %v815
    %v1652 = vunpack.c.h.b16 %v815
    %v1653 = vunpack.c.l.b16 %v816
    %v1654 = vunpack.c.h.b16 %v816
    %v1655 = vunpack.c.l.b16 %v817
    %v1656 = vunpack.c.h.b16 %v817
    %v1657 = vunpack.c.l.b16 %v818
    %v1658 = vunpack.c.h.b16 %v818
    %v1659 = vunpack.c.l.b16 %v819
    %v1660 = vunpack.c.h.b16 %v819
    %v1661 = vunpack.c.l.b16 %v820
    %v1662 = vunpack.c.h.b16 %v820
    %v1663 = vunpack.c.l.b16 %v821
    %v1664 = vunpack.c.h.b16 %v821
    %v1665 = vunpack.c.l.b16 %v822
    %v1666 = vunpack.c.h.b16 %v822
    %v1667 = vunpack.c.l.b16 %v823
    %v1668 = vunpack.c.h.b16 %v823
    %v1669 = vunpack.c.l.b16 %v824
    %v1670 = vunpack.c.h.b16 %v824
    %v1671 = vunpack.c.l.b16 %v825
    %v1672 = vunpack.c.h.b16 %v825
    %v1673 = vunpack.c.l.b16 %v826
    %v1674 = vunpack.c.h.b16 %v826
    %v1675 = vunpack.c.l.b16 %v827
    %v1676 = vunpack.c.h.b16 %v827
    %v1677 = vunpack.c.l.b16 %v828
    %v1678 = vunpack.c.h.b16 %v828
    %v1679 = vunpack.c.l.b16 %v829
    %v1680 = vunpack.c.h.b16 %v829
    %v1681 = vunpack.c.l.b16 %v830
    %v1682 = vunpack.c.h.b16 %v830
    %v1683 = vunpack.c.l.b16 %v831
    %v1684 = vunpack.c.h.b16 %v831
    %v1685 = vunpack.c.l.b16 %v832
    %v1686 = vunpack.c.h.b16 %v832
    %v1687 = vunpack.c.l.b16 %v833
    %v1688 = vunpack.c.h.b16 %v833
    %v1689 = vunpack.c.l.b16 %v834
    %v1690 = vunpack.c.h.b16 %v834
    %v1691 = vunpack.c.l.b16 %v835
    %v1692 = vunpack.c.h.b16 %v835
    %v1693 = vunpack.c.l.b16 %v836
    %v1694 = vunpack.c.h.b16 %v836
    %v1695 = vunpack.c.l.b16 %v837
    %v1696 = vunpack.c.h.b16 %v837
    %v1697 = vunpack.c.l.b16 %v838
    %v1698 = vunpack.c.h.b16 %v838
    %v1699 = vunpack.c.l.b16 %v839
    %v1700 = vunpack.c.h.b16 %v839
    %v1701 = vunpack.c.l.b16 %v840
    %v1702 = vunpack.c.h.b16 %v840
    %v1703 = vunpack.c.l.b16 %v841
    %v1704 = vunpack.c.h.b16 %v841
    %v1705 = vunpack.c.l.b16 %v842
    %v1706 = vunpack.c.h.b16 %v842
    %v1707 = vunpack.c.l.b16 %v843
    %v1708 = vunpack.c.h.b16 %v843
    %v1709 = vunpack.c.l.b16 %v844
    %v1710 = vunpack.c.h.b16 %v844
    %v1711 = vunpack.c.l.b16 %v845
    %v1712 = vunpack.c.h.b16 %v845
    %v1713 = vunpack.c.l.b16 %v846
    %v1714 = vunpack.c.h.b16 %v846
    %v1715 = vunpack.c.l.b16 %v847
    %v1716 = vunpack.c.h.b16 %v847
    %v1717 = vunpack.c.l.b16 %v848
    %v1718 = vunpack.c.h.b16 %v848
    %v1719 = vunpack.c.l.b16 %v849
    %v1720 = vunpack.c.h.b16 %v849
    %v1721 = vunpack.c.l.b16 %v850
    %v1722 = vunpack.c.h.b16 %v850
    %v1723 = vunpack.c.l.b16 %v851
    %v1724 = vunpack.c.h.b16 %v851
    %v1725 = vunpack.c.l.b16 %v852
    %v1726 = vunpack.c.h.b16 %v852
    %v1727 = vunpack.c.l.b16 %v853
    %v1728 = vunpack.c.h.b16 %v853
    %v1729 = vunpack.c.l.b16 %v854
    %v1730 = vunpack.c.h.b16 %v854
    %v1731 = vunpack.c.l.b16 %v855
    %v1732 = vunpack.c.h.b16 %v855
    %v1733 = vunpack.c.l.b16 %v856
    %v1734 = vunpack.c.h.b16 %v856
    %v1735 = vunpack.c.l.b16 %v857
    %v1736 = vunpack.c.h.b16 %v857
    %v1737 = vunpack.c.l.b16 %v858
    %v1738 = vunpack.c.h.b16 %v858
    %v1739 = vunpack.c.l.b16 %v859
    %v1740 = vunpack.c.h.b16 %v859
    %v1741 = vunpack.c.l.b16 %v860
    %v1742 = vunpack.c.h.b16 %v860
    %v1743 = vunpack.c.l.b16 %v861
    %v1744 = vunpack.c.h.b16 %v861
    %v1745 = vunpack.c.l.b16 %v862
    %v1746 = vunpack.c.h.b16 %v862
    %v1747 = vunpack.c.l.b16 %v863
    %v1748 = vunpack.c.h.b16 %v863
    %v1749 = vunpack.c.l.b16 %v864
    %v1750 = vunpack.c.h.b16 %v864
    %v1751 = vunpack.c.l.b16 %v865
    %v1752 = vunpack.c.h.b16 %v865
    %v1753 = vunpack.c.l.b16 %v866
    %v1754 = vunpack.c.h.b16 %v866
    %v1755 = vunpack.c.l.b16 %v867
    %v1756 = vunpack.c.h.b16 %v867
    %v1757 = vunpack.c.l.b16 %v868
    %v1758 = vunpack.c.h.b16 %v868
    %v1759 = vunpack.c.l.b16 %v869
    %v1760 = vunpack.c.h.b16 %v869
    %v1761 = vunpack.c.l.b16 %v870
    %v1762 = vunpack.c.h.b16 %v870
    %v1763 = vunpack.c.l.b16 %v871
    %v1764 = vunpack.c.h.b16 %v871
    %v1765 = vunpack.c.l.b16 %v872
    %v1766 = vunpack.c.h.b16 %v872
    %v1767 = vunpack.c.l.b16 %v873
    %v1768 = vunpack.c.h.b16 %v873
    %v1769 = vpack.c.b16 %v1199, %v1193
    %v1770 = vpack.c.b16 %v1200, %v1194
    %v1771 = vpack.c.b16 %v1201, %v1195
    %v1772 = vpack.c.b16 %v1202, %v1196
    %v1773 = vpack.c.b16 %v1203, %v1197
    %v1774 = vpack.c.b16 %v1204, %v1198
    %v1775 = vpack.c.b16 %v1211, %v1205
    %v1776 = vpack.c.b16 %v1212, %v1206
    %v1777 = vpack.c.b16 %v1213, %v1207
    %v1778 = vpack.c.b16 %v1214, %v1208
    %v1779 = vpack.c.b16 %v1215, %v1209
    %v1780 = vpack.c.b16 %v1216, %v1210
    %v1781 = vpack.c.b16 %v1223, %v1217
    %v1782 = vpack.c.b16 %v1224, %v1218
    %v1783 = vpack.c.b16 %v1225, %v1219
    %v1784 = vpack.c.b16 %v1226, %v1220
    %v1785 = vpack.c.b16 %v1227, %v1221
    %v1786 = vpack.c.b16 %v1228, %v1222
    %v1787 = vpack.c.b16 %v1235, %v1229
    %v1788 = vpack.c.b16 %v1236, %v1230
    %v1789 = vpack.c.b16 %v1237, %v1231
    %v1790 = vpack.c.b16 %v1238, %v1232
    %v1791 = vpack.c.b16 %v1239, %v1233
    %v1792 = vpack.c.b16 %v1240, %v1234
    %v1793 = vpack.c.b16 %v1247, %v1241
    %v1794 = vpack.c.b16 %v1248, %v1242
    %v1795 = vpack.c.b16 %v1249, %v1243
    %v1796 = vpack.c.b16 %v1250, %v1244
    %v1797 = vpack.c.b16 %v1251, %v1245
    %v1798 = vpack.c.b16 %v1252, %v1246
    %v1799 = vpack.c.b16 %v1259, %v1253
    %v1800 = vpack.c.b16 %v1260, %v1254
    %v1801 = vpack.c.b16 %v1261, %v1255
    %v1802 = vpack.c.b16 %v1262, %v1256
    %v1803 = vpack.c.b16 %v1263, %v1257
    %v1804 = vpack.c.b16 %v1264, %v1258
    %v1805 = vpack.c.b16 %v1271, %v1265
    %v1806 = vpack.c.b16 %v1272, %v1266
    %v1807 = vpack.c.b16 %v1273, %v1267
    %v1808 = vpack.c.b16 %v1274, %v1268
    %v1809 = vpack.c.b16 %v1275, %v1269
    %v1810 = vpack.c.b16 %v1276, %v1270
    %v1811 = vpack.c.b16 %v1283, %v1277
    %v1812 = vpack.c.b16 %v1284, %v1278
    %v1813 = vpack.c.b16 %v1285, %v1279
    %v1814 = vpack.c.b16 %v1286, %v1280
    %v1815 = vpack.c.b16 %v1287, %v1281
    %v1816 = vpack.c.b16 %v1288, %v1282
    %v1817 = vpack.c.b16 %v1295, %v1289
    %v1818 = vpack.c.b16 %v1296, %v1290
    %v1819 = vpack.c.b16 %v1297, %v1291
    %v1820 = vpack.c.b16 %v1298, %v1292
    %v1821 = vpack.c.b16 %v1299, %v1293
    %v1822 = vpack.c.b16 %v1300, %v1294
    %v1823 = vpack.c.b16 %v1307, %v1301
    %v1824 = vpack.c.b16 %v1308, %v1302
    %v1825 = vpack.c.b16 %v1309, %v1303
    %v1826 = vpack.c.b16 %v1310, %v1304
    %v1827 = vpack.c.b16 %v1311, %v1305
    %v1828 = vpack.c.b16 %v1312, %v1306
    %v1829 = vpack.c.b16 %v1319, %v1313
    %v1830 = vpack.c.b16 %v1320, %v1314
    %v1831 = vpack.c.b16 %v1321, %v1315
    %v1832 = vpack.c.b16 %v1322, %v1316
    %v1833 = vpack.c.b16 %v1323, %v1317
    %v1834 = vpack.c.b16 %v1324, %v1318
    %v1835 = vpack.c.b16 %v1331, %v1325
    %v1836 = vpack.c.b16 %v1332, %v1326
    %v1837 = vpack.c.b16 %v1333, %v1327
    %v1838 = vpack.c.b16 %v1334, %v1328
    %v1839 = vpack.c.b16 %v1335, %v1329
    %v1840 = vpack.c.b16 %v1336, %v1330
    %v1841 = vpack.c.b16 %v1343, %v1337
    %v1842 = vpack.c.b16 %v1344, %v1338
    %v1843 = vpack.c.b16 %v1345, %v1339
    %v1844 = vpack.c.b16 %v1346, %v1340
    %v1845 = vpack.c.b16 %v1347, %v1341
    %v1846 = vpack.c.b16 %v1348, %v1342
    %v1847 = vpack.c.b16 %v1355, %v1349
    %v1848 = vpack.c.b16 %v1356, %v1350
    %v1849 = vpack.c.b16 %v1357, %v1351
    %v1850 = vpack.c.b16 %v1358, %v1352
    %v1851 = vpack.c.b16 %v1359, %v1353
    %v1852 = vpack.c.b16 %v1360, %v1354
    %v1853 = vpack.c.b16 %v1367, %v1361
    %v1854 = vpack.c.b16 %v1368, %v1362
    %v1855 = vpack.c.b16 %v1369, %v1363
    %v1856 = vpack.c.b16 %v1370, %v1364
    %v1857 = vpack.c.b16 %v1371, %v1365
    %v1858 = vpack.c.b16 %v1372, %v1366
    %v1859 = vpack.c.b16 %v1379, %v1373
    %v1860 = vpack.c.b16 %v1380, %v1374
    %v1861 = vpack.c.b16 %v1381, %v1375
    %v1862 = vpack.c.b16 %v1382, %v1376
    %v1863 = vpack.c.b16 %v1383, %v1377
    %v1864 = vpack.c.b16 %v1384, %v1378
    %v1865 = vpack.c.b16 %v1391, %v1385
    %v1866 = vpack.c.b16 %v1392, %v1386
    %v1867 = vpack.c.b16 %v1393, %v1387
    %v1868 = vpack.c.b16 %v1394, %v1388
    %v1869 = vpack.c.b16 %v1395, %v1389
    %v1870 = vpack.c.b16 %v1396, %v1390
    %v1871 = vpack.c.b16 %v1403, %v1397
    %v1872 = vpack.c.b16 %v1404, %v1398
    %v1873 = vpack.c.b16 %v1405, %v1399
    %v1874 = vpack.c.b16 %v1406, %v1400
    %v1875 = vpack.c.b16 %v1407, %v1401
    %v1876 = vpack.c.b16 %v1408, %v1402
    %v1877 = vpack.c.b16 %v1415, %v1409
    %v1878 = vpack.c.b16 %v1416, %v1410
    %v1879 = vpack.c.b16 %v1417, %v1411
    %v1880 = vpack.c.b16 %v1418, %v1412
    %v1881 = vpack.c.b16 %v1419, %v1413
    %v1882 = vpack.c.b16 %v1420, %v1414
    %v1883 = vpack.c.b16 %v1427, %v1421
    %v1884 = vpack.c.b16 %v1428, %v1422
    %v1885 = vpack.c.b16 %v1429, %v1423
    %v1886 = vpack.c.b16 %v1430, %v1424
    %v1887 = vpack.c.b16 %v1431, %v1425
    %v1888 = vpack.c.b16 %v1432, %v1426
    %v1889 = vpack.c.b16 %v1439, %v1433
    %v1890 = vpack.c.b16 %v1440, %v1434
    %v1891 = vpack.c.b16 %v1441, %v1435
    %v1892 = vpack.c.b16 %v1442, %v1436
    %v1893 = vpack.c.b16 %v1443, %v1437
    %v1894 = vpack.c.b16 %v1444, %v1438
    %v1895 = vpack.c.b16 %v1451, %v1445
    %v1896 = vpack.c.b16 %v1452, %v1446
    %v1897 = vpack.c.b16 %v1453, %v1447
    %v1898 = vpack.c.b16 %v1454, %v1448
    %v1899 = vpack.c.b16 %v1455, %v1449
    %v1900 = vpack.c.b16 %v1456, %v1450
    %v1901 = vpack.c.b16 %v1463, %v1457
    %v1902 = vpack.c.b16 %v1464, %v1458
    %v1903 = vpack.c.b16 %v1465, %v1459
    %v1904 = vpack.c.b16 %v1466, %v1460
    %v1905 = vpack.c.b16 %v1467, %v1461
    %v1906 = vpack.c.b16 %v1468, %v1462
    %v1907 = vpack.c.b16 %v1475, %v1469
    %v1908 = vpack.c.b16 %v1476, %v1470
    %v1909 = vpack.c.b16 %v1477, %v1471
    %v1910 = vpack.c.b16 %v1478, %v1472
    %v1911 = vpack.c.b16 %v1479, %v1473
    %v1912 = vpack.c.b16 %v1480, %v1474
    %v1913 = vpack.c.b16 %v1487, %v1481
    %v1914 = vpack.c.b16 %v1488, %v1482
    %v1915 = vpack.c.b16 %v1489, %v1483
    %v1916 = vpack.c.b16 %v1490, %v1484
    %v1917 = vpack.c.b16 %v1491, %v1485
    %v1918 = vpack.c.b16 %v1492, %v1486
    %v1919 = vpack.c.b16 %v1499, %v1493
    %v1920 = vpack.c.b16 %v1500, %v1494
    %v1921 = vpack.c.b16 %v1501, %v1495
    %v1922 = vpack.c.b16 %v1502, %v1496
    %v1923 = vpack.c.b16 %v1503, %v1497
    %v1924 = vpack.c.b16 %v1504, %v1498
    %v1925 = vpack.c.b16 %v1511, %v1505
    %v1926 = vpack.c.b16 %v1512, %v1506
    %v1927 = vpack.c.b16 %v1513, %v1507
    %v1928 = vpack.c.b16 %v1514, %v1508
    %v1929 = vpack.c.b16 %v1515, %v1509
    %v1930 = vpack.c.b16 %v1516, %v1510
    %v1931 = vpack.c.b16 %v1523, %v1517
    %v1932 = vpack.c.b16 %v1524, %v1518
    %v1933 = vpack.c.b16 %v1525, %v1519
    %v1934 = vpack.c.b16 %v1526, %v1520
    %v1935 = vpack.c.b16 %v1527, %v1521
    %v1936 = vpack.c.b16 %v1528, %v1522
    %v1937 = vpack.c.b16 %v1535, %v1529
    %v1938 = vpack.c.b16 %v1536, %v1530
    %v1939 = vpack.c.b16 %v1537, %v1531
    %v1940 = vpack.c.b16 %v1538, %v1532
    %v1941 = vpack.c.b16 %v1539, %v1533
    %v1942 = vpack.c.b16 %v1540, %v1534
    %v1943 = vpack.c.b16 %v1547, %v1541
    %v1944 = vpack.c.b16 %v1548, %v1542
    %v1945 = vpack.c.b16 %v1549, %v1543
    %v1946 = vpack.c.b16 %v1550, %v1544
    %v1947 = vpack.c.b16 %v1551, %v1545
    %v1948 = vpack.c.b16 %v1552, %v1546
    %v1949 = vpack.c.b16 %v1559, %v1553
    %v1950 = vpack.c.b16 %v1560, %v1554
    %v1951 = vpack.c.b16 %v1561, %v1555
    %v1952 = vpack.c.b16 %v1562, %v1556
    %v1953 = vpack.c.b16 %v1563, %v1557
    %v1954 = vpack.c.b16 %v1564, %v1558
    %v1955 = vpack.c.b16 %v1571, %v1565
    %v1956 = vpack.c.b16 %v1572, %v1566
    %v1957 = vpack.c.b16 %v1573, %v1567
    %v1958 = vpack.c.b16 %v1574, %v1568
    %v1959 = vpack.c.b16 %v1575, %v1569
    %v1960 = vpack.c.b16 %v1576, %v1570
    %v1961 = vpack.c.b16 %v1583, %v1577
    %v1962 = vpack.c.b16 %v1584, %v1578
    %v1963 = vpack.c.b16 %v1585, %v1579
    %v1964 = vpack.c.b16 %v1586, %v1580
    %v1965 = vpack.c.b16 %v1587, %v1581
    %v1966 = vpack.c.b16 %v1588, %v1582
    %v1967 = vpack.c.b16 %v1595, %v1589
    %v1968 = vpack.c.b16 %v1596, %v1590
    %v1969 = vpack.c.b16 %v1597, %v1591
    %v1970 = vpack.c.b16 %v1598, %v1592
    %v1971 = vpack.c.b16 %v1599, %v1593
    %v1972 = vpack.c.b16 %v1600, %v1594
    %v1973 = vpack.c.b16 %v1607, %v1601
    %v1974 = vpack.c.b16 %v1608, %v1602
    %v1975 = vpack.c.b16 %v1609, %v1603
    %v1976 = vpack.c.b16 %v1610, %v1604
    %v1977 = vpack.c.b16 %v1611, %v1605
    %v1978 = vpack.c.b16 %v1612, %v1606
    %v1979 = vpack.c.b16 %v1619, %v1613
    %v1980 = vpack.c.b16 %v1620, %v1614
    %v1981 = vpack.c.b16 %v1621, %v1615
    %v1982 = vpack.c.b16 %v1622, %v1616
    %v1983 = vpack.c.b16 %v1623, %v1617
    %v1984 = vpack.c.b16 %v1624, %v1618
    %v1985 = vpack.c.b16 %v1631, %v1625
    %v1986 = vpack.c.b16 %v1632, %v1626
    %v1987 = vpack.c.b16 %v1633, %v1627
    %v1988 = vpack.c.b16 %v1634, %v1628
    %v1989 = vpack.c.b16 %v1635, %v1629
    %v1990 = vpack.c.b16 %v1636, %v1630
    %v1991 = vpack.c.b16 %v1643, %v1637
    %v1992 = vpack.c.b16 %v1644, %v1638
    %v1993 = vpack.c.b16 %v1645, %v1639
    %v1994 = vpack.c.b16 %v1646, %v1640
    %v1995 = vpack.c.b16 %v1647, %v1641
    %v1996 = vpack.c.b16 %v1648, %v1642
    %v1997 = vpack.c.b16 %v1655, %v1649
    %v1998 = vpack.c.b16 %v1656, %v1650
    %v1999 = vpack.c.b16 %v1657, %v1651
    %v2000 = vpack.c.b16 %v1658, %v1652
    %v2001 = vpack.c.b16 %v1659, %v1653
    %v2002 = vpack.c.b16 %v1660, %v1654
    %v2003 = vpack.c.b16 %v1667, %v1661
    %v2004 = vpack.c.b16 %v1668, %v1662
    %v2005 = vpack.c.b16 %v1669, %v1663
    %v2006 = vpack.c.b16 %v1670, %v1664
    %v2007 = vpack.c.b16 %v1671, %v1665
    %v2008 = vpack.c.b16 %v1672, %v1666
    %v2009 = vpack.c.b16 %v1679, %v1673
    %v2010 = vpack.c.b16 %v1680, %v1674
    %v2011 = vpack.c.b16 %v1681, %v1675
    %v2012 = vpack.c.b16 %v1682, %v1676
    %v2013 = vpack.c.b16 %v1683, %v1677
    %v2014 = vpack.c.b16 %v1684, %v1678
    %v2015 = vpack.c.b16 %v1691, %v1685
    %v2016 = vpack.c.b16 %v1692, %v1686
    %v2017 = vpack.c.b16 %v1693, %v1687
    %v2018 = vpack.c.b16 %v1694, %v1688
    %v2019 = vpack.c.b16 %v1695, %v1689
    %v2020 = vpack.c.b16 %v1696, %v1690
    %v2021 = vpack.c.b16 %v1703, %v1697
    %v2022 = vpack.c.b16 %v1704, %v1698
    %v2023 = vpack.c.b16 %v1705, %v1699
    %v2024 = vpack.c.b16 %v1706, %v1700
    %v2025 = vpack.c.b16 %v1707, %v1701
    %v2026 = vpack.c.b16 %v1708, %v1702
    %v2027 = vpack.c.b16 %v1715, %v1709
    %v2028 = vpack.c.b16 %v1716, %v1710
    %v2029 = vpack.c.b16 %v1717, %v1711
    %v2030 = vpack.c.b16 %v1718, %v1712
    %v2031 = vpack.c.b16 %v1719, %v1713
    %v2032 = vpack.c.b16 %v1720, %v1714
    %v2033 = vpack.c.b16 %v1727, %v1721
    %v2034 = vpack.c.b16 %v1728, %v1722
    %v2035 = vpack.c.b16 %v1729, %v1723
    %v2036 = vpack.c.b16 %v1730, %v1724
    %v2037 = vpack.c.b16 %v1731, %v1725
    %v2038 = vpack.c.b16 %v1732, %v1726
    %v2039 = vpack.c.b16 %v1739, %v1733
    %v2040 = vpack.c.b16 %v1740, %v1734
    %v2041 = vpack.c.b16 %v1741, %v1735
    %v2042 = vpack.c.b16 %v1742, %v1736
    %v2043 = vpack.c.b16 %v1743, %v1737
    %v2044 = vpack.c.b16 %v1744, %v1738
    %v2045 = vpack.c.b16 %v1751, %v1745
    %v2046 = vpack.c.b16 %v1752, %v1746
    %v2047 = vpack.c.b16 %v1753, %v1747
    %v2048 = vpack.c.b16 %v1754, %v1748
    %v2049 = vpack.c.b16 %v1755, %v1749
    %v2050 = vpack.c.b16 %v1756, %v1750
    %v2051 = vpack.c.b16 %v1763, %v1757
    %v2052 = vpack.c.b16 %v1764, %v1758
    %v2053 = vpack.c.b16 %v1765, %v1759
    %v2054 = vpack.c.b16 %v1766, %v1760
    %v2055 = vpack.c.b16 %v1767, %v1761
    %v2056 = vpack.c.b16 %v1768, %v1762
    %2345 = vmatprep.subr.bf16.mxu0 %v1770
    %2346 = vmatpush1.bf16.msra.mxu0 %v1769
    %2347 = vmatprep.subr.bf16.mxu0 %v1776
    %2348 = vmatpush1.bf16.msra.mxu0 %v1775
    %2349 = vmatprep.subr.bf16.mxu0 %v1782
    %2350 = vmatpush1.bf16.msra.mxu0 %v1781
    %2351 = vmatprep.subr.bf16.mxu0 %v1788
    %2352 = vmatpush1.bf16.msra.mxu0 %v1787
    %2353 = vmatprep.subr.bf16.mxu0 %v1794
    %2354 = vmatpush1.bf16.msra.mxu0 %v1793
    %2355 = vmatprep.subr.bf16.mxu0 %v1800
    %2356 = vmatpush1.bf16.msra.mxu0 %v1799
    %2357 = vmatprep.subr.bf16.mxu0 %v1806
    %2358 = vmatpush1.bf16.msra.mxu0 %v1805
    %2359 = vmatprep.subr.bf16.mxu0 %v1812
    %2360 = vmatpush1.bf16.msra.mxu0 %v1811
    %2361 = vmatprep.subr.bf16.mxu0 %v1818
    %2362 = vmatpush1.bf16.msra.mxu0 %v1817
    %2363 = vmatprep.subr.bf16.mxu0 %v1824
    %2364 = vmatpush1.bf16.msra.mxu0 %v1823
    %2365 = vmatprep.subr.bf16.mxu0 %v1830
    %2366 = vmatpush1.bf16.msra.mxu0 %v1829
    %2367 = vmatprep.subr.bf16.mxu0 %v1836
    %2368 = vmatpush1.bf16.msra.mxu0 %v1835
    %2369 = vmatprep.subr.bf16.mxu0 %v1842
    %2370 = vmatpush1.bf16.msra.mxu0 %v1841
    %2371 = vmatprep.subr.bf16.mxu0 %v1848
    %2372 = vmatpush1.bf16.msra.mxu0 %v1847
    %2373 = vmatprep.subr.bf16.mxu0 %v1854
    %2374 = vmatpush1.bf16.msra.mxu0 %v1853
    %2375 = vmatprep.subr.bf16.mxu0 %v1860
    %2376 = vmatpush1.bf16.msra.mxu0 %v1859
    %2377 = vmatprep.mubr.bf16.mxu0 %v581
    %2378 = vmatmul.mubr.bf16.gmra.mrb[0].mxu0 %v580
    %v2379 = vpop.f32.mrb[0].mxu0
    %v2380 = vadd.f32 %v878, %v2379
    %v2381 = vpop.f32.mrb[0].mxu0
    %v2382 = vadd.f32 %v882, %v2381
    %v2383 = vpop.f32.mrb[0].mxu0
    %v2384 = vpop.f32.mrb[0].mxu0
    %2385 = vdwg.mxu0
    %2386 = vmatprep.subr.bf16.mxu0 %v1866
    %2387 = vmatpush1.bf16.msra.mxu0 %v1865
    %2388 = vmatprep.subr.bf16.mxu0 %v1872
    %2389 = vmatpush1.bf16.msra.mxu0 %v1871
    %2390 = vmatprep.subr.bf16.mxu0 %v1878
    %2391 = vmatpush1.bf16.msra.mxu0 %v1877
    %2392 = vmatprep.subr.bf16.mxu0 %v1884
    %2393 = vmatpush1.bf16.msra.mxu0 %v1883
    %2394 = vmatprep.subr.bf16.mxu0 %v1890
    %2395 = vmatpush1.bf16.msra.mxu0 %v1889
    %2396 = vmatprep.subr.bf16.mxu0 %v1896
    %2397 = vmatpush1.bf16.msra.mxu0 %v1895
    %2398 = vmatprep.subr.bf16.mxu0 %v1902
    %2399 = vmatpush1.bf16.msra.mxu0 %v1901
    %2400 = vmatprep.subr.bf16.mxu0 %v1908
    %2401 = vmatpush1.bf16.msra.mxu0 %v1907
    %2402 = vmatprep.subr.bf16.mxu0 %v1914
    %2403 = vmatpush1.bf16.msra.mxu0 %v1913
    %2404 = vmatprep.subr.bf16.mxu0 %v1920
    %2405 = vmatpush1.bf16.msra.mxu0 %v1919
    %2406 = vmatprep.subr.bf16.mxu0 %v1926
    %2407 = vmatpush1.bf16.msra.mxu0 %v1925
    %2408 = vmatprep.subr.bf16.mxu0 %v1932
    %2409 = vmatpush1.bf16.msra.mxu0 %v1931
    %2410 = vmatprep.subr.bf16.mxu0 %v1938
    %2411 = vmatpush1.bf16.msra.mxu0 %v1937
    %2412 = vmatprep.subr.bf16.mxu0 %v1944
    %2413 = vmatpush1.bf16.msra.mxu0 %v1943
    %2414 = vmatprep.subr.bf16.mxu0 %v1950
    %2415 = vmatpush1.bf16.msra.mxu0 %v1949
    %2416 = vmatprep.subr.bf16.mxu0 %v1956
    %2417 = vmatpush1.bf16.msra.mxu0 %v1955
    %2418 = vmatprep.mubr.bf16.mxu0 %v583
    %2419 = vmatmul.mubr.bf16.gmra.mrb[0].mxu0 %v582
    %v2420 = vpop.f32.mrb[0].mxu0
    %v2421 = vadd.f32 %v2380, %v2420
    %v2422 = vpop.f32.mrb[0].mxu0
    %v2423 = vadd.f32 %v2382, %v2422
    %v2424 = vpop.f32.mrb[0].mxu0
    %v2425 = vpop.f32.mrb[0].mxu0
    %2426 = vdwg.mxu0
    %2427 = vmatprep.subr.bf16.mxu0 %v1962
    %2428 = vmatpush1.bf16.msra.mxu0 %v1961
    %2429 = vmatprep.subr.bf16.mxu0 %v1968
    %2430 = vmatpush1.bf16.msra.mxu0 %v1967
    %2431 = vmatprep.subr.bf16.mxu0 %v1974
    %2432 = vmatpush1.bf16.msra.mxu0 %v1973
    %2433 = vmatprep.subr.bf16.mxu0 %v1980
    %2434 = vmatpush1.bf16.msra.mxu0 %v1979
    %2435 = vmatprep.subr.bf16.mxu0 %v1986
    %2436 = vmatpush1.bf16.msra.mxu0 %v1985
    %2437 = vmatprep.subr.bf16.mxu0 %v1992
    %2438 = vmatpush1.bf16.msra.mxu0 %v1991
    %2439 = vmatprep.subr.bf16.mxu0 %v1998
    %2440 = vmatpush1.bf16.msra.mxu0 %v1997
    %2441 = vmatprep.subr.bf16.mxu0 %v2004
    %2442 = vmatpush1.bf16.msra.mxu0 %v2003
    %2443 = vmatprep.subr.bf16.mxu0 %v2010
    %2444 = vmatpush1.bf16.msra.mxu0 %v2009
    %2445 = vmatprep.subr.bf16.mxu0 %v2016
    %2446 = vmatpush1.bf16.msra.mxu0 %v2015
    %2447 = vmatprep.subr.bf16.mxu0 %v2022
    %2448 = vmatpush1.bf16.msra.mxu0 %v2021
    %2449 = vmatprep.subr.bf16.mxu0 %v2028
    %2450 = vmatpush1.bf16.msra.mxu0 %v2027
    %2451 = vmatprep.subr.bf16.mxu0 %v2034
    %2452 = vmatpush1.bf16.msra.mxu0 %v2033
    %2453 = vmatprep.subr.bf16.mxu0 %v2040
    %2454 = vmatpush1.bf16.msra.mxu0 %v2039
    %2455 = vmatprep.subr.bf16.mxu0 %v2046
    %2456 = vmatpush1.bf16.msra.mxu0 %v2045
    %2457 = vmatprep.subr.bf16.mxu0 %v2052
    %2458 = vmatpush1.bf16.msra.mxu0 %v2051
    %2459 = vmatprep.mubr.bf16.mxu0 %v585
    %2460 = vmatmul.mubr.bf16.gmra.mrb[0].mxu0 %v584
    %v2461 = vpop.f32.mrb[0].mxu0
    %v2462 = vadd.f32 %v2421, %v2461
    %v2463 = vpop.f32.mrb[0].mxu0
    %v2464 = vadd.f32 %v2423, %v2463
    %v2465 = vpop.f32.mrb[0].mxu0
    %v2466 = vpop.f32.mrb[0].mxu0
    %2467 = vdwg.mxu0
    %2468 = vmatprep.subr.bf16.mxu0 %v1772
    %2469 = vmatpush1.bf16.msra.mxu0 %v1771
    %2470 = vmatprep.subr.bf16.mxu0 %v1778
    %2471 = vmatpush1.bf16.msra.mxu0 %v1777
    %2472 = vmatprep.subr.bf16.mxu0 %v1784
    %2473 = vmatpush1.bf16.msra.mxu0 %v1783
    %2474 = vmatprep.subr.bf16.mxu0 %v1790
    %2475 = vmatpush1.bf16.msra.mxu0 %v1789
    %2476 = vmatprep.subr.bf16.mxu0 %v1796
    %2477 = vmatpush1.bf16.msra.mxu0 %v1795
    %2478 = vmatprep.subr.bf16.mxu0 %v1802
    %2479 = vmatpush1.bf16.msra.mxu0 %v1801
    %2480 = vmatprep.subr.bf16.mxu0 %v1808
    %2481 = vmatpush1.bf16.msra.mxu0 %v1807
    %2482 = vmatprep.subr.bf16.mxu0 %v1814
    %2483 = vmatpush1.bf16.msra.mxu0 %v1813
    %2484 = vmatprep.subr.bf16.mxu0 %v1820
    %2485 = vmatpush1.bf16.msra.mxu0 %v1819
    %2486 = vmatprep.subr.bf16.mxu0 %v1826
    %2487 = vmatpush1.bf16.msra.mxu0 %v1825
    %2488 = vmatprep.subr.bf16.mxu0 %v1832
    %2489 = vmatpush1.bf16.msra.mxu0 %v1831
    %2490 = vmatprep.subr.bf16.mxu0 %v1838
    %2491 = vmatpush1.bf16.msra.mxu0 %v1837
    %2492 = vmatprep.subr.bf16.mxu0 %v1844
    %2493 = vmatpush1.bf16.msra.mxu0 %v1843
    %2494 = vmatprep.subr.bf16.mxu0 %v1850
    %2495 = vmatpush1.bf16.msra.mxu0 %v1849
    %2496 = vmatprep.subr.bf16.mxu0 %v1856
    %2497 = vmatpush1.bf16.msra.mxu0 %v1855
    %2498 = vmatprep.subr.bf16.mxu0 %v1862
    %2499 = vmatpush1.bf16.msra.mxu0 %v1861
    %2500 = vmatprep.mubr.bf16.mxu0 %v581
    %2501 = vmatmul.mubr.bf16.gmra.mrb[0].mxu0 %v580
    %v2502 = vpop.f32.mrb[0].mxu0
    %v2503 = vadd.f32 %v886, %v2502
    %v2504 = vpop.f32.mrb[0].mxu0
    %v2505 = vadd.f32 %v890, %v2504
    %v2506 = vpop.f32.mrb[0].mxu0
    %v2507 = vpop.f32.mrb[0].mxu0
    %2508 = vdwg.mxu0
    %2509 = vmatprep.subr.bf16.mxu0 %v1868
    %2510 = vmatpush1.bf16.msra.mxu0 %v1867
    %2511 = vmatprep.subr.bf16.mxu0 %v1874
    %2512 = vmatpush1.bf16.msra.mxu0 %v1873
    %2513 = vmatprep.subr.bf16.mxu0 %v1880
    %2514 = vmatpush1.bf16.msra.mxu0 %v1879
    %2515 = vmatprep.subr.bf16.mxu0 %v1886
    %2516 = vmatpush1.bf16.msra.mxu0 %v1885
    %2517 = vmatprep.subr.bf16.mxu0 %v1892
    %2518 = vmatpush1.bf16.msra.mxu0 %v1891
    %2519 = vmatprep.subr.bf16.mxu0 %v1898
    %2520 = vmatpush1.bf16.msra.mxu0 %v1897
    %2521 = vmatprep.subr.bf16.mxu0 %v1904
    %2522 = vmatpush1.bf16.msra.mxu0 %v1903
    %2523 = vmatprep.subr.bf16.mxu0 %v1910
    %2524 = vmatpush1.bf16.msra.mxu0 %v1909
    %2525 = vmatprep.subr.bf16.mxu0 %v1916
    %2526 = vmatpush1.bf16.msra.mxu0 %v1915
    %2527 = vmatprep.subr.bf16.mxu0 %v1922
    %2528 = vmatpush1.bf16.msra.mxu0 %v1921
    %2529 = vmatprep.subr.bf16.mxu0 %v1928
    %2530 = vmatpush1.bf16.msra.mxu0 %v1927
    %2531 = vmatprep.subr.bf16.mxu0 %v1934
    %2532 = vmatpush1.bf16.msra.mxu0 %v1933
    %2533 = vmatprep.subr.bf16.mxu0 %v1940
    %2534 = vmatpush1.bf16.msra.mxu0 %v1939
    %2535 = vmatprep.subr.bf16.mxu0 %v1946
    %2536 = vmatpush1.bf16.msra.mxu0 %v1945
    %2537 = vmatprep.subr.bf16.mxu0 %v1952
    %2538 = vmatpush1.bf16.msra.mxu0 %v1951
    %2539 = vmatprep.subr.bf16.mxu0 %v1958
    %2540 = vmatpush1.bf16.msra.mxu0 %v1957
    %2541 = vmatprep.mubr.bf16.mxu0 %v583
    %2542 = vmatmul.mubr.bf16.gmra.mrb[0].mxu0 %v582
    %v2543 = vpop.f32.mrb[0].mxu0
    %v2544 = vadd.f32 %v2503, %v2543
    %v2545 = vpop.f32.mrb[0].mxu0
    %v2546 = vadd.f32 %v2505, %v2545
    %v2547 = vpop.f32.mrb[0].mxu0
    %v2548 = vpop.f32.mrb[0].mxu0
    %2549 = vdwg.mxu0
    %2550 = vmatprep.subr.bf16.mxu0 %v1964
    %2551 = vmatpush1.bf16.msra.mxu0 %v1963
    %2552 = vmatprep.subr.bf16.mxu0 %v1970
    %2553 = vmatpush1.bf16.msra.mxu0 %v1969
    %2554 = vmatprep.subr.bf16.mxu0 %v1976
    %2555 = vmatpush1.bf16.msra.mxu0 %v1975
    %2556 = vmatprep.subr.bf16.mxu0 %v1982
    %2557 = vmatpush1.bf16.msra.mxu0 %v1981
    %2558 = vmatprep.subr.bf16.mxu0 %v1988
    %2559 = vmatpush1.bf16.msra.mxu0 %v1987
    %2560 = vmatprep.subr.bf16.mxu0 %v1994
    %2561 = vmatpush1.bf16.msra.mxu0 %v1993
    %2562 = vmatprep.subr.bf16.mxu0 %v2000
    %2563 = vmatpush1.bf16.msra.mxu0 %v1999
    %2564 = vmatprep.subr.bf16.mxu0 %v2006
    %2565 = vmatpush1.bf16.msra.mxu0 %v2005
    %2566 = vmatprep.subr.bf16.mxu0 %v2012
    %2567 = vmatpush1.bf16.msra.mxu0 %v2011
    %2568 = vmatprep.subr.bf16.mxu0 %v2018
    %2569 = vmatpush1.bf16.msra.mxu0 %v2017
    %2570 = vmatprep.subr.bf16.mxu0 %v2024
    %2571 = vmatpush1.bf16.msra.mxu0 %v2023
    %2572 = vmatprep.subr.bf16.mxu0 %v2030
    %2573 = vmatpush1.bf16.msra.mxu0 %v2029
    %2574 = vmatprep.subr.bf16.mxu0 %v2036
    %2575 = vmatpush1.bf16.msra.mxu0 %v2035
    %2576 = vmatprep.subr.bf16.mxu0 %v2042
    %2577 = vmatpush1.bf16.msra.mxu0 %v2041
    %2578 = vmatprep.subr.bf16.mxu0 %v2048
    %2579 = vmatpush1.bf16.msra.mxu0 %v2047
    %2580 = vmatprep.subr.bf16.mxu0 %v2054
    %2581 = vmatpush1.bf16.msra.mxu0 %v2053
    %2582 = vmatprep.mubr.bf16.mxu0 %v585
    %2583 = vmatmul.mubr.bf16.gmra.mrb[0].mxu0 %v584
    %v2584 = vpop.f32.mrb[0].mxu0
    %v2585 = vadd.f32 %v2544, %v2584
    %v2586 = vpop.f32.mrb[0].mxu0
    %v2587 = vadd.f32 %v2546, %v2586
    %v2588 = vpop.f32.mrb[0].mxu0
    %v2589 = vpop.f32.mrb[0].mxu0
    %2590 = vdwg.mxu0
    %2591 = vmatprep.subr.bf16.mxu0 %v1774
    %2592 = vmatpush1.bf16.msra.mxu0 %v1773
    %2593 = vmatprep.subr.bf16.mxu0 %v1780
    %2594 = vmatpush1.bf16.msra.mxu0 %v1779
    %2595 = vmatprep.subr.bf16.mxu0 %v1786
    %2596 = vmatpush1.bf16.msra.mxu0 %v1785
    %2597 = vmatprep.subr.bf16.mxu0 %v1792
    %2598 = vmatpush1.bf16.msra.mxu0 %v1791
    %2599 = vmatprep.subr.bf16.mxu0 %v1798
    %2600 = vmatpush1.bf16.msra.mxu0 %v1797
    %2601 = vmatprep.subr.bf16.mxu0 %v1804
    %2602 = vmatpush1.bf16.msra.mxu0 %v1803
    %2603 = vmatprep.subr.bf16.mxu0 %v1810
    %2604 = vmatpush1.bf16.msra.mxu0 %v1809
    %2605 = vmatprep.subr.bf16.mxu0 %v1816
    %2606 = vmatpush1.bf16.msra.mxu0 %v1815
    %2607 = vmatprep.subr.bf16.mxu0 %v1822
    %2608 = vmatpush1.bf16.msra.mxu0 %v1821
    %2609 = vmatprep.subr.bf16.mxu0 %v1828
    %2610 = vmatpush1.bf16.msra.mxu0 %v1827
    %2611 = vmatprep.subr.bf16.mxu0 %v1834
    %2612 = vmatpush1.bf16.msra.mxu0 %v1833
    %2613 = vmatprep.subr.bf16.mxu0 %v1840
    %2614 = vmatpush1.bf16.msra.mxu0 %v1839
    %2615 = vmatprep.subr.bf16.mxu0 %v1846
    %2616 = vmatpush1.bf16.msra.mxu0 %v1845
    %2617 = vmatprep.subr.bf16.mxu0 %v1852
    %2618 = vmatpush1.bf16.msra.mxu0 %v1851
    %2619 = vmatprep.subr.bf16.mxu0 %v1858
    %2620 = vmatpush1.bf16.msra.mxu0 %v1857
    %2621 = vmatprep.subr.bf16.mxu0 %v1864
    %2622 = vmatpush1.bf16.msra.mxu0 %v1863
    %2623 = vmatprep.mubr.bf16.mxu0 %v581
    %2624 = vmatmul.mubr.bf16.gmra.mrb[0].mxu0 %v580
    %v2625 = vpop.f32.mrb[0].mxu0
    %v2626 = vadd.f32 %v894, %v2625
    %v2627 = vpop.f32.mrb[0].mxu0
    %v2628 = vadd.f32 %v898, %v2627
    %v2629 = vpop.f32.mrb[0].mxu0
    %v2630 = vpop.f32.mrb[0].mxu0
    %2631 = vdwg.mxu0
    %2632 = vmatprep.subr.bf16.mxu0 %v1870
    %2633 = vmatpush1.bf16.msra.mxu0 %v1869
    %2634 = vmatprep.subr.bf16.mxu0 %v1876
    %2635 = vmatpush1.bf16.msra.mxu0 %v1875
    %2636 = vmatprep.subr.bf16.mxu0 %v1882
    %2637 = vmatpush1.bf16.msra.mxu0 %v1881
    %2638 = vmatprep.subr.bf16.mxu0 %v1888
    %2639 = vmatpush1.bf16.msra.mxu0 %v1887
    %2640 = vmatprep.subr.bf16.mxu0 %v1894
    %2641 = vmatpush1.bf16.msra.mxu0 %v1893
    %2642 = vmatprep.subr.bf16.mxu0 %v1900
    %2643 = vmatpush1.bf16.msra.mxu0 %v1899
    %2644 = vmatprep.subr.bf16.mxu0 %v1906
    %2645 = vmatpush1.bf16.msra.mxu0 %v1905
    %2646 = vmatprep.subr.bf16.mxu0 %v1912
    %2647 = vmatpush1.bf16.msra.mxu0 %v1911
    %2648 = vmatprep.subr.bf16.mxu0 %v1918
    %2649 = vmatpush1.bf16.msra.mxu0 %v1917
    %2650 = vmatprep.subr.bf16.mxu0 %v1924
    %2651 = vmatpush1.bf16.msra.mxu0 %v1923
    %2652 = vmatprep.subr.bf16.mxu0 %v1930
    %2653 = vmatpush1.bf16.msra.mxu0 %v1929
    %2654 = vmatprep.subr.bf16.mxu0 %v1936
    %2655 = vmatpush1.bf16.msra.mxu0 %v1935
    %2656 = vmatprep.subr.bf16.mxu0 %v1942
    %2657 = vmatpush1.bf16.msra.mxu0 %v1941
    %2658 = vmatprep.subr.bf16.mxu0 %v1948
    %2659 = vmatpush1.bf16.msra.mxu0 %v1947
    %2660 = vmatprep.subr.bf16.mxu0 %v1954
    %2661 = vmatpush1.bf16.msra.mxu0 %v1953
    %2662 = vmatprep.subr.bf16.mxu0 %v1960
    %2663 = vmatpush1.bf16.msra.mxu0 %v1959
    %2664 = vmatprep.mubr.bf16.mxu0 %v583
    %2665 = vmatmul.mubr.bf16.gmra.mrb[0].mxu0 %v582
    %v2666 = vpop.f32.mrb[0].mxu0
    %v2667 = vadd.f32 %v2626, %v2666
    %v2668 = vpop.f32.mrb[0].mxu0
    %v2669 = vadd.f32 %v2628, %v2668
    %v2670 = vpop.f32.mrb[0].mxu0
    %v2671 = vpop.f32.mrb[0].mxu0
    %2672 = vdwg.mxu0
    %2673 = vmatprep.subr.bf16.mxu0 %v1966
    %2674 = vmatpush1.bf16.msra.mxu0 %v1965
    %2675 = vmatprep.subr.bf16.mxu0 %v1972
    %2676 = vmatpush1.bf16.msra.mxu0 %v1971
    %2677 = vmatprep.subr.bf16.mxu0 %v1978
    %2678 = vmatpush1.bf16.msra.mxu0 %v1977
    %2679 = vmatprep.subr.bf16.mxu0 %v1984
    %2680 = vmatpush1.bf16.msra.mxu0 %v1983
    %2681 = vmatprep.subr.bf16.mxu0 %v1990
    %2682 = vmatpush1.bf16.msra.mxu0 %v1989
    %2683 = vmatprep.subr.bf16.mxu0 %v1996
    %2684 = vmatpush1.bf16.msra.mxu0 %v1995
    %2685 = vmatprep.subr.bf16.mxu0 %v2002
    %2686 = vmatpush1.bf16.msra.mxu0 %v2001
    %2687 = vmatprep.subr.bf16.mxu0 %v2008
    %2688 = vmatpush1.bf16.msra.mxu0 %v2007
    %2689 = vmatprep.subr.bf16.mxu0 %v2014
    %2690 = vmatpush1.bf16.msra.mxu0 %v2013
    %2691 = vmatprep.subr.bf16.mxu0 %v2020
    %2692 = vmatpush1.bf16.msra.mxu0 %v2019
    %2693 = vmatprep.subr.bf16.mxu0 %v2026
    %2694 = vmatpush1.bf16.msra.mxu0 %v2025
    %2695 = vmatprep.subr.bf16.mxu0 %v2032
    %2696 = vmatpush1.bf16.msra.mxu0 %v2031
    %2697 = vmatprep.subr.bf16.mxu0 %v2038
    %2698 = vmatpush1.bf16.msra.mxu0 %v2037
    %2699 = vmatprep.subr.bf16.mxu0 %v2044
    %2700 = vmatpush1.bf16.msra.mxu0 %v2043
    %2701 = vmatprep.subr.bf16.mxu0 %v2050
    %2702 = vmatpush1.bf16.msra.mxu0 %v2049
    %2703 = vmatprep.subr.bf16.mxu0 %v2056
    %2704 = vmatpush1.bf16.msra.mxu0 %v2055
    %2705 = vmatprep.mubr.bf16.mxu0 %v585
    %2706 = vmatmul.mubr.bf16.gmra.mrb[0].mxu0 %v584
    %v2707 = vpop.f32.mrb[0].mxu0
    %v2708 = vadd.f32 %v2667, %v2707
    %v2709 = vpop.f32.mrb[0].mxu0
    %v2710 = vadd.f32 %v2669, %v2709
    %v2711 = vpop.f32.mrb[0].mxu0
    %v2712 = vpop.f32.mrb[0].mxu0
    %2713 = vdwg.mxu0
    %v2714 = vmax.f32 %v2462, 0.0
    %v2715 = vmax.f32 %v2464, 0.0
    %v2716 = vmax.f32 %v2585, 0.0
    %v2717 = vmax.f32 %v2587, 0.0
    %v2718 = vmax.f32 %v2708, 0.0
    %v2719 = vmax.f32 %v2710, 0.0
    %v2720 = vpack.c.bf16 %v2714, %v2714
    %v2721 = vpack.c.bf16 %v2715, %v2715
    %v2722 = vpack.c.bf16 %v2716, %v2716
    %v2723 = vpack.c.bf16 %v2717, %v2717
    %v2724 = vpack.c.bf16 %v2718, %v2718
    %v2725 = vpack.c.bf16 %v2719, %v2719
    %v2727 = vlaneseq
    %v2728 = vshrl.u32 %v2727, 7
    %v2729 = vsub.s32 0, %v2728
    %v2730 = vrot.slane %v199, %v2729
    %v2731 = vlaneseq
    %v2732 = vshrl.u32 %v2731, 7
    %v2733 = vsub.s32 1, %v2732
    %v2734 = vrot.slane %v199, %v2733
    %v2833 = vunpack.c.l.b16 %v201
    %v2834 = vunpack.c.h.b16 %v201
    %v2835 = vunpack.c.l.b16 %v202
    %v2836 = vunpack.c.h.b16 %v202
    %v2837 = vunpack.c.l.b16 %v203
    %v2838 = vunpack.c.h.b16 %v203
    %v2839 = vunpack.c.l.b16 %v204
    %v2840 = vunpack.c.h.b16 %v204
    %v2841 = vunpack.c.l.b16 %v205
    %v2842 = vunpack.c.h.b16 %v205
    %v2843 = vunpack.c.l.b16 %v206
    %v2844 = vunpack.c.h.b16 %v206
    %v2845 = vunpack.c.l.b16 %v207
    %v2846 = vunpack.c.h.b16 %v207
    %v2847 = vunpack.c.l.b16 %v208
    %v2848 = vunpack.c.h.b16 %v208
    %v2849 = vunpack.c.l.b16 %v209
    %v2850 = vunpack.c.h.b16 %v209
    %v2851 = vunpack.c.l.b16 %v210
    %v2852 = vunpack.c.h.b16 %v210
    %v2853 = vunpack.c.l.b16 %v211
    %v2854 = vunpack.c.h.b16 %v211
    %v2855 = vunpack.c.l.b16 %v212
    %v2856 = vunpack.c.h.b16 %v212
    %v2857 = vunpack.c.l.b16 %v213
    %v2858 = vunpack.c.h.b16 %v213
    %v2859 = vunpack.c.l.b16 %v214
    %v2860 = vunpack.c.h.b16 %v214
    %v2861 = vunpack.c.l.b16 %v215
    %v2862 = vunpack.c.h.b16 %v215
    %v2863 = vunpack.c.l.b16 %v216
    %v2864 = vunpack.c.h.b16 %v216
    %v2865 = vunpack.c.l.b16 %v217
    %v2866 = vunpack.c.h.b16 %v217
    %v2867 = vunpack.c.l.b16 %v218
    %v2868 = vunpack.c.h.b16 %v218
    %v2869 = vunpack.c.l.b16 %v219
    %v2870 = vunpack.c.h.b16 %v219
    %v2871 = vunpack.c.l.b16 %v220
    %v2872 = vunpack.c.h.b16 %v220
    %v2873 = vunpack.c.l.b16 %v221
    %v2874 = vunpack.c.h.b16 %v221
    %v2875 = vunpack.c.l.b16 %v222
    %v2876 = vunpack.c.h.b16 %v222
    %v2877 = vunpack.c.l.b16 %v223
    %v2878 = vunpack.c.h.b16 %v223
    %v2879 = vunpack.c.l.b16 %v224
    %v2880 = vunpack.c.h.b16 %v224
    %v2881 = vunpack.c.l.b16 %v225
    %v2882 = vunpack.c.h.b16 %v225
    %v2883 = vunpack.c.l.b16 %v226
    %v2884 = vunpack.c.h.b16 %v226
    %v2885 = vunpack.c.l.b16 %v227
    %v2886 = vunpack.c.h.b16 %v227
    %v2887 = vunpack.c.l.b16 %v228
    %v2888 = vunpack.c.h.b16 %v228
    %v2889 = vunpack.c.l.b16 %v229
    %v2890 = vunpack.c.h.b16 %v229
    %v2891 = vunpack.c.l.b16 %v230
    %v2892 = vunpack.c.h.b16 %v230
    %v2893 = vunpack.c.l.b16 %v231
    %v2894 = vunpack.c.h.b16 %v231
    %v2895 = vunpack.c.l.b16 %v232
    %v2896 = vunpack.c.h.b16 %v232
    %v2897 = vunpack.c.l.b16 %v233
    %v2898 = vunpack.c.h.b16 %v233
    %v2899 = vunpack.c.l.b16 %v234
    %v2900 = vunpack.c.h.b16 %v234
    %v2901 = vunpack.c.l.b16 %v235
    %v2902 = vunpack.c.h.b16 %v235
    %v2903 = vunpack.c.l.b16 %v236
    %v2904 = vunpack.c.h.b16 %v236
    %v2905 = vunpack.c.l.b16 %v237
    %v2906 = vunpack.c.h.b16 %v237
    %v2907 = vunpack.c.l.b16 %v238
    %v2908 = vunpack.c.h.b16 %v238
    %v2909 = vunpack.c.l.b16 %v239
    %v2910 = vunpack.c.h.b16 %v239
    %v2911 = vunpack.c.l.b16 %v240
    %v2912 = vunpack.c.h.b16 %v240
    %v2913 = vunpack.c.l.b16 %v241
    %v2914 = vunpack.c.h.b16 %v241
    %v2915 = vunpack.c.l.b16 %v242
    %v2916 = vunpack.c.h.b16 %v242
    %v2917 = vunpack.c.l.b16 %v243
    %v2918 = vunpack.c.h.b16 %v243
    %v2919 = vunpack.c.l.b16 %v244
    %v2920 = vunpack.c.h.b16 %v244
    %v2921 = vunpack.c.l.b16 %v245
    %v2922 = vunpack.c.h.b16 %v245
    %v2923 = vunpack.c.l.b16 %v246
    %v2924 = vunpack.c.h.b16 %v246
    %v2925 = vunpack.c.l.b16 %v247
    %v2926 = vunpack.c.h.b16 %v247
    %v2927 = vunpack.c.l.b16 %v248
    %v2928 = vunpack.c.h.b16 %v248
    %v2929 = vunpack.c.l.b16 %v249
    %v2930 = vunpack.c.h.b16 %v249
    %v2931 = vunpack.c.l.b16 %v250
    %v2932 = vunpack.c.h.b16 %v250
    %v2933 = vunpack.c.l.b16 %v251
    %v2934 = vunpack.c.h.b16 %v251
    %v2935 = vunpack.c.l.b16 %v252
    %v2936 = vunpack.c.h.b16 %v252
    %v2937 = vunpack.c.l.b16 %v253
    %v2938 = vunpack.c.h.b16 %v253
    %v2939 = vunpack.c.l.b16 %v254
    %v2940 = vunpack.c.h.b16 %v254
    %v2941 = vunpack.c.l.b16 %v255
    %v2942 = vunpack.c.h.b16 %v255
    %v2943 = vunpack.c.l.b16 %v256
    %v2944 = vunpack.c.h.b16 %v256
    %v2945 = vunpack.c.l.b16 %v257
    %v2946 = vunpack.c.h.b16 %v257
    %v2947 = vunpack.c.l.b16 %v258
    %v2948 = vunpack.c.h.b16 %v258
    %v2949 = vunpack.c.l.b16 %v259
    %v2950 = vunpack.c.h.b16 %v259
    %v2951 = vunpack.c.l.b16 %v260
    %v2952 = vunpack.c.h.b16 %v260
    %v2953 = vunpack.c.l.b16 %v261
    %v2954 = vunpack.c.h.b16 %v261
    %v2955 = vunpack.c.l.b16 %v262
    %v2956 = vunpack.c.h.b16 %v262
    %v2957 = vunpack.c.l.b16 %v263
    %v2958 = vunpack.c.h.b16 %v263
    %v2959 = vunpack.c.l.b16 %v264
    %v2960 = vunpack.c.h.b16 %v264
    %v2961 = vunpack.c.l.b16 %v265
    %v2962 = vunpack.c.h.b16 %v265
    %v2963 = vunpack.c.l.b16 %v266
    %v2964 = vunpack.c.h.b16 %v266
    %v2965 = vunpack.c.l.b16 %v267
    %v2966 = vunpack.c.h.b16 %v267
    %v2967 = vunpack.c.l.b16 %v268
    %v2968 = vunpack.c.h.b16 %v268
    %v2969 = vunpack.c.l.b16 %v269
    %v2970 = vunpack.c.h.b16 %v269
    %v2971 = vunpack.c.l.b16 %v270
    %v2972 = vunpack.c.h.b16 %v270
    %v2973 = vunpack.c.l.b16 %v271
    %v2974 = vunpack.c.h.b16 %v271
    %v2975 = vunpack.c.l.b16 %v272
    %v2976 = vunpack.c.h.b16 %v272
    %v2977 = vunpack.c.l.b16 %v273
    %v2978 = vunpack.c.h.b16 %v273
    %v2979 = vunpack.c.l.b16 %v274
    %v2980 = vunpack.c.h.b16 %v274
    %v2981 = vunpack.c.l.b16 %v275
    %v2982 = vunpack.c.h.b16 %v275
    %v2983 = vunpack.c.l.b16 %v276
    %v2984 = vunpack.c.h.b16 %v276
    %v2985 = vunpack.c.l.b16 %v277
    %v2986 = vunpack.c.h.b16 %v277
    %v2987 = vunpack.c.l.b16 %v278
    %v2988 = vunpack.c.h.b16 %v278
    %v2989 = vunpack.c.l.b16 %v279
    %v2990 = vunpack.c.h.b16 %v279
    %v2991 = vunpack.c.l.b16 %v280
    %v2992 = vunpack.c.h.b16 %v280
    %v2993 = vunpack.c.l.b16 %v281
    %v2994 = vunpack.c.h.b16 %v281
    %v2995 = vunpack.c.l.b16 %v282
    %v2996 = vunpack.c.h.b16 %v282
    %v2997 = vunpack.c.l.b16 %v283
    %v2998 = vunpack.c.h.b16 %v283
    %v2999 = vunpack.c.l.b16 %v284
    %v3000 = vunpack.c.h.b16 %v284
    %v3001 = vunpack.c.l.b16 %v285
    %v3002 = vunpack.c.h.b16 %v285
    %v3003 = vunpack.c.l.b16 %v286
    %v3004 = vunpack.c.h.b16 %v286
    %v3005 = vunpack.c.l.b16 %v287
    %v3006 = vunpack.c.h.b16 %v287
    %v3007 = vunpack.c.l.b16 %v288
    %v3008 = vunpack.c.h.b16 %v288
    %v3009 = vunpack.c.l.b16 %v289
    %v3010 = vunpack.c.h.b16 %v289
    %v3011 = vunpack.c.l.b16 %v290
    %v3012 = vunpack.c.h.b16 %v290
    %v3013 = vunpack.c.l.b16 %v291
    %v3014 = vunpack.c.h.b16 %v291
    %v3015 = vunpack.c.l.b16 %v292
    %v3016 = vunpack.c.h.b16 %v292
    %v3017 = vunpack.c.l.b16 %v293
    %v3018 = vunpack.c.h.b16 %v293
    %v3019 = vunpack.c.l.b16 %v294
    %v3020 = vunpack.c.h.b16 %v294
    %v3021 = vunpack.c.l.b16 %v295
    %v3022 = vunpack.c.h.b16 %v295
    %v3023 = vunpack.c.l.b16 %v296
    %v3024 = vunpack.c.h.b16 %v296
    %v3025 = vpack.c.b16 %v2835, %v2833
    %v3026 = vpack.c.b16 %v2836, %v2834
    %v3027 = vpack.c.b16 %v2839, %v2837
    %v3028 = vpack.c.b16 %v2840, %v2838
    %v3029 = vpack.c.b16 %v2843, %v2841
    %v3030 = vpack.c.b16 %v2844, %v2842
    %v3031 = vpack.c.b16 %v2847, %v2845
    %v3032 = vpack.c.b16 %v2848, %v2846
    %v3033 = vpack.c.b16 %v2851, %v2849
    %v3034 = vpack.c.b16 %v2852, %v2850
    %v3035 = vpack.c.b16 %v2855, %v2853
    %v3036 = vpack.c.b16 %v2856, %v2854
    %v3037 = vpack.c.b16 %v2859, %v2857
    %v3038 = vpack.c.b16 %v2860, %v2858
    %v3039 = vpack.c.b16 %v2863, %v2861
    %v3040 = vpack.c.b16 %v2864, %v2862
    %v3041 = vpack.c.b16 %v2867, %v2865
    %v3042 = vpack.c.b16 %v2868, %v2866
    %v3043 = vpack.c.b16 %v2871, %v2869
    %v3044 = vpack.c.b16 %v2872, %v2870
    %v3045 = vpack.c.b16 %v2875, %v2873
    %v3046 = vpack.c.b16 %v2876, %v2874
    %v3047 = vpack.c.b16 %v2879, %v2877
    %v3048 = vpack.c.b16 %v2880, %v2878
    %v3049 = vpack.c.b16 %v2883, %v2881
    %v3050 = vpack.c.b16 %v2884, %v2882
    %v3051 = vpack.c.b16 %v2887, %v2885
    %v3052 = vpack.c.b16 %v2888, %v2886
    %v3053 = vpack.c.b16 %v2891, %v2889
    %v3054 = vpack.c.b16 %v2892, %v2890
    %v3055 = vpack.c.b16 %v2895, %v2893
    %v3056 = vpack.c.b16 %v2896, %v2894
    %v3057 = vpack.c.b16 %v2899, %v2897
    %v3058 = vpack.c.b16 %v2900, %v2898
    %v3059 = vpack.c.b16 %v2903, %v2901
    %v3060 = vpack.c.b16 %v2904, %v2902
    %v3061 = vpack.c.b16 %v2907, %v2905
    %v3062 = vpack.c.b16 %v2908, %v2906
    %v3063 = vpack.c.b16 %v2911, %v2909
    %v3064 = vpack.c.b16 %v2912, %v2910
    %v3065 = vpack.c.b16 %v2915, %v2913
    %v3066 = vpack.c.b16 %v2916, %v2914
    %v3067 = vpack.c.b16 %v2919, %v2917
    %v3068 = vpack.c.b16 %v2920, %v2918
    %v3069 = vpack.c.b16 %v2923, %v2921
    %v3070 = vpack.c.b16 %v2924, %v2922
    %v3071 = vpack.c.b16 %v2927, %v2925
    %v3072 = vpack.c.b16 %v2928, %v2926
    %v3073 = vpack.c.b16 %v2931, %v2929
    %v3074 = vpack.c.b16 %v2932, %v2930
    %v3075 = vpack.c.b16 %v2935, %v2933
    %v3076 = vpack.c.b16 %v2936, %v2934
    %v3077 = vpack.c.b16 %v2939, %v2937
    %v3078 = vpack.c.b16 %v2940, %v2938
    %v3079 = vpack.c.b16 %v2943, %v2941
    %v3080 = vpack.c.b16 %v2944, %v2942
    %v3081 = vpack.c.b16 %v2947, %v2945
    %v3082 = vpack.c.b16 %v2948, %v2946
    %v3083 = vpack.c.b16 %v2951, %v2949
    %v3084 = vpack.c.b16 %v2952, %v2950
    %v3085 = vpack.c.b16 %v2955, %v2953
    %v3086 = vpack.c.b16 %v2956, %v2954
    %v3087 = vpack.c.b16 %v2959, %v2957
    %v3088 = vpack.c.b16 %v2960, %v2958
    %v3089 = vpack.c.b16 %v2963, %v2961
    %v3090 = vpack.c.b16 %v2964, %v2962
    %v3091 = vpack.c.b16 %v2967, %v2965
    %v3092 = vpack.c.b16 %v2968, %v2966
    %v3093 = vpack.c.b16 %v2971, %v2969
    %v3094 = vpack.c.b16 %v2972, %v2970
    %v3095 = vpack.c.b16 %v2975, %v2973
    %v3096 = vpack.c.b16 %v2976, %v2974
    %v3097 = vpack.c.b16 %v2979, %v2977
    %v3098 = vpack.c.b16 %v2980, %v2978
    %v3099 = vpack.c.b16 %v2983, %v2981
    %v3100 = vpack.c.b16 %v2984, %v2982
    %v3101 = vpack.c.b16 %v2987, %v2985
    %v3102 = vpack.c.b16 %v2988, %v2986
    %v3103 = vpack.c.b16 %v2991, %v2989
    %v3104 = vpack.c.b16 %v2992, %v2990
    %v3105 = vpack.c.b16 %v2995, %v2993
    %v3106 = vpack.c.b16 %v2996, %v2994
    %v3107 = vpack.c.b16 %v2999, %v2997
    %v3108 = vpack.c.b16 %v3000, %v2998
    %v3109 = vpack.c.b16 %v3003, %v3001
    %v3110 = vpack.c.b16 %v3004, %v3002
    %v3111 = vpack.c.b16 %v3007, %v3005
    %v3112 = vpack.c.b16 %v3008, %v3006
    %v3113 = vpack.c.b16 %v3011, %v3009
    %v3114 = vpack.c.b16 %v3012, %v3010
    %v3115 = vpack.c.b16 %v3015, %v3013
    %v3116 = vpack.c.b16 %v3016, %v3014
    %v3117 = vpack.c.b16 %v3019, %v3017
    %v3118 = vpack.c.b16 %v3020, %v3018
    %v3119 = vpack.c.b16 %v3023, %v3021
    %v3120 = vpack.c.b16 %v3024, %v3022
    %3217 = vmatprep.subr.bf16.mxu0 %v3026
    %3218 = vmatpush1.bf16.msra.mxu0 %v3025
    %3219 = vmatprep.subr.bf16.mxu0 %v3028
    %3220 = vmatpush1.bf16.msra.mxu0 %v3027
    %3221 = vmatprep.subr.bf16.mxu0 %v3030
    %3222 = vmatpush1.bf16.msra.mxu0 %v3029
    %3223 = vmatprep.subr.bf16.mxu0 %v3032
    %3224 = vmatpush1.bf16.msra.mxu0 %v3031
    %3225 = vmatprep.subr.bf16.mxu0 %v3034
    %3226 = vmatpush1.bf16.msra.mxu0 %v3033
    %3227 = vmatprep.subr.bf16.mxu0 %v3036
    %3228 = vmatpush1.bf16.msra.mxu0 %v3035
    %3229 = vmatprep.subr.bf16.mxu0 %v3038
    %3230 = vmatpush1.bf16.msra.mxu0 %v3037
    %3231 = vmatprep.subr.bf16.mxu0 %v3040
    %3232 = vmatpush1.bf16.msra.mxu0 %v3039
    %3233 = vmatprep.subr.bf16.mxu0 %v3042
    %3234 = vmatpush1.bf16.msra.mxu0 %v3041
    %3235 = vmatprep.subr.bf16.mxu0 %v3044
    %3236 = vmatpush1.bf16.msra.mxu0 %v3043
    %3237 = vmatprep.subr.bf16.mxu0 %v3046
    %3238 = vmatpush1.bf16.msra.mxu0 %v3045
    %3239 = vmatprep.subr.bf16.mxu0 %v3048
    %3240 = vmatpush1.bf16.msra.mxu0 %v3047
    %3241 = vmatprep.subr.bf16.mxu0 %v3050
    %3242 = vmatpush1.bf16.msra.mxu0 %v3049
    %3243 = vmatprep.subr.bf16.mxu0 %v3052
    %3244 = vmatpush1.bf16.msra.mxu0 %v3051
    %3245 = vmatprep.subr.bf16.mxu0 %v3054
    %3246 = vmatpush1.bf16.msra.mxu0 %v3053
    %3247 = vmatprep.subr.bf16.mxu0 %v3056
    %3248 = vmatpush1.bf16.msra.mxu0 %v3055
    %3249 = vmatprep.mubr.bf16.mxu0 %v2721
    %3250 = vmatmul.mubr.bf16.gmra.mrb[0].mxu0 %v2720
    %v3251 = vpop.f32.mrb[0].mxu0
    %v3252 = vadd.f32 %v2730, %v3251
    %v3253 = vpop.f32.mrb[0].mxu0
    %v3254 = vadd.f32 %v2734, %v3253
    %v3255 = vpop.f32.mrb[0].mxu0
    %v3256 = vpop.f32.mrb[0].mxu0
    %3257 = vdwg.mxu0
    %3258 = vmatprep.subr.bf16.mxu0 %v3058
    %3259 = vmatpush1.bf16.msra.mxu0 %v3057
    %3260 = vmatprep.subr.bf16.mxu0 %v3060
    %3261 = vmatpush1.bf16.msra.mxu0 %v3059
    %3262 = vmatprep.subr.bf16.mxu0 %v3062
    %3263 = vmatpush1.bf16.msra.mxu0 %v3061
    %3264 = vmatprep.subr.bf16.mxu0 %v3064
    %3265 = vmatpush1.bf16.msra.mxu0 %v3063
    %3266 = vmatprep.subr.bf16.mxu0 %v3066
    %3267 = vmatpush1.bf16.msra.mxu0 %v3065
    %3268 = vmatprep.subr.bf16.mxu0 %v3068
    %3269 = vmatpush1.bf16.msra.mxu0 %v3067
    %3270 = vmatprep.subr.bf16.mxu0 %v3070
    %3271 = vmatpush1.bf16.msra.mxu0 %v3069
    %3272 = vmatprep.subr.bf16.mxu0 %v3072
    %3273 = vmatpush1.bf16.msra.mxu0 %v3071
    %3274 = vmatprep.subr.bf16.mxu0 %v3074
    %3275 = vmatpush1.bf16.msra.mxu0 %v3073
    %3276 = vmatprep.subr.bf16.mxu0 %v3076
    %3277 = vmatpush1.bf16.msra.mxu0 %v3075
    %3278 = vmatprep.subr.bf16.mxu0 %v3078
    %3279 = vmatpush1.bf16.msra.mxu0 %v3077
    %3280 = vmatprep.subr.bf16.mxu0 %v3080
    %3281 = vmatpush1.bf16.msra.mxu0 %v3079
    %3282 = vmatprep.subr.bf16.mxu0 %v3082
    %3283 = vmatpush1.bf16.msra.mxu0 %v3081
    %3284 = vmatprep.subr.bf16.mxu0 %v3084
    %3285 = vmatpush1.bf16.msra.mxu0 %v3083
    %3286 = vmatprep.subr.bf16.mxu0 %v3086
    %3287 = vmatpush1.bf16.msra.mxu0 %v3085
    %3288 = vmatprep.subr.bf16.mxu0 %v3088
    %3289 = vmatpush1.bf16.msra.mxu0 %v3087
    %3290 = vmatprep.mubr.bf16.mxu0 %v2723
    %3291 = vmatmul.mubr.bf16.gmra.mrb[0].mxu0 %v2722
    %v3292 = vpop.f32.mrb[0].mxu0
    %v3293 = vadd.f32 %v3252, %v3292
    %v3294 = vpop.f32.mrb[0].mxu0
    %v3295 = vadd.f32 %v3254, %v3294
    %v3296 = vpop.f32.mrb[0].mxu0
    %v3297 = vpop.f32.mrb[0].mxu0
    %3298 = vdwg.mxu0
    %3299 = vmatprep.subr.bf16.mxu0 %v3090
    %3300 = vmatpush1.bf16.msra.mxu0 %v3089
    %3301 = vmatprep.subr.bf16.mxu0 %v3092
    %3302 = vmatpush1.bf16.msra.mxu0 %v3091
    %3303 = vmatprep.subr.bf16.mxu0 %v3094
    %3304 = vmatpush1.bf16.msra.mxu0 %v3093
    %3305 = vmatprep.subr.bf16.mxu0 %v3096
    %3306 = vmatpush1.bf16.msra.mxu0 %v3095
    %3307 = vmatprep.subr.bf16.mxu0 %v3098
    %3308 = vmatpush1.bf16.msra.mxu0 %v3097
    %3309 = vmatprep.subr.bf16.mxu0 %v3100
    %3310 = vmatpush1.bf16.msra.mxu0 %v3099
    %3311 = vmatprep.subr.bf16.mxu0 %v3102
    %3312 = vmatpush1.bf16.msra.mxu0 %v3101
    %3313 = vmatprep.subr.bf16.mxu0 %v3104
    %3314 = vmatpush1.bf16.msra.mxu0 %v3103
    %3315 = vmatprep.subr.bf16.mxu0 %v3106
    %3316 = vmatpush1.bf16.msra.mxu0 %v3105
    %3317 = vmatprep.subr.bf16.mxu0 %v3108
    %3318 = vmatpush1.bf16.msra.mxu0 %v3107
    %3319 = vmatprep.subr.bf16.mxu0 %v3110
    %3320 = vmatpush1.bf16.msra.mxu0 %v3109
    %3321 = vmatprep.subr.bf16.mxu0 %v3112
    %3322 = vmatpush1.bf16.msra.mxu0 %v3111
    %3323 = vmatprep.subr.bf16.mxu0 %v3114
    %3324 = vmatpush1.bf16.msra.mxu0 %v3113
    %3325 = vmatprep.subr.bf16.mxu0 %v3116
    %3326 = vmatpush1.bf16.msra.mxu0 %v3115
    %3327 = vmatprep.subr.bf16.mxu0 %v3118
    %3328 = vmatpush1.bf16.msra.mxu0 %v3117
    %3329 = vmatprep.subr.bf16.mxu0 %v3120
    %3330 = vmatpush1.bf16.msra.mxu0 %v3119
    %3331 = vmatprep.mubr.bf16.mxu0 %v2725
    %3332 = vmatmul.mubr.bf16.gmra.mrb[0].mxu0 %v2724
    %v3333 = vpop.f32.mrb[0].mxu0
    %v3334 = vadd.f32 %v3293, %v3333
    %v3335 = vpop.f32.mrb[0].mxu0
    %v3336 = vadd.f32 %v3295, %v3335
    %v3337 = vpop.f32.mrb[0].mxu0
    %v3338 = vpop.f32.mrb[0].mxu0
    %3339 = vdwg.mxu0
    %v3340 = vmax.f32 %v3336, -4.0
    %v3341 = vmin.f32 %v3340, 15.0
    %v3342 = vmul.f32 %v3341, 1.442695
    %v3343 = vpow.pop %v3342
    %v3344 = vmul.f32 %v3343, %v104
    %v3345 = vadd.f32 %v3334, %v3344
    %v3346 = vpack.c.bf16 %v3345, %v3345
    %vm3347 = vcmask 97280
    %v3349 = vsel %vm3347, %v3346, 0
    %vm3351 = vcmask 1045504
    %v3353 = vsel %vm3351, %v177, 0
    %v3356 = vsel %vm3351, %v178, 0
    %v3359 = vsel %vm3351, %v179, 0
    %v3362 = vsel %vm3351, %v180, 0
    %v3365 = vsel %vm3351, %v181, 0
    %v3368 = vsel %vm3351, %v182, 0
    %3370 = vmatprep.subr.bf16.mxu0 %v3356
    %3371 = vmatpush1.bf16.msra.mxu0 %v3353
    %3372 = vmatprep.subr.bf16.mxu0 0
    %3373 = vmatpush1.bf16.msra.mxu0 0
    %3374 = vmatprep.subr.bf16.mxu0 0
    %3375 = vmatpush1.bf16.msra.mxu0 0
    %3376 = vmatprep.subr.bf16.mxu0 0
    %3377 = vmatpush1.bf16.msra.mxu0 0
    %3378 = vmatprep.subr.bf16.mxu0 0
    %3379 = vmatpush1.bf16.msra.mxu0 0
    %3380 = vmatprep.subr.bf16.mxu0 0
    %3381 = vmatpush1.bf16.msra.mxu0 0
    %3382 = vmatprep.subr.bf16.mxu0 0
    %3383 = vmatpush1.bf16.msra.mxu0 0
    %3384 = vmatprep.subr.bf16.mxu0 0
    %3385 = vmatpush1.bf16.msra.mxu0 0
    %3386 = vmatprep.subr.bf16.mxu0 0
    %3387 = vmatpush1.bf16.msra.mxu0 0
    %3388 = vmatprep.subr.bf16.mxu0 0
    %3389 = vmatpush1.bf16.msra.mxu0 0
    %3390 = vmatprep.subr.bf16.mxu0 0
    %3391 = vmatpush1.bf16.msra.mxu0 0
    %3392 = vmatprep.subr.bf16.mxu0 0
    %3393 = vmatpush1.bf16.msra.mxu0 0
    %3394 = vmatprep.subr.bf16.mxu0 0
    %3395 = vmatpush1.bf16.msra.mxu0 0
    %3396 = vmatprep.subr.bf16.mxu0 0
    %3397 = vmatpush1.bf16.msra.mxu0 0
    %3398 = vmatprep.subr.bf16.mxu0 0
    %3399 = vmatpush1.bf16.msra.mxu0 0
    %3400 = vmatprep.subr.bf16.mxu0 0
    %3401 = vmatpush1.bf16.msra.mxu0 0
    %3402 = vmatprep.mubr.bf16.mxu0 0
    %3403 = vmatmul.mubr.bf16.gmra.mrb[0].mxu0 %v3349
    %v3404 = vpop.f32.mrb[0].mxu0
    %v3405 = vadd.f32 0.0, %v3404
    %v3406 = vpop.f32.mrb[0].mxu0
    %v3407 = vadd.f32 0.0, %v3406
    %v3408 = vpop.f32.mrb[0].mxu0
    %v3409 = vpop.f32.mrb[0].mxu0
    %3410 = vdwg.mxu0
    %3411 = vmatprep.subr.bf16.mxu0 %v3362
    %3412 = vmatpush1.bf16.msra.mxu0 %v3359
    %3413 = vmatprep.subr.bf16.mxu0 0
    %3414 = vmatpush1.bf16.msra.mxu0 0
    %3415 = vmatprep.subr.bf16.mxu0 0
    %3416 = vmatpush1.bf16.msra.mxu0 0
    %3417 = vmatprep.subr.bf16.mxu0 0
    %3418 = vmatpush1.bf16.msra.mxu0 0
    %3419 = vmatprep.subr.bf16.mxu0 0
    %3420 = vmatpush1.bf16.msra.mxu0 0
    %3421 = vmatprep.subr.bf16.mxu0 0
    %3422 = vmatpush1.bf16.msra.mxu0 0
    %3423 = vmatprep.subr.bf16.mxu0 0
    %3424 = vmatpush1.bf16.msra.mxu0 0
    %3425 = vmatprep.subr.bf16.mxu0 0
    %3426 = vmatpush1.bf16.msra.mxu0 0
    %3427 = vmatprep.subr.bf16.mxu0 0
    %3428 = vmatpush1.bf16.msra.mxu0 0
    %3429 = vmatprep.subr.bf16.mxu0 0
    %3430 = vmatpush1.bf16.msra.mxu0 0
    %3431 = vmatprep.subr.bf16.mxu0 0
    %3432 = vmatpush1.bf16.msra.mxu0 0
    %3433 = vmatprep.subr.bf16.mxu0 0
    %3434 = vmatpush1.bf16.msra.mxu0 0
    %3435 = vmatprep.subr.bf16.mxu0 0
    %3436 = vmatpush1.bf16.msra.mxu0 0
    %3437 = vmatprep.subr.bf16.mxu0 0
    %3438 = vmatpush1.bf16.msra.mxu0 0
    %3439 = vmatprep.subr.bf16.mxu0 0
    %3440 = vmatpush1.bf16.msra.mxu0 0
    %3441 = vmatprep.subr.bf16.mxu0 0
    %3442 = vmatpush1.bf16.msra.mxu0 0
    %3443 = vmatprep.mubr.bf16.mxu0 0
    %3444 = vmatmul.mubr.bf16.gmra.mrb[0].mxu0 %v3349
    %v3445 = vpop.f32.mrb[0].mxu0
    %v3446 = vadd.f32 0.0, %v3445
    %v3447 = vpop.f32.mrb[0].mxu0
    %v3448 = vadd.f32 0.0, %v3447
    %v3449 = vpop.f32.mrb[0].mxu0
    %v3450 = vpop.f32.mrb[0].mxu0
    %3451 = vdwg.mxu0
    %3452 = vmatprep.subr.bf16.mxu0 %v3368
    %3453 = vmatpush1.bf16.msra.mxu0 %v3365
    %3454 = vmatprep.subr.bf16.mxu0 0
    %3455 = vmatpush1.bf16.msra.mxu0 0
    %3456 = vmatprep.subr.bf16.mxu0 0
    %3457 = vmatpush1.bf16.msra.mxu0 0
    %3458 = vmatprep.subr.bf16.mxu0 0
    %3459 = vmatpush1.bf16.msra.mxu0 0
    %3460 = vmatprep.subr.bf16.mxu0 0
    %3461 = vmatpush1.bf16.msra.mxu0 0
    %3462 = vmatprep.subr.bf16.mxu0 0
    %3463 = vmatpush1.bf16.msra.mxu0 0
    %3464 = vmatprep.subr.bf16.mxu0 0
    %3465 = vmatpush1.bf16.msra.mxu0 0
    %3466 = vmatprep.subr.bf16.mxu0 0
    %3467 = vmatpush1.bf16.msra.mxu0 0
    %3468 = vmatprep.subr.bf16.mxu0 0
    %3469 = vmatpush1.bf16.msra.mxu0 0
    %3470 = vmatprep.subr.bf16.mxu0 0
    %3471 = vmatpush1.bf16.msra.mxu0 0
    %3472 = vmatprep.subr.bf16.mxu0 0
    %3473 = vmatpush1.bf16.msra.mxu0 0
    %3474 = vmatprep.subr.bf16.mxu0 0
    %3475 = vmatpush1.bf16.msra.mxu0 0
    %3476 = vmatprep.subr.bf16.mxu0 0
    %3477 = vmatpush1.bf16.msra.mxu0 0
    %3478 = vmatprep.subr.bf16.mxu0 0
    %3479 = vmatpush1.bf16.msra.mxu0 0
    %3480 = vmatprep.subr.bf16.mxu0 0
    %3481 = vmatpush1.bf16.msra.mxu0 0
    %3482 = vmatprep.subr.bf16.mxu0 0
    %3483 = vmatpush1.bf16.msra.mxu0 0
    %3484 = vmatprep.mubr.bf16.mxu0 0
    %3485 = vmatmul.mubr.bf16.gmra.mrb[0].mxu0 %v3349
    %v3486 = vpop.f32.mrb[0].mxu0
    %v3487 = vadd.f32 0.0, %v3486
    %v3488 = vpop.f32.mrb[0].mxu0
    %v3489 = vadd.f32 0.0, %v3488
    %v3490 = vpop.f32.mrb[0].mxu0
    %v3491 = vpop.f32.mrb[0].mxu0
    %3492 = vdwg.mxu0
    %vm3493 = vcmask 138240
    %v3494 = vsel %vm3493, %v393, 0
    %vm3496 = vcmask 1040384
    %v3497 = vsel 0, 4294967295, 65535
    %v3498 = vsel %vm3496, %v3497, 0
    %v3500 = vand.u32 %v159, %v3498
    %v3503 = vand.u32 %v160, %v3498
    %v3506 = vand.u32 %v161, %v3498
    %v3509 = vand.u32 %v162, %v3498
    %v3512 = vand.u32 %v163, %v3498
    %v3515 = vand.u32 %v164, %v3498
    %3517 = vmatprep.subr.bf16.mxu0 %v154
    %3518 = vmatpush1.bf16.msra.mxu0 %v153
    %3519 = vmatprep.subr.bf16.mxu0 %v3503
    %3520 = vmatpush1.bf16.msra.mxu0 %v3500
    %3521 = vmatprep.subr.bf16.mxu0 0
    %3522 = vmatpush1.bf16.msra.mxu0 0
    %3523 = vmatprep.subr.bf16.mxu0 0
    %3524 = vmatpush1.bf16.msra.mxu0 0
    %3525 = vmatprep.subr.bf16.mxu0 0
    %3526 = vmatpush1.bf16.msra.mxu0 0
    %3527 = vmatprep.subr.bf16.mxu0 0
    %3528 = vmatpush1.bf16.msra.mxu0 0
    %3529 = vmatprep.subr.bf16.mxu0 0
    %3530 = vmatpush1.bf16.msra.mxu0 0
    %3531 = vmatprep.subr.bf16.mxu0 0
    %3532 = vmatpush1.bf16.msra.mxu0 0
    %3533 = vmatprep.subr.bf16.mxu0 0
    %3534 = vmatpush1.bf16.msra.mxu0 0
    %3535 = vmatprep.subr.bf16.mxu0 0
    %3536 = vmatpush1.bf16.msra.mxu0 0
    %3537 = vmatprep.subr.bf16.mxu0 0
    %3538 = vmatpush1.bf16.msra.mxu0 0
    %3539 = vmatprep.subr.bf16.mxu0 0
    %3540 = vmatpush1.bf16.msra.mxu0 0
    %3541 = vmatprep.subr.bf16.mxu0 0
    %3542 = vmatpush1.bf16.msra.mxu0 0
    %3543 = vmatprep.subr.bf16.mxu0 0
    %3544 = vmatpush1.bf16.msra.mxu0 0
    %3545 = vmatprep.subr.bf16.mxu0 0
    %3546 = vmatpush1.bf16.msra.mxu0 0
    %3547 = vmatprep.subr.bf16.mxu0 0
    %3548 = vmatpush1.bf16.msra.mxu0 0
    %3549 = vmatprep.mubr.bf16.mxu0 0
    %3550 = vmatmul.mubr.bf16.gmra.mrb[0].mxu0 %v3494
    %v3551 = vpop.f32.mrb[0].mxu0
    %v3552 = vadd.f32 %v3405, %v3551
    %v3553 = vpop.f32.mrb[0].mxu0
    %v3554 = vadd.f32 %v3407, %v3553
    %v3555 = vpop.f32.mrb[0].mxu0
    %v3556 = vpop.f32.mrb[0].mxu0
    %3557 = vdwg.mxu0
    %3558 = vmatprep.subr.bf16.mxu0 %v156
    %3559 = vmatpush1.bf16.msra.mxu0 %v155
    %3560 = vmatprep.subr.bf16.mxu0 %v3509
    %3561 = vmatpush1.bf16.msra.mxu0 %v3506
    %3562 = vmatprep.subr.bf16.mxu0 0
    %3563 = vmatpush1.bf16.msra.mxu0 0
    %3564 = vmatprep.subr.bf16.mxu0 0
    %3565 = vmatpush1.bf16.msra.mxu0 0
    %3566 = vmatprep.subr.bf16.mxu0 0
    %3567 = vmatpush1.bf16.msra.mxu0 0
    %3568 = vmatprep.subr.bf16.mxu0 0
    %3569 = vmatpush1.bf16.msra.mxu0 0
    %3570 = vmatprep.subr.bf16.mxu0 0
    %3571 = vmatpush1.bf16.msra.mxu0 0
    %3572 = vmatprep.subr.bf16.mxu0 0
    %3573 = vmatpush1.bf16.msra.mxu0 0
    %3574 = vmatprep.subr.bf16.mxu0 0
    %3575 = vmatpush1.bf16.msra.mxu0 0
    %3576 = vmatprep.subr.bf16.mxu0 0
    %3577 = vmatpush1.bf16.msra.mxu0 0
    %3578 = vmatprep.subr.bf16.mxu0 0
    %3579 = vmatpush1.bf16.msra.mxu0 0
    %3580 = vmatprep.subr.bf16.mxu0 0
    %3581 = vmatpush1.bf16.msra.mxu0 0
    %3582 = vmatprep.subr.bf16.mxu0 0
    %3583 = vmatpush1.bf16.msra.mxu0 0
    %3584 = vmatprep.subr.bf16.mxu0 0
    %3585 = vmatpush1.bf16.msra.mxu0 0
    %3586 = vmatprep.subr.bf16.mxu0 0
    %3587 = vmatpush1.bf16.msra.mxu0 0
    %3588 = vmatprep.subr.bf16.mxu0 0
    %3589 = vmatpush1.bf16.msra.mxu0 0
    %3590 = vmatprep.mubr.bf16.mxu0 0
    %3591 = vmatmul.mubr.bf16.gmra.mrb[0].mxu0 %v3494
    %v3592 = vpop.f32.mrb[0].mxu0
    %v3593 = vadd.f32 %v3446, %v3592
    %v3594 = vpop.f32.mrb[0].mxu0
    %v3595 = vadd.f32 %v3448, %v3594
    %v3596 = vpop.f32.mrb[0].mxu0
    %v3597 = vpop.f32.mrb[0].mxu0
    %3598 = vdwg.mxu0
    %3599 = vmatprep.subr.bf16.mxu0 %v158
    %3600 = vmatpush1.bf16.msra.mxu0 %v157
    %3601 = vmatprep.subr.bf16.mxu0 %v3515
    %3602 = vmatpush1.bf16.msra.mxu0 %v3512
    %3603 = vmatprep.subr.bf16.mxu0 0
    %3604 = vmatpush1.bf16.msra.mxu0 0
    %3605 = vmatprep.subr.bf16.mxu0 0
    %3606 = vmatpush1.bf16.msra.mxu0 0
    %3607 = vmatprep.subr.bf16.mxu0 0
    %3608 = vmatpush1.bf16.msra.mxu0 0
    %3609 = vmatprep.subr.bf16.mxu0 0
    %3610 = vmatpush1.bf16.msra.mxu0 0
    %3611 = vmatprep.subr.bf16.mxu0 0
    %3612 = vmatpush1.bf16.msra.mxu0 0
    %3613 = vmatprep.subr.bf16.mxu0 0
    %3614 = vmatpush1.bf16.msra.mxu0 0
    %3615 = vmatprep.subr.bf16.mxu0 0
    %3616 = vmatpush1.bf16.msra.mxu0 0
    %3617 = vmatprep.subr.bf16.mxu0 0
    %3618 = vmatpush1.bf16.msra.mxu0 0
    %3619 = vmatprep.subr.bf16.mxu0 0
    %3620 = vmatpush1.bf16.msra.mxu0 0
    %3621 = vmatprep.subr.bf16.mxu0 0
    %3622 = vmatpush1.bf16.msra.mxu0 0
    %3623 = vmatprep.subr.bf16.mxu0 0
    %3624 = vmatpush1.bf16.msra.mxu0 0
    %3625 = vmatprep.subr.bf16.mxu0 0
    %3626 = vmatpush1.bf16.msra.mxu0 0
    %3627 = vmatprep.subr.bf16.mxu0 0
    %3628 = vmatpush1.bf16.msra.mxu0 0
    %3629 = vmatprep.subr.bf16.mxu0 0
    %3630 = vmatpush1.bf16.msra.mxu0 0
    %3631 = vmatprep.mubr.bf16.mxu0 0
    %3632 = vmatmul.mubr.bf16.gmra.mrb[0].mxu0 %v3494
    %v3633 = vpop.f32.mrb[0].mxu0
    %v3634 = vadd.f32 %v3487, %v3633
    %v3635 = vpop.f32.mrb[0].mxu0
    %v3636 = vadd.f32 %v3489, %v3635
    %v3637 = vpop.f32.mrb[0].mxu0
    %v3638 = vpop.f32.mrb[0].mxu0
    %3639 = vdwg.mxu0
    %v3641 = vlaneseq
    %v3642 = vshrl.u32 %v3641, 7
    %v3643 = vsub.s32 0, %v3642
    %v3644 = vrot.slane %v193, %v3643
    %v3645 = vlaneseq
    %v3646 = vshrl.u32 %v3645, 7
    %v3647 = vsub.s32 1, %v3646
    %v3648 = vrot.slane %v193, %v3647
    %v3649 = vlaneseq
    %v3650 = vshrl.u32 %v3649, 7
    %v3651 = vsub.s32 2, %v3650
    %v3652 = vrot.slane %v193, %v3651
    %v3653 = vlaneseq
    %v3654 = vshrl.u32 %v3653, 7
    %v3655 = vsub.s32 3, %v3654
    %v3656 = vrot.slane %v193, %v3655
    %v3657 = vlaneseq
    %v3658 = vshrl.u32 %v3657, 7
    %v3659 = vsub.s32 4, %v3658
    %v3660 = vrot.slane %v193, %v3659
    %v3661 = vlaneseq
    %v3662 = vshrl.u32 %v3661, 7
    %v3663 = vsub.s32 5, %v3662
    %v3664 = vrot.slane %v193, %v3663
    %v3671 = vadd.f32 %v3552, %v3644
    %v3672 = vadd.f32 %v3554, %v3648
    %v3673 = vadd.f32 %v3593, %v3652
    %v3674 = vadd.f32 %v3595, %v3656
    %v3675 = vadd.f32 %v3634, %v3660
    %v3676 = vadd.f32 %v3636, %v3664
    %v3677 = vmax.f32 %v3671, 0.0
    %v3678 = vmax.f32 %v3672, 0.0
    %v3679 = vmax.f32 %v3673, 0.0
    %v3680 = vmax.f32 %v3674, 0.0
    %v3681 = vmax.f32 %v3675, 0.0
    %v3682 = vmax.f32 %v3676, 0.0
    %v3683 = vpack.c.bf16 %v3677, %v3677
    %v3684 = vpack.c.bf16 %v3678, %v3678
    %v3685 = vpack.c.bf16 %v3679, %v3679
    %v3686 = vpack.c.bf16 %v3680, %v3680
    %v3687 = vpack.c.bf16 %v3681, %v3681
    %v3688 = vpack.c.bf16 %v3682, %v3682
    %v3689 = vld [vmem:[#allocation11] sm:$0xff]
    %v3690 = vld [vmem:[#allocation11 + $0x8] sm:$0xff]
    %v3691 = vld [vmem:[#allocation11 + $0x10] sm:$0xff]
    %v3692 = vld [vmem:[#allocation11 + $0x18] sm:$0xff]
    %v3693 = vld [vmem:[#allocation11 + $0x20] sm:$0xff]
    %v3694 = vld [vmem:[#allocation11 + $0x28] sm:$0xff]
    %v3695 = vld [vmem:[#allocation11 + $0x30] sm:$0xff]
    %v3696 = vld [vmem:[#allocation11 + $0x38] sm:$0xff]
    %v3697 = vld [vmem:[#allocation11 + $0x40] sm:$0xff]
    %v3698 = vld [vmem:[#allocation11 + $0x48] sm:$0xff]
    %v3699 = vld [vmem:[#allocation11 + $0x50] sm:$0xff]
    %v3700 = vld [vmem:[#allocation11 + $0x58] sm:$0xff]
    %v3701 = vld [vmem:[#allocation11 + $0x60] sm:$0xff]
    %v3702 = vld [vmem:[#allocation11 + $0x68] sm:$0xff]
    %v3703 = vld [vmem:[#allocation11 + $0x70] sm:$0xff]
    %v3704 = vld [vmem:[#allocation11 + $0x78] sm:$0xff]
    %v3705 = vld [vmem:[#allocation11 + $0x80] sm:$0xff]
    %v3706 = vld [vmem:[#allocation11 + $0x88] sm:$0xff]
    %v3707 = vld [vmem:[#allocation11 + $0x90] sm:$0xff]
    %v3708 = vld [vmem:[#allocation11 + $0x98] sm:$0xff]
    %v3709 = vld [vmem:[#allocation11 + $0xa0] sm:$0xff]
    %v3710 = vld [vmem:[#allocation11 + $0xa8] sm:$0xff]
    %v3711 = vld [vmem:[#allocation11 + $0xb0] sm:$0xff]
    %v3712 = vld [vmem:[#allocation11 + $0xb8] sm:$0xff]
    %v3713 = vld [vmem:[#allocation11 + $0xc0] sm:$0xff]
    %v3714 = vld [vmem:[#allocation11 + $0xc8] sm:$0xff]
    %v3715 = vld [vmem:[#allocation11 + $0xd0] sm:$0xff]
    %v3716 = vld [vmem:[#allocation11 + $0xd8] sm:$0xff]
    %v3717 = vld [vmem:[#allocation11 + $0xe0] sm:$0xff]
    %v3718 = vld [vmem:[#allocation11 + $0xe8] sm:$0xff]
    %v3719 = vld [vmem:[#allocation11 + $0xf0] sm:$0xff]
    %v3720 = vld [vmem:[#allocation11 + $0xf8] sm:$0xff]
    %v3721 = vld [vmem:[#allocation11 + $0x100] sm:$0xff]
    %v3722 = vld [vmem:[#allocation11 + $0x108] sm:$0xff]
    %v3723 = vld [vmem:[#allocation11 + $0x110] sm:$0xff]
    %v3724 = vld [vmem:[#allocation11 + $0x118] sm:$0xff]
    %v3725 = vld [vmem:[#allocation11 + $0x120] sm:$0xff]
    %v3726 = vld [vmem:[#allocation11 + $0x128] sm:$0xff]
    %v3727 = vld [vmem:[#allocation11 + $0x130] sm:$0xff]
    %v3728 = vld [vmem:[#allocation11 + $0x138] sm:$0xff]
    %v3729 = vld [vmem:[#allocation11 + $0x140] sm:$0xff]
    %v3730 = vld [vmem:[#allocation11 + $0x148] sm:$0xff]
    %v3731 = vld [vmem:[#allocation11 + $0x150] sm:$0xff]
    %v3732 = vld [vmem:[#allocation11 + $0x158] sm:$0xff]
    %v3733 = vld [vmem:[#allocation11 + $0x160] sm:$0xff]
    %v3734 = vld [vmem:[#allocation11 + $0x168] sm:$0xff]
    %v3735 = vld [vmem:[#allocation11 + $0x170] sm:$0xff]
    %v3736 = vld [vmem:[#allocation11 + $0x178] sm:$0xff]
    %v3737 = vld [vmem:[#allocation11 + $0x180] sm:$0xff]
    %v3738 = vld [vmem:[#allocation11 + $0x188] sm:$0xff]
    %v3739 = vld [vmem:[#allocation11 + $0x190] sm:$0xff]
    %v3740 = vld [vmem:[#allocation11 + $0x198] sm:$0xff]
    %v3741 = vld [vmem:[#allocation11 + $0x1a0] sm:$0xff]
    %v3742 = vld [vmem:[#allocation11 + $0x1a8] sm:$0xff]
    %v3743 = vld [vmem:[#allocation11 + $0x1b0] sm:$0xff]
    %v3744 = vld [vmem:[#allocation11 + $0x1b8] sm:$0xff]
    %v3745 = vld [vmem:[#allocation11 + $0x1c0] sm:$0xff]
    %v3746 = vld [vmem:[#allocation11 + $0x1c8] sm:$0xff]
    %v3747 = vld [vmem:[#allocation11 + $0x1d0] sm:$0xff]
    %v3748 = vld [vmem:[#allocation11 + $0x1d8] sm:$0xff]
    %v3749 = vld [vmem:[#allocation11 + $0x1e0] sm:$0xff]
    %v3750 = vld [vmem:[#allocation11 + $0x1e8] sm:$0xff]
    %v3751 = vld [vmem:[#allocation11 + $0x1f0] sm:$0xff]
    %v3752 = vld [vmem:[#allocation11 + $0x1f8] sm:$0xff]
    %v3753 = vld [vmem:[#allocation11 + $0x200] sm:$0xff]
    %v3754 = vld [vmem:[#allocation11 + $0x208] sm:$0xff]
    %v3755 = vld [vmem:[#allocation11 + $0x210] sm:$0xff]
    %v3756 = vld [vmem:[#allocation11 + $0x218] sm:$0xff]
    %v3757 = vld [vmem:[#allocation11 + $0x220] sm:$0xff]
    %v3758 = vld [vmem:[#allocation11 + $0x228] sm:$0xff]
    %v3759 = vld [vmem:[#allocation11 + $0x230] sm:$0xff]
    %v3760 = vld [vmem:[#allocation11 + $0x238] sm:$0xff]
    %v3761 = vld [vmem:[#allocation11 + $0x240] sm:$0xff]
    %v3762 = vld [vmem:[#allocation11 + $0x248] sm:$0xff]
    %v3763 = vld [vmem:[#allocation11 + $0x250] sm:$0xff]
    %v3764 = vld [vmem:[#allocation11 + $0x258] sm:$0xff]
    %v3765 = vld [vmem:[#allocation11 + $0x260] sm:$0xff]
    %v3766 = vld [vmem:[#allocation11 + $0x268] sm:$0xff]
    %v3767 = vld [vmem:[#allocation11 + $0x270] sm:$0xff]
    %v3768 = vld [vmem:[#allocation11 + $0x278] sm:$0xff]
    %v3769 = vld [vmem:[#allocation11 + $0x280] sm:$0xff]
    %v3770 = vld [vmem:[#allocation11 + $0x288] sm:$0xff]
    %v3771 = vld [vmem:[#allocation11 + $0x290] sm:$0xff]
    %v3772 = vld [vmem:[#allocation11 + $0x298] sm:$0xff]
    %v3773 = vld [vmem:[#allocation11 + $0x2a0] sm:$0xff]
    %v3774 = vld [vmem:[#allocation11 + $0x2a8] sm:$0xff]
    %v3775 = vld [vmem:[#allocation11 + $0x2b0] sm:$0xff]
    %v3776 = vld [vmem:[#allocation11 + $0x2b8] sm:$0xff]
    %v3777 = vld [vmem:[#allocation11 + $0x2c0] sm:$0xff]
    %v3778 = vld [vmem:[#allocation11 + $0x2c8] sm:$0xff]
    %v3779 = vld [vmem:[#allocation11 + $0x2d0] sm:$0xff]
    %v3780 = vld [vmem:[#allocation11 + $0x2d8] sm:$0xff]
    %v3781 = vld [vmem:[#allocation11 + $0x2e0] sm:$0xff]
    %v3782 = vld [vmem:[#allocation11 + $0x2e8] sm:$0xff]
    %v3783 = vld [vmem:[#allocation11 + $0x2f0] sm:$0xff]
    %v3784 = vld [vmem:[#allocation11 + $0x2f8] sm:$0xff]
    %v3785 = vld [vmem:[#allocation11 + $0x300] sm:$0xff]
    %v3786 = vld [vmem:[#allocation11 + $0x308] sm:$0xff]
    %v3787 = vld [vmem:[#allocation11 + $0x310] sm:$0xff]
    %v3788 = vld [vmem:[#allocation11 + $0x318] sm:$0xff]
    %v3789 = vld [vmem:[#allocation11 + $0x320] sm:$0xff]
    %v3790 = vld [vmem:[#allocation11 + $0x328] sm:$0xff]
    %v3791 = vld [vmem:[#allocation11 + $0x330] sm:$0xff]
    %v3792 = vld [vmem:[#allocation11 + $0x338] sm:$0xff]
    %v3793 = vld [vmem:[#allocation11 + $0x340] sm:$0xff]
    %v3794 = vld [vmem:[#allocation11 + $0x348] sm:$0xff]
    %v3795 = vld [vmem:[#allocation11 + $0x350] sm:$0xff]
    %v3796 = vld [vmem:[#allocation11 + $0x358] sm:$0xff]
    %v3797 = vld [vmem:[#allocation11 + $0x360] sm:$0xff]
    %v3798 = vld [vmem:[#allocation11 + $0x368] sm:$0xff]
    %v3799 = vld [vmem:[#allocation11 + $0x370] sm:$0xff]
    %v3800 = vld [vmem:[#allocation11 + $0x378] sm:$0xff]
    %v3801 = vld [vmem:[#allocation11 + $0x380] sm:$0xff]
    %v3802 = vld [vmem:[#allocation11 + $0x388] sm:$0xff]
    %v3803 = vld [vmem:[#allocation11 + $0x390] sm:$0xff]
    %v3804 = vld [vmem:[#allocation11 + $0x398] sm:$0xff]
    %v3805 = vld [vmem:[#allocation11 + $0x3a0] sm:$0xff]
    %v3806 = vld [vmem:[#allocation11 + $0x3a8] sm:$0xff]
    %v3807 = vld [vmem:[#allocation11 + $0x3b0] sm:$0xff]
    %v3808 = vld [vmem:[#allocation11 + $0x3b8] sm:$0xff]
    %v3809 = vld [vmem:[#allocation11 + $0x3c0] sm:$0xff]
    %v3810 = vld [vmem:[#allocation11 + $0x3c8] sm:$0xff]
    %v3811 = vld [vmem:[#allocation11 + $0x3d0] sm:$0xff]
    %v3812 = vld [vmem:[#allocation11 + $0x3d8] sm:$0xff]
    %v3813 = vld [vmem:[#allocation11 + $0x3e0] sm:$0xff]
    %v3814 = vld [vmem:[#allocation11 + $0x3e8] sm:$0xff]
    %v3815 = vld [vmem:[#allocation11 + $0x3f0] sm:$0xff]
    %v3816 = vld [vmem:[#allocation11 + $0x3f8] sm:$0xff]
    %v3817 = vld [vmem:[#allocation11 + $0x400] sm:$0xff]
    %v3818 = vld [vmem:[#allocation11 + $0x408] sm:$0xff]
    %v3819 = vld [vmem:[#allocation11 + $0x410] sm:$0xff]
    %v3820 = vld [vmem:[#allocation11 + $0x418] sm:$0xff]
    %v3821 = vld [vmem:[#allocation11 + $0x420] sm:$0xff]
    %v3822 = vld [vmem:[#allocation11 + $0x428] sm:$0xff]
    %v3823 = vld [vmem:[#allocation11 + $0x430] sm:$0xff]
    %v3824 = vld [vmem:[#allocation11 + $0x438] sm:$0xff]
    %v3825 = vld [vmem:[#allocation11 + $0x440] sm:$0xff]
    %v3826 = vld [vmem:[#allocation11 + $0x448] sm:$0xff]
    %v3827 = vld [vmem:[#allocation11 + $0x450] sm:$0xff]
    %v3828 = vld [vmem:[#allocation11 + $0x458] sm:$0xff]
    %v3829 = vld [vmem:[#allocation11 + $0x460] sm:$0xff]
    %v3830 = vld [vmem:[#allocation11 + $0x468] sm:$0xff]
    %v3831 = vld [vmem:[#allocation11 + $0x470] sm:$0xff]
    %v3832 = vld [vmem:[#allocation11 + $0x478] sm:$0xff]
    %v3833 = vld [vmem:[#allocation11 + $0x480] sm:$0xff]
    %v3834 = vld [vmem:[#allocation11 + $0x488] sm:$0xff]
    %v3835 = vld [vmem:[#allocation11 + $0x490] sm:$0xff]
    %v3836 = vld [vmem:[#allocation11 + $0x498] sm:$0xff]
    %v3837 = vld [vmem:[#allocation11 + $0x4a0] sm:$0xff]
    %v3838 = vld [vmem:[#allocation11 + $0x4a8] sm:$0xff]
    %v3839 = vld [vmem:[#allocation11 + $0x4b0] sm:$0xff]
    %v3840 = vld [vmem:[#allocation11 + $0x4b8] sm:$0xff]
    %v3841 = vld [vmem:[#allocation11 + $0x4c0] sm:$0xff]
    %v3842 = vld [vmem:[#allocation11 + $0x4c8] sm:$0xff]
    %v3843 = vld [vmem:[#allocation11 + $0x4d0] sm:$0xff]
    %v3844 = vld [vmem:[#allocation11 + $0x4d8] sm:$0xff]
    %v3845 = vld [vmem:[#allocation11 + $0x4e0] sm:$0xff]
    %v3846 = vld [vmem:[#allocation11 + $0x4e8] sm:$0xff]
    %v3847 = vld [vmem:[#allocation11 + $0x4f0] sm:$0xff]
    %v3848 = vld [vmem:[#allocation11 + $0x4f8] sm:$0xff]
    %v3849 = vld [vmem:[#allocation11 + $0x500] sm:$0xff]
    %v3850 = vld [vmem:[#allocation11 + $0x508] sm:$0xff]
    %v3851 = vld [vmem:[#allocation11 + $0x510] sm:$0xff]
    %v3852 = vld [vmem:[#allocation11 + $0x518] sm:$0xff]
    %v3853 = vld [vmem:[#allocation11 + $0x520] sm:$0xff]
    %v3854 = vld [vmem:[#allocation11 + $0x528] sm:$0xff]
    %v3855 = vld [vmem:[#allocation11 + $0x530] sm:$0xff]
    %v3856 = vld [vmem:[#allocation11 + $0x538] sm:$0xff]
    %v3857 = vld [vmem:[#allocation11 + $0x540] sm:$0xff]
    %v3858 = vld [vmem:[#allocation11 + $0x548] sm:$0xff]
    %v3859 = vld [vmem:[#allocation11 + $0x550] sm:$0xff]
    %v3860 = vld [vmem:[#allocation11 + $0x558] sm:$0xff]
    %v3861 = vld [vmem:[#allocation11 + $0x560] sm:$0xff]
    %v3862 = vld [vmem:[#allocation11 + $0x568] sm:$0xff]
    %v3863 = vld [vmem:[#allocation11 + $0x570] sm:$0xff]
    %v3864 = vld [vmem:[#allocation11 + $0x578] sm:$0xff]
    %v3865 = vld [vmem:[#allocation11 + $0x580] sm:$0xff]
    %v3866 = vld [vmem:[#allocation11 + $0x588] sm:$0xff]
    %v3867 = vld [vmem:[#allocation11 + $0x590] sm:$0xff]
    %v3868 = vld [vmem:[#allocation11 + $0x598] sm:$0xff]
    %v3869 = vld [vmem:[#allocation11 + $0x5a0] sm:$0xff]
    %v3870 = vld [vmem:[#allocation11 + $0x5a8] sm:$0xff]
    %v3871 = vld [vmem:[#allocation11 + $0x5b0] sm:$0xff]
    %v3872 = vld [vmem:[#allocation11 + $0x5b8] sm:$0xff]
    %v3873 = vld [vmem:[#allocation11 + $0x5c0] sm:$0xff]
    %v3874 = vld [vmem:[#allocation11 + $0x5c8] sm:$0xff]
    %v3875 = vld [vmem:[#allocation11 + $0x5d0] sm:$0xff]
    %v3876 = vld [vmem:[#allocation11 + $0x5d8] sm:$0xff]
    %v3877 = vld [vmem:[#allocation11 + $0x5e0] sm:$0xff]
    %v3878 = vld [vmem:[#allocation11 + $0x5e8] sm:$0xff]
    %v3879 = vld [vmem:[#allocation11 + $0x5f0] sm:$0xff]
    %v3880 = vld [vmem:[#allocation11 + $0x5f8] sm:$0xff]
    %v3881 = vld [vmem:[#allocation11 + $0x600] sm:$0xff]
    %v3882 = vld [vmem:[#allocation11 + $0x608] sm:$0xff]
    %v3883 = vld [vmem:[#allocation11 + $0x610] sm:$0xff]
    %v3884 = vld [vmem:[#allocation11 + $0x618] sm:$0xff]
    %v3885 = vld [vmem:[#allocation11 + $0x620] sm:$0xff]
    %v3886 = vld [vmem:[#allocation11 + $0x628] sm:$0xff]
    %v3887 = vld [vmem:[#allocation11 + $0x630] sm:$0xff]
    %v3888 = vld [vmem:[#allocation11 + $0x638] sm:$0xff]
    %v3889 = vld [vmem:[#allocation11 + $0x640] sm:$0xff]
    %v3890 = vld [vmem:[#allocation11 + $0x648] sm:$0xff]
    %v3891 = vld [vmem:[#allocation11 + $0x650] sm:$0xff]
    %v3892 = vld [vmem:[#allocation11 + $0x658] sm:$0xff]
    %v3893 = vld [vmem:[#allocation11 + $0x660] sm:$0xff]
    %v3894 = vld [vmem:[#allocation11 + $0x668] sm:$0xff]
    %v3895 = vld [vmem:[#allocation11 + $0x670] sm:$0xff]
    %v3896 = vld [vmem:[#allocation11 + $0x678] sm:$0xff]
    %v3897 = vld [vmem:[#allocation11 + $0x680] sm:$0xff]
    %v3898 = vld [vmem:[#allocation11 + $0x688] sm:$0xff]
    %v3899 = vld [vmem:[#allocation11 + $0x690] sm:$0xff]
    %v3900 = vld [vmem:[#allocation11 + $0x698] sm:$0xff]
    %v3901 = vld [vmem:[#allocation11 + $0x6a0] sm:$0xff]
    %v3902 = vld [vmem:[#allocation11 + $0x6a8] sm:$0xff]
    %v3903 = vld [vmem:[#allocation11 + $0x6b0] sm:$0xff]
    %v3904 = vld [vmem:[#allocation11 + $0x6b8] sm:$0xff]
    %v3905 = vld [vmem:[#allocation11 + $0x6c0] sm:$0xff]
    %v3906 = vld [vmem:[#allocation11 + $0x6c8] sm:$0xff]
    %v3907 = vld [vmem:[#allocation11 + $0x6d0] sm:$0xff]
    %v3908 = vld [vmem:[#allocation11 + $0x6d8] sm:$0xff]
    %v3909 = vld [vmem:[#allocation11 + $0x6e0] sm:$0xff]
    %v3910 = vld [vmem:[#allocation11 + $0x6e8] sm:$0xff]
    %v3911 = vld [vmem:[#allocation11 + $0x6f0] sm:$0xff]
    %v3912 = vld [vmem:[#allocation11 + $0x6f8] sm:$0xff]
    %v3913 = vld [vmem:[#allocation11 + $0x700] sm:$0xff]
    %v3914 = vld [vmem:[#allocation11 + $0x708] sm:$0xff]
    %v3915 = vld [vmem:[#allocation11 + $0x710] sm:$0xff]
    %v3916 = vld [vmem:[#allocation11 + $0x718] sm:$0xff]
    %v3917 = vld [vmem:[#allocation11 + $0x720] sm:$0xff]
    %v3918 = vld [vmem:[#allocation11 + $0x728] sm:$0xff]
    %v3919 = vld [vmem:[#allocation11 + $0x730] sm:$0xff]
    %v3920 = vld [vmem:[#allocation11 + $0x738] sm:$0xff]
    %v3921 = vld [vmem:[#allocation11 + $0x740] sm:$0xff]
    %v3922 = vld [vmem:[#allocation11 + $0x748] sm:$0xff]
    %v3923 = vld [vmem:[#allocation11 + $0x750] sm:$0xff]
    %v3924 = vld [vmem:[#allocation11 + $0x758] sm:$0xff]
    %v3925 = vld [vmem:[#allocation11 + $0x760] sm:$0xff]
    %v3926 = vld [vmem:[#allocation11 + $0x768] sm:$0xff]
    %v3927 = vld [vmem:[#allocation11 + $0x770] sm:$0xff]
    %v3928 = vld [vmem:[#allocation11 + $0x778] sm:$0xff]
    %v3929 = vld [vmem:[#allocation11 + $0x780] sm:$0xff]
    %v3930 = vld [vmem:[#allocation11 + $0x788] sm:$0xff]
    %v3931 = vld [vmem:[#allocation11 + $0x790] sm:$0xff]
    %v3932 = vld [vmem:[#allocation11 + $0x798] sm:$0xff]
    %v3933 = vld [vmem:[#allocation11 + $0x7a0] sm:$0xff]
    %v3934 = vld [vmem:[#allocation11 + $0x7a8] sm:$0xff]
    %v3935 = vld [vmem:[#allocation11 + $0x7b0] sm:$0xff]
    %v3936 = vld [vmem:[#allocation11 + $0x7b8] sm:$0xff]
    %v3937 = vld [vmem:[#allocation11 + $0x7c0] sm:$0xff]
    %v3938 = vld [vmem:[#allocation11 + $0x7c8] sm:$0xff]
    %v3939 = vld [vmem:[#allocation11 + $0x7d0] sm:$0xff]
    %v3940 = vld [vmem:[#allocation11 + $0x7d8] sm:$0xff]
    %v3941 = vld [vmem:[#allocation11 + $0x7e0] sm:$0xff]
    %v3942 = vld [vmem:[#allocation11 + $0x7e8] sm:$0xff]
    %v3943 = vld [vmem:[#allocation11 + $0x7f0] sm:$0xff]
    %v3944 = vld [vmem:[#allocation11 + $0x7f8] sm:$0xff]
    %v3945 = vld [vmem:[#allocation11 + $0x800] sm:$0xff]
    %v3946 = vld [vmem:[#allocation11 + $0x808] sm:$0xff]
    %v3947 = vld [vmem:[#allocation11 + $0x810] sm:$0xff]
    %v3948 = vld [vmem:[#allocation11 + $0x818] sm:$0xff]
    %v3949 = vld [vmem:[#allocation11 + $0x820] sm:$0xff]
    %v3950 = vld [vmem:[#allocation11 + $0x828] sm:$0xff]
    %v3951 = vld [vmem:[#allocation11 + $0x830] sm:$0xff]
    %v3952 = vld [vmem:[#allocation11 + $0x838] sm:$0xff]
    %v3953 = vld [vmem:[#allocation11 + $0x840] sm:$0xff]
    %v3954 = vld [vmem:[#allocation11 + $0x848] sm:$0xff]
    %v3955 = vld [vmem:[#allocation11 + $0x850] sm:$0xff]
    %v3956 = vld [vmem:[#allocation11 + $0x858] sm:$0xff]
    %v3957 = vld [vmem:[#allocation11 + $0x860] sm:$0xff]
    %v3958 = vld [vmem:[#allocation11 + $0x868] sm:$0xff]
    %v3959 = vld [vmem:[#allocation11 + $0x870] sm:$0xff]
    %v3960 = vld [vmem:[#allocation11 + $0x878] sm:$0xff]
    %v3961 = vld [vmem:[#allocation11 + $0x880] sm:$0xff]
    %v3962 = vld [vmem:[#allocation11 + $0x888] sm:$0xff]
    %v3963 = vld [vmem:[#allocation11 + $0x890] sm:$0xff]
    %v3964 = vld [vmem:[#allocation11 + $0x898] sm:$0xff]
    %v3965 = vld [vmem:[#allocation11 + $0x8a0] sm:$0xff]
    %v3966 = vld [vmem:[#allocation11 + $0x8a8] sm:$0xff]
    %v3967 = vld [vmem:[#allocation11 + $0x8b0] sm:$0xff]
    %v3968 = vld [vmem:[#allocation11 + $0x8b8] sm:$0xff]
    %v3969 = vld [vmem:[#allocation11 + $0x8c0] sm:$0xff]
    %v3970 = vld [vmem:[#allocation11 + $0x8c8] sm:$0xff]
    %v3971 = vld [vmem:[#allocation11 + $0x8d0] sm:$0xff]
    %v3972 = vld [vmem:[#allocation11 + $0x8d8] sm:$0xff]
    %v3973 = vld [vmem:[#allocation11 + $0x8e0] sm:$0xff]
    %v3974 = vld [vmem:[#allocation11 + $0x8e8] sm:$0xff]
    %v3975 = vld [vmem:[#allocation11 + $0x8f0] sm:$0xff]
    %v3976 = vld [vmem:[#allocation11 + $0x8f8] sm:$0xff]
    %v3978 = vlaneseq
    %v3979 = vshrl.u32 %v3978, 7
    %v3980 = vsub.s32 0, %v3979
    %v3981 = vrot.slane %v197, %v3980
    %v3982 = vlaneseq
    %v3983 = vshrl.u32 %v3982, 7
    %v3984 = vsub.s32 1, %v3983
    %v3985 = vrot.slane %v197, %v3984
    %v3986 = vlaneseq
    %v3987 = vshrl.u32 %v3986, 7
    %v3988 = vsub.s32 2, %v3987
    %v3989 = vrot.slane %v197, %v3988
    %v3990 = vlaneseq
    %v3991 = vshrl.u32 %v3990, 7
    %v3992 = vsub.s32 3, %v3991
    %v3993 = vrot.slane %v197, %v3992
    %v3994 = vlaneseq
    %v3995 = vshrl.u32 %v3994, 7
    %v3996 = vsub.s32 4, %v3995
    %v3997 = vrot.slane %v197, %v3996
    %v3998 = vlaneseq
    %v3999 = vshrl.u32 %v3998, 7
    %v4000 = vsub.s32 5, %v3999
    %v4001 = vrot.slane %v197, %v4000
    %v4296 = vunpack.c.l.b16 %v3689
    %v4297 = vunpack.c.h.b16 %v3689
    %v4298 = vunpack.c.l.b16 %v3690
    %v4299 = vunpack.c.h.b16 %v3690
    %v4300 = vunpack.c.l.b16 %v3691
    %v4301 = vunpack.c.h.b16 %v3691
    %v4302 = vunpack.c.l.b16 %v3692
    %v4303 = vunpack.c.h.b16 %v3692
    %v4304 = vunpack.c.l.b16 %v3693
    %v4305 = vunpack.c.h.b16 %v3693
    %v4306 = vunpack.c.l.b16 %v3694
    %v4307 = vunpack.c.h.b16 %v3694
    %v4308 = vunpack.c.l.b16 %v3695
    %v4309 = vunpack.c.h.b16 %v3695
    %v4310 = vunpack.c.l.b16 %v3696
    %v4311 = vunpack.c.h.b16 %v3696
    %v4312 = vunpack.c.l.b16 %v3697
    %v4313 = vunpack.c.h.b16 %v3697
    %v4314 = vunpack.c.l.b16 %v3698
    %v4315 = vunpack.c.h.b16 %v3698
    %v4316 = vunpack.c.l.b16 %v3699
    %v4317 = vunpack.c.h.b16 %v3699
    %v4318 = vunpack.c.l.b16 %v3700
    %v4319 = vunpack.c.h.b16 %v3700
    %v4320 = vunpack.c.l.b16 %v3701
    %v4321 = vunpack.c.h.b16 %v3701
    %v4322 = vunpack.c.l.b16 %v3702
    %v4323 = vunpack.c.h.b16 %v3702
    %v4324 = vunpack.c.l.b16 %v3703
    %v4325 = vunpack.c.h.b16 %v3703
    %v4326 = vunpack.c.l.b16 %v3704
    %v4327 = vunpack.c.h.b16 %v3704
    %v4328 = vunpack.c.l.b16 %v3705
    %v4329 = vunpack.c.h.b16 %v3705
    %v4330 = vunpack.c.l.b16 %v3706
    %v4331 = vunpack.c.h.b16 %v3706
    %v4332 = vunpack.c.l.b16 %v3707
    %v4333 = vunpack.c.h.b16 %v3707
    %v4334 = vunpack.c.l.b16 %v3708
    %v4335 = vunpack.c.h.b16 %v3708
    %v4336 = vunpack.c.l.b16 %v3709
    %v4337 = vunpack.c.h.b16 %v3709
    %v4338 = vunpack.c.l.b16 %v3710
    %v4339 = vunpack.c.h.b16 %v3710
    %v4340 = vunpack.c.l.b16 %v3711
    %v4341 = vunpack.c.h.b16 %v3711
    %v4342 = vunpack.c.l.b16 %v3712
    %v4343 = vunpack.c.h.b16 %v3712
    %v4344 = vunpack.c.l.b16 %v3713
    %v4345 = vunpack.c.h.b16 %v3713
    %v4346 = vunpack.c.l.b16 %v3714
    %v4347 = vunpack.c.h.b16 %v3714
    %v4348 = vunpack.c.l.b16 %v3715
    %v4349 = vunpack.c.h.b16 %v3715
    %v4350 = vunpack.c.l.b16 %v3716
    %v4351 = vunpack.c.h.b16 %v3716
    %v4352 = vunpack.c.l.b16 %v3717
    %v4353 = vunpack.c.h.b16 %v3717
    %v4354 = vunpack.c.l.b16 %v3718
    %v4355 = vunpack.c.h.b16 %v3718
    %v4356 = vunpack.c.l.b16 %v3719
    %v4357 = vunpack.c.h.b16 %v3719
    %v4358 = vunpack.c.l.b16 %v3720
    %v4359 = vunpack.c.h.b16 %v3720
    %v4360 = vunpack.c.l.b16 %v3721
    %v4361 = vunpack.c.h.b16 %v3721
    %v4362 = vunpack.c.l.b16 %v3722
    %v4363 = vunpack.c.h.b16 %v3722
    %v4364 = vunpack.c.l.b16 %v3723
    %v4365 = vunpack.c.h.b16 %v3723
    %v4366 = vunpack.c.l.b16 %v3724
    %v4367 = vunpack.c.h.b16 %v3724
    %v4368 = vunpack.c.l.b16 %v3725
    %v4369 = vunpack.c.h.b16 %v3725
    %v4370 = vunpack.c.l.b16 %v3726
    %v4371 = vunpack.c.h.b16 %v3726
    %v4372 = vunpack.c.l.b16 %v3727
    %v4373 = vunpack.c.h.b16 %v3727
    %v4374 = vunpack.c.l.b16 %v3728
    %v4375 = vunpack.c.h.b16 %v3728
    %v4376 = vunpack.c.l.b16 %v3729
    %v4377 = vunpack.c.h.b16 %v3729
    %v4378 = vunpack.c.l.b16 %v3730
    %v4379 = vunpack.c.h.b16 %v3730
    %v4380 = vunpack.c.l.b16 %v3731
    %v4381 = vunpack.c.h.b16 %v3731
    %v4382 = vunpack.c.l.b16 %v3732
    %v4383 = vunpack.c.h.b16 %v3732
    %v4384 = vunpack.c.l.b16 %v3733
    %v4385 = vunpack.c.h.b16 %v3733
    %v4386 = vunpack.c.l.b16 %v3734
    %v4387 = vunpack.c.h.b16 %v3734
    %v4388 = vunpack.c.l.b16 %v3735
    %v4389 = vunpack.c.h.b16 %v3735
    %v4390 = vunpack.c.l.b16 %v3736
    %v4391 = vunpack.c.h.b16 %v3736
    %v4392 = vunpack.c.l.b16 %v3737
    %v4393 = vunpack.c.h.b16 %v3737
    %v4394 = vunpack.c.l.b16 %v3738
    %v4395 = vunpack.c.h.b16 %v3738
    %v4396 = vunpack.c.l.b16 %v3739
    %v4397 = vunpack.c.h.b16 %v3739
    %v4398 = vunpack.c.l.b16 %v3740
    %v4399 = vunpack.c.h.b16 %v3740
    %v4400 = vunpack.c.l.b16 %v3741
    %v4401 = vunpack.c.h.b16 %v3741
    %v4402 = vunpack.c.l.b16 %v3742
    %v4403 = vunpack.c.h.b16 %v3742
    %v4404 = vunpack.c.l.b16 %v3743
    %v4405 = vunpack.c.h.b16 %v3743
    %v4406 = vunpack.c.l.b16 %v3744
    %v4407 = vunpack.c.h.b16 %v3744
    %v4408 = vunpack.c.l.b16 %v3745
    %v4409 = vunpack.c.h.b16 %v3745
    %v4410 = vunpack.c.l.b16 %v3746
    %v4411 = vunpack.c.h.b16 %v3746
    %v4412 = vunpack.c.l.b16 %v3747
    %v4413 = vunpack.c.h.b16 %v3747
    %v4414 = vunpack.c.l.b16 %v3748
    %v4415 = vunpack.c.h.b16 %v3748
    %v4416 = vunpack.c.l.b16 %v3749
    %v4417 = vunpack.c.h.b16 %v3749
    %v4418 = vunpack.c.l.b16 %v3750
    %v4419 = vunpack.c.h.b16 %v3750
    %v4420 = vunpack.c.l.b16 %v3751
    %v4421 = vunpack.c.h.b16 %v3751
    %v4422 = vunpack.c.l.b16 %v3752
    %v4423 = vunpack.c.h.b16 %v3752
    %v4424 = vunpack.c.l.b16 %v3753
    %v4425 = vunpack.c.h.b16 %v3753
    %v4426 = vunpack.c.l.b16 %v3754
    %v4427 = vunpack.c.h.b16 %v3754
    %v4428 = vunpack.c.l.b16 %v3755
    %v4429 = vunpack.c.h.b16 %v3755
    %v4430 = vunpack.c.l.b16 %v3756
    %v4431 = vunpack.c.h.b16 %v3756
    %v4432 = vunpack.c.l.b16 %v3757
    %v4433 = vunpack.c.h.b16 %v3757
    %v4434 = vunpack.c.l.b16 %v3758
    %v4435 = vunpack.c.h.b16 %v3758
    %v4436 = vunpack.c.l.b16 %v3759
    %v4437 = vunpack.c.h.b16 %v3759
    %v4438 = vunpack.c.l.b16 %v3760
    %v4439 = vunpack.c.h.b16 %v3760
    %v4440 = vunpack.c.l.b16 %v3761
    %v4441 = vunpack.c.h.b16 %v3761
    %v4442 = vunpack.c.l.b16 %v3762
    %v4443 = vunpack.c.h.b16 %v3762
    %v4444 = vunpack.c.l.b16 %v3763
    %v4445 = vunpack.c.h.b16 %v3763
    %v4446 = vunpack.c.l.b16 %v3764
    %v4447 = vunpack.c.h.b16 %v3764
    %v4448 = vunpack.c.l.b16 %v3765
    %v4449 = vunpack.c.h.b16 %v3765
    %v4450 = vunpack.c.l.b16 %v3766
    %v4451 = vunpack.c.h.b16 %v3766
    %v4452 = vunpack.c.l.b16 %v3767
    %v4453 = vunpack.c.h.b16 %v3767
    %v4454 = vunpack.c.l.b16 %v3768
    %v4455 = vunpack.c.h.b16 %v3768
    %v4456 = vunpack.c.l.b16 %v3769
    %v4457 = vunpack.c.h.b16 %v3769
    %v4458 = vunpack.c.l.b16 %v3770
    %v4459 = vunpack.c.h.b16 %v3770
    %v4460 = vunpack.c.l.b16 %v3771
    %v4461 = vunpack.c.h.b16 %v3771
    %v4462 = vunpack.c.l.b16 %v3772
    %v4463 = vunpack.c.h.b16 %v3772
    %v4464 = vunpack.c.l.b16 %v3773
    %v4465 = vunpack.c.h.b16 %v3773
    %v4466 = vunpack.c.l.b16 %v3774
    %v4467 = vunpack.c.h.b16 %v3774
    %v4468 = vunpack.c.l.b16 %v3775
    %v4469 = vunpack.c.h.b16 %v3775
    %v4470 = vunpack.c.l.b16 %v3776
    %v4471 = vunpack.c.h.b16 %v3776
    %v4472 = vunpack.c.l.b16 %v3777
    %v4473 = vunpack.c.h.b16 %v3777
    %v4474 = vunpack.c.l.b16 %v3778
    %v4475 = vunpack.c.h.b16 %v3778
    %v4476 = vunpack.c.l.b16 %v3779
    %v4477 = vunpack.c.h.b16 %v3779
    %v4478 = vunpack.c.l.b16 %v3780
    %v4479 = vunpack.c.h.b16 %v3780
    %v4480 = vunpack.c.l.b16 %v3781
    %v4481 = vunpack.c.h.b16 %v3781
    %v4482 = vunpack.c.l.b16 %v3782
    %v4483 = vunpack.c.h.b16 %v3782
    %v4484 = vunpack.c.l.b16 %v3783
    %v4485 = vunpack.c.h.b16 %v3783
    %v4486 = vunpack.c.l.b16 %v3784
    %v4487 = vunpack.c.h.b16 %v3784
    %v4488 = vunpack.c.l.b16 %v3785
    %v4489 = vunpack.c.h.b16 %v3785
    %v4490 = vunpack.c.l.b16 %v3786
    %v4491 = vunpack.c.h.b16 %v3786
    %v4492 = vunpack.c.l.b16 %v3787
    %v4493 = vunpack.c.h.b16 %v3787
    %v4494 = vunpack.c.l.b16 %v3788
    %v4495 = vunpack.c.h.b16 %v3788
    %v4496 = vunpack.c.l.b16 %v3789
    %v4497 = vunpack.c.h.b16 %v3789
    %v4498 = vunpack.c.l.b16 %v3790
    %v4499 = vunpack.c.h.b16 %v3790
    %v4500 = vunpack.c.l.b16 %v3791
    %v4501 = vunpack.c.h.b16 %v3791
    %v4502 = vunpack.c.l.b16 %v3792
    %v4503 = vunpack.c.h.b16 %v3792
    %v4504 = vunpack.c.l.b16 %v3793
    %v4505 = vunpack.c.h.b16 %v3793
    %v4506 = vunpack.c.l.b16 %v3794
    %v4507 = vunpack.c.h.b16 %v3794
    %v4508 = vunpack.c.l.b16 %v3795
    %v4509 = vunpack.c.h.b16 %v3795
    %v4510 = vunpack.c.l.b16 %v3796
    %v4511 = vunpack.c.h.b16 %v3796
    %v4512 = vunpack.c.l.b16 %v3797
    %v4513 = vunpack.c.h.b16 %v3797
    %v4514 = vunpack.c.l.b16 %v3798
    %v4515 = vunpack.c.h.b16 %v3798
    %v4516 = vunpack.c.l.b16 %v3799
    %v4517 = vunpack.c.h.b16 %v3799
    %v4518 = vunpack.c.l.b16 %v3800
    %v4519 = vunpack.c.h.b16 %v3800
    %v4520 = vunpack.c.l.b16 %v3801
    %v4521 = vunpack.c.h.b16 %v3801
    %v4522 = vunpack.c.l.b16 %v3802
    %v4523 = vunpack.c.h.b16 %v3802
    %v4524 = vunpack.c.l.b16 %v3803
    %v4525 = vunpack.c.h.b16 %v3803
    %v4526 = vunpack.c.l.b16 %v3804
    %v4527 = vunpack.c.h.b16 %v3804
    %v4528 = vunpack.c.l.b16 %v3805
    %v4529 = vunpack.c.h.b16 %v3805
    %v4530 = vunpack.c.l.b16 %v3806
    %v4531 = vunpack.c.h.b16 %v3806
    %v4532 = vunpack.c.l.b16 %v3807
    %v4533 = vunpack.c.h.b16 %v3807
    %v4534 = vunpack.c.l.b16 %v3808
    %v4535 = vunpack.c.h.b16 %v3808
    %v4536 = vunpack.c.l.b16 %v3809
    %v4537 = vunpack.c.h.b16 %v3809
    %v4538 = vunpack.c.l.b16 %v3810
    %v4539 = vunpack.c.h.b16 %v3810
    %v4540 = vunpack.c.l.b16 %v3811
    %v4541 = vunpack.c.h.b16 %v3811
    %v4542 = vunpack.c.l.b16 %v3812
    %v4543 = vunpack.c.h.b16 %v3812
    %v4544 = vunpack.c.l.b16 %v3813
    %v4545 = vunpack.c.h.b16 %v3813
    %v4546 = vunpack.c.l.b16 %v3814
    %v4547 = vunpack.c.h.b16 %v3814
    %v4548 = vunpack.c.l.b16 %v3815
    %v4549 = vunpack.c.h.b16 %v3815
    %v4550 = vunpack.c.l.b16 %v3816
    %v4551 = vunpack.c.h.b16 %v3816
    %v4552 = vunpack.c.l.b16 %v3817
    %v4553 = vunpack.c.h.b16 %v3817
    %v4554 = vunpack.c.l.b16 %v3818
    %v4555 = vunpack.c.h.b16 %v3818
    %v4556 = vunpack.c.l.b16 %v3819
    %v4557 = vunpack.c.h.b16 %v3819
    %v4558 = vunpack.c.l.b16 %v3820
    %v4559 = vunpack.c.h.b16 %v3820
    %v4560 = vunpack.c.l.b16 %v3821
    %v4561 = vunpack.c.h.b16 %v3821
    %v4562 = vunpack.c.l.b16 %v3822
    %v4563 = vunpack.c.h.b16 %v3822
    %v4564 = vunpack.c.l.b16 %v3823
    %v4565 = vunpack.c.h.b16 %v3823
    %v4566 = vunpack.c.l.b16 %v3824
    %v4567 = vunpack.c.h.b16 %v3824
    %v4568 = vunpack.c.l.b16 %v3825
    %v4569 = vunpack.c.h.b16 %v3825
    %v4570 = vunpack.c.l.b16 %v3826
    %v4571 = vunpack.c.h.b16 %v3826
    %v4572 = vunpack.c.l.b16 %v3827
    %v4573 = vunpack.c.h.b16 %v3827
    %v4574 = vunpack.c.l.b16 %v3828
    %v4575 = vunpack.c.h.b16 %v3828
    %v4576 = vunpack.c.l.b16 %v3829
    %v4577 = vunpack.c.h.b16 %v3829
    %v4578 = vunpack.c.l.b16 %v3830
    %v4579 = vunpack.c.h.b16 %v3830
    %v4580 = vunpack.c.l.b16 %v3831
    %v4581 = vunpack.c.h.b16 %v3831
    %v4582 = vunpack.c.l.b16 %v3832
    %v4583 = vunpack.c.h.b16 %v3832
    %v4584 = vunpack.c.l.b16 %v3833
    %v4585 = vunpack.c.h.b16 %v3833
    %v4586 = vunpack.c.l.b16 %v3834
    %v4587 = vunpack.c.h.b16 %v3834
    %v4588 = vunpack.c.l.b16 %v3835
    %v4589 = vunpack.c.h.b16 %v3835
    %v4590 = vunpack.c.l.b16 %v3836
    %v4591 = vunpack.c.h.b16 %v3836
    %v4592 = vunpack.c.l.b16 %v3837
    %v4593 = vunpack.c.h.b16 %v3837
    %v4594 = vunpack.c.l.b16 %v3838
    %v4595 = vunpack.c.h.b16 %v3838
    %v4596 = vunpack.c.l.b16 %v3839
    %v4597 = vunpack.c.h.b16 %v3839
    %v4598 = vunpack.c.l.b16 %v3840
    %v4599 = vunpack.c.h.b16 %v3840
    %v4600 = vunpack.c.l.b16 %v3841
    %v4601 = vunpack.c.h.b16 %v3841
    %v4602 = vunpack.c.l.b16 %v3842
    %v4603 = vunpack.c.h.b16 %v3842
    %v4604 = vunpack.c.l.b16 %v3843
    %v4605 = vunpack.c.h.b16 %v3843
    %v4606 = vunpack.c.l.b16 %v3844
    %v4607 = vunpack.c.h.b16 %v3844
    %v4608 = vunpack.c.l.b16 %v3845
    %v4609 = vunpack.c.h.b16 %v3845
    %v4610 = vunpack.c.l.b16 %v3846
    %v4611 = vunpack.c.h.b16 %v3846
    %v4612 = vunpack.c.l.b16 %v3847
    %v4613 = vunpack.c.h.b16 %v3847
    %v4614 = vunpack.c.l.b16 %v3848
    %v4615 = vunpack.c.h.b16 %v3848
    %v4616 = vunpack.c.l.b16 %v3849
    %v4617 = vunpack.c.h.b16 %v3849
    %v4618 = vunpack.c.l.b16 %v3850
    %v4619 = vunpack.c.h.b16 %v3850
    %v4620 = vunpack.c.l.b16 %v3851
    %v4621 = vunpack.c.h.b16 %v3851
    %v4622 = vunpack.c.l.b16 %v3852
    %v4623 = vunpack.c.h.b16 %v3852
    %v4624 = vunpack.c.l.b16 %v3853
    %v4625 = vunpack.c.h.b16 %v3853
    %v4626 = vunpack.c.l.b16 %v3854
    %v4627 = vunpack.c.h.b16 %v3854
    %v4628 = vunpack.c.l.b16 %v3855
    %v4629 = vunpack.c.h.b16 %v3855
    %v4630 = vunpack.c.l.b16 %v3856
    %v4631 = vunpack.c.h.b16 %v3856
    %v4632 = vunpack.c.l.b16 %v3857
    %v4633 = vunpack.c.h.b16 %v3857
    %v4634 = vunpack.c.l.b16 %v3858
    %v4635 = vunpack.c.h.b16 %v3858
    %v4636 = vunpack.c.l.b16 %v3859
    %v4637 = vunpack.c.h.b16 %v3859
    %v4638 = vunpack.c.l.b16 %v3860
    %v4639 = vunpack.c.h.b16 %v3860
    %v4640 = vunpack.c.l.b16 %v3861
    %v4641 = vunpack.c.h.b16 %v3861
    %v4642 = vunpack.c.l.b16 %v3862
    %v4643 = vunpack.c.h.b16 %v3862
    %v4644 = vunpack.c.l.b16 %v3863
    %v4645 = vunpack.c.h.b16 %v3863
    %v4646 = vunpack.c.l.b16 %v3864
    %v4647 = vunpack.c.h.b16 %v3864
    %v4648 = vunpack.c.l.b16 %v3865
    %v4649 = vunpack.c.h.b16 %v3865
    %v4650 = vunpack.c.l.b16 %v3866
    %v4651 = vunpack.c.h.b16 %v3866
    %v4652 = vunpack.c.l.b16 %v3867
    %v4653 = vunpack.c.h.b16 %v3867
    %v4654 = vunpack.c.l.b16 %v3868
    %v4655 = vunpack.c.h.b16 %v3868
    %v4656 = vunpack.c.l.b16 %v3869
    %v4657 = vunpack.c.h.b16 %v3869
    %v4658 = vunpack.c.l.b16 %v3870
    %v4659 = vunpack.c.h.b16 %v3870
    %v4660 = vunpack.c.l.b16 %v3871
    %v4661 = vunpack.c.h.b16 %v3871
    %v4662 = vunpack.c.l.b16 %v3872
    %v4663 = vunpack.c.h.b16 %v3872
    %v4664 = vunpack.c.l.b16 %v3873
    %v4665 = vunpack.c.h.b16 %v3873
    %v4666 = vunpack.c.l.b16 %v3874
    %v4667 = vunpack.c.h.b16 %v3874
    %v4668 = vunpack.c.l.b16 %v3875
    %v4669 = vunpack.c.h.b16 %v3875
    %v4670 = vunpack.c.l.b16 %v3876
    %v4671 = vunpack.c.h.b16 %v3876
    %v4672 = vunpack.c.l.b16 %v3877
    %v4673 = vunpack.c.h.b16 %v3877
    %v4674 = vunpack.c.l.b16 %v3878
    %v4675 = vunpack.c.h.b16 %v3878
    %v4676 = vunpack.c.l.b16 %v3879
    %v4677 = vunpack.c.h.b16 %v3879
    %v4678 = vunpack.c.l.b16 %v3880
    %v4679 = vunpack.c.h.b16 %v3880
    %v4680 = vunpack.c.l.b16 %v3881
    %v4681 = vunpack.c.h.b16 %v3881
    %v4682 = vunpack.c.l.b16 %v3882
    %v4683 = vunpack.c.h.b16 %v3882
    %v4684 = vunpack.c.l.b16 %v3883
    %v4685 = vunpack.c.h.b16 %v3883
    %v4686 = vunpack.c.l.b16 %v3884
    %v4687 = vunpack.c.h.b16 %v3884
    %v4688 = vunpack.c.l.b16 %v3885
    %v4689 = vunpack.c.h.b16 %v3885
    %v4690 = vunpack.c.l.b16 %v3886
    %v4691 = vunpack.c.h.b16 %v3886
    %v4692 = vunpack.c.l.b16 %v3887
    %v4693 = vunpack.c.h.b16 %v3887
    %v4694 = vunpack.c.l.b16 %v3888
    %v4695 = vunpack.c.h.b16 %v3888
    %v4696 = vunpack.c.l.b16 %v3889
    %v4697 = vunpack.c.h.b16 %v3889
    %v4698 = vunpack.c.l.b16 %v3890
    %v4699 = vunpack.c.h.b16 %v3890
    %v4700 = vunpack.c.l.b16 %v3891
    %v4701 = vunpack.c.h.b16 %v3891
    %v4702 = vunpack.c.l.b16 %v3892
    %v4703 = vunpack.c.h.b16 %v3892
    %v4704 = vunpack.c.l.b16 %v3893
    %v4705 = vunpack.c.h.b16 %v3893
    %v4706 = vunpack.c.l.b16 %v3894
    %v4707 = vunpack.c.h.b16 %v3894
    %v4708 = vunpack.c.l.b16 %v3895
    %v4709 = vunpack.c.h.b16 %v3895
    %v4710 = vunpack.c.l.b16 %v3896
    %v4711 = vunpack.c.h.b16 %v3896
    %v4712 = vunpack.c.l.b16 %v3897
    %v4713 = vunpack.c.h.b16 %v3897
    %v4714 = vunpack.c.l.b16 %v3898
    %v4715 = vunpack.c.h.b16 %v3898
    %v4716 = vunpack.c.l.b16 %v3899
    %v4717 = vunpack.c.h.b16 %v3899
    %v4718 = vunpack.c.l.b16 %v3900
    %v4719 = vunpack.c.h.b16 %v3900
    %v4720 = vunpack.c.l.b16 %v3901
    %v4721 = vunpack.c.h.b16 %v3901
    %v4722 = vunpack.c.l.b16 %v3902
    %v4723 = vunpack.c.h.b16 %v3902
    %v4724 = vunpack.c.l.b16 %v3903
    %v4725 = vunpack.c.h.b16 %v3903
    %v4726 = vunpack.c.l.b16 %v3904
    %v4727 = vunpack.c.h.b16 %v3904
    %v4728 = vunpack.c.l.b16 %v3905
    %v4729 = vunpack.c.h.b16 %v3905
    %v4730 = vunpack.c.l.b16 %v3906
    %v4731 = vunpack.c.h.b16 %v3906
    %v4732 = vunpack.c.l.b16 %v3907
    %v4733 = vunpack.c.h.b16 %v3907
    %v4734 = vunpack.c.l.b16 %v3908
    %v4735 = vunpack.c.h.b16 %v3908
    %v4736 = vunpack.c.l.b16 %v3909
    %v4737 = vunpack.c.h.b16 %v3909
    %v4738 = vunpack.c.l.b16 %v3910
    %v4739 = vunpack.c.h.b16 %v3910
    %v4740 = vunpack.c.l.b16 %v3911
    %v4741 = vunpack.c.h.b16 %v3911
    %v4742 = vunpack.c.l.b16 %v3912
    %v4743 = vunpack.c.h.b16 %v3912
    %v4744 = vunpack.c.l.b16 %v3913
    %v4745 = vunpack.c.h.b16 %v3913
    %v4746 = vunpack.c.l.b16 %v3914
    %v4747 = vunpack.c.h.b16 %v3914
    %v4748 = vunpack.c.l.b16 %v3915
    %v4749 = vunpack.c.h.b16 %v3915
    %v4750 = vunpack.c.l.b16 %v3916
    %v4751 = vunpack.c.h.b16 %v3916
    %v4752 = vunpack.c.l.b16 %v3917
    %v4753 = vunpack.c.h.b16 %v3917
    %v4754 = vunpack.c.l.b16 %v3918
    %v4755 = vunpack.c.h.b16 %v3918
    %v4756 = vunpack.c.l.b16 %v3919
    %v4757 = vunpack.c.h.b16 %v3919
    %v4758 = vunpack.c.l.b16 %v3920
    %v4759 = vunpack.c.h.b16 %v3920
    %v4760 = vunpack.c.l.b16 %v3921
    %v4761 = vunpack.c.h.b16 %v3921
    %v4762 = vunpack.c.l.b16 %v3922
    %v4763 = vunpack.c.h.b16 %v3922
    %v4764 = vunpack.c.l.b16 %v3923
    %v4765 = vunpack.c.h.b16 %v3923
    %v4766 = vunpack.c.l.b16 %v3924
    %v4767 = vunpack.c.h.b16 %v3924
    %v4768 = vunpack.c.l.b16 %v3925
    %v4769 = vunpack.c.h.b16 %v3925
    %v4770 = vunpack.c.l.b16 %v3926
    %v4771 = vunpack.c.h.b16 %v3926
    %v4772 = vunpack.c.l.b16 %v3927
    %v4773 = vunpack.c.h.b16 %v3927
    %v4774 = vunpack.c.l.b16 %v3928
    %v4775 = vunpack.c.h.b16 %v3928
    %v4776 = vunpack.c.l.b16 %v3929
    %v4777 = vunpack.c.h.b16 %v3929
    %v4778 = vunpack.c.l.b16 %v3930
    %v4779 = vunpack.c.h.b16 %v3930
    %v4780 = vunpack.c.l.b16 %v3931
    %v4781 = vunpack.c.h.b16 %v3931
    %v4782 = vunpack.c.l.b16 %v3932
    %v4783 = vunpack.c.h.b16 %v3932
    %v4784 = vunpack.c.l.b16 %v3933
    %v4785 = vunpack.c.h.b16 %v3933
    %v4786 = vunpack.c.l.b16 %v3934
    %v4787 = vunpack.c.h.b16 %v3934
    %v4788 = vunpack.c.l.b16 %v3935
    %v4789 = vunpack.c.h.b16 %v3935
    %v4790 = vunpack.c.l.b16 %v3936
    %v4791 = vunpack.c.h.b16 %v3936
    %v4792 = vunpack.c.l.b16 %v3937
    %v4793 = vunpack.c.h.b16 %v3937
    %v4794 = vunpack.c.l.b16 %v3938
    %v4795 = vunpack.c.h.b16 %v3938
    %v4796 = vunpack.c.l.b16 %v3939
    %v4797 = vunpack.c.h.b16 %v3939
    %v4798 = vunpack.c.l.b16 %v3940
    %v4799 = vunpack.c.h.b16 %v3940
    %v4800 = vunpack.c.l.b16 %v3941
    %v4801 = vunpack.c.h.b16 %v3941
    %v4802 = vunpack.c.l.b16 %v3942
    %v4803 = vunpack.c.h.b16 %v3942
    %v4804 = vunpack.c.l.b16 %v3943
    %v4805 = vunpack.c.h.b16 %v3943
    %v4806 = vunpack.c.l.b16 %v3944
    %v4807 = vunpack.c.h.b16 %v3944
    %v4808 = vunpack.c.l.b16 %v3945
    %v4809 = vunpack.c.h.b16 %v3945
    %v4810 = vunpack.c.l.b16 %v3946
    %v4811 = vunpack.c.h.b16 %v3946
    %v4812 = vunpack.c.l.b16 %v3947
    %v4813 = vunpack.c.h.b16 %v3947
    %v4814 = vunpack.c.l.b16 %v3948
    %v4815 = vunpack.c.h.b16 %v3948
    %v4816 = vunpack.c.l.b16 %v3949
    %v4817 = vunpack.c.h.b16 %v3949
    %v4818 = vunpack.c.l.b16 %v3950
    %v4819 = vunpack.c.h.b16 %v3950
    %v4820 = vunpack.c.l.b16 %v3951
    %v4821 = vunpack.c.h.b16 %v3951
    %v4822 = vunpack.c.l.b16 %v3952
    %v4823 = vunpack.c.h.b16 %v3952
    %v4824 = vunpack.c.l.b16 %v3953
    %v4825 = vunpack.c.h.b16 %v3953
    %v4826 = vunpack.c.l.b16 %v3954
    %v4827 = vunpack.c.h.b16 %v3954
    %v4828 = vunpack.c.l.b16 %v3955
    %v4829 = vunpack.c.h.b16 %v3955
    %v4830 = vunpack.c.l.b16 %v3956
    %v4831 = vunpack.c.h.b16 %v3956
    %v4832 = vunpack.c.l.b16 %v3957
    %v4833 = vunpack.c.h.b16 %v3957
    %v4834 = vunpack.c.l.b16 %v3958
    %v4835 = vunpack.c.h.b16 %v3958
    %v4836 = vunpack.c.l.b16 %v3959
    %v4837 = vunpack.c.h.b16 %v3959
    %v4838 = vunpack.c.l.b16 %v3960
    %v4839 = vunpack.c.h.b16 %v3960
    %v4840 = vunpack.c.l.b16 %v3961
    %v4841 = vunpack.c.h.b16 %v3961
    %v4842 = vunpack.c.l.b16 %v3962
    %v4843 = vunpack.c.h.b16 %v3962
    %v4844 = vunpack.c.l.b16 %v3963
    %v4845 = vunpack.c.h.b16 %v3963
    %v4846 = vunpack.c.l.b16 %v3964
    %v4847 = vunpack.c.h.b16 %v3964
    %v4848 = vunpack.c.l.b16 %v3965
    %v4849 = vunpack.c.h.b16 %v3965
    %v4850 = vunpack.c.l.b16 %v3966
    %v4851 = vunpack.c.h.b16 %v3966
    %v4852 = vunpack.c.l.b16 %v3967
    %v4853 = vunpack.c.h.b16 %v3967
    %v4854 = vunpack.c.l.b16 %v3968
    %v4855 = vunpack.c.h.b16 %v3968
    %v4856 = vunpack.c.l.b16 %v3969
    %v4857 = vunpack.c.h.b16 %v3969
    %v4858 = vunpack.c.l.b16 %v3970
    %v4859 = vunpack.c.h.b16 %v3970
    %v4860 = vunpack.c.l.b16 %v3971
    %v4861 = vunpack.c.h.b16 %v3971
    %v4862 = vunpack.c.l.b16 %v3972
    %v4863 = vunpack.c.h.b16 %v3972
    %v4864 = vunpack.c.l.b16 %v3973
    %v4865 = vunpack.c.h.b16 %v3973
    %v4866 = vunpack.c.l.b16 %v3974
    %v4867 = vunpack.c.h.b16 %v3974
    %v4868 = vunpack.c.l.b16 %v3975
    %v4869 = vunpack.c.h.b16 %v3975
    %v4870 = vunpack.c.l.b16 %v3976
    %v4871 = vunpack.c.h.b16 %v3976
    %v4872 = vpack.c.b16 %v4302, %v4296
    %v4873 = vpack.c.b16 %v4303, %v4297
    %v4874 = vpack.c.b16 %v4304, %v4298
    %v4875 = vpack.c.b16 %v4305, %v4299
    %v4876 = vpack.c.b16 %v4306, %v4300
    %v4877 = vpack.c.b16 %v4307, %v4301
    %v4878 = vpack.c.b16 %v4314, %v4308
    %v4879 = vpack.c.b16 %v4315, %v4309
    %v4880 = vpack.c.b16 %v4316, %v4310
    %v4881 = vpack.c.b16 %v4317, %v4311
    %v4882 = vpack.c.b16 %v4318, %v4312
    %v4883 = vpack.c.b16 %v4319, %v4313
    %v4884 = vpack.c.b16 %v4326, %v4320
    %v4885 = vpack.c.b16 %v4327, %v4321
    %v4886 = vpack.c.b16 %v4328, %v4322
    %v4887 = vpack.c.b16 %v4329, %v4323
    %v4888 = vpack.c.b16 %v4330, %v4324
    %v4889 = vpack.c.b16 %v4331, %v4325
    %v4890 = vpack.c.b16 %v4338, %v4332
    %v4891 = vpack.c.b16 %v4339, %v4333
    %v4892 = vpack.c.b16 %v4340, %v4334
    %v4893 = vpack.c.b16 %v4341, %v4335
    %v4894 = vpack.c.b16 %v4342, %v4336
    %v4895 = vpack.c.b16 %v4343, %v4337
    %v4896 = vpack.c.b16 %v4350, %v4344
    %v4897 = vpack.c.b16 %v4351, %v4345
    %v4898 = vpack.c.b16 %v4352, %v4346
    %v4899 = vpack.c.b16 %v4353, %v4347
    %v4900 = vpack.c.b16 %v4354, %v4348
    %v4901 = vpack.c.b16 %v4355, %v4349
    %v4902 = vpack.c.b16 %v4362, %v4356
    %v4903 = vpack.c.b16 %v4363, %v4357
    %v4904 = vpack.c.b16 %v4364, %v4358
    %v4905 = vpack.c.b16 %v4365, %v4359
    %v4906 = vpack.c.b16 %v4366, %v4360
    %v4907 = vpack.c.b16 %v4367, %v4361
    %v4908 = vpack.c.b16 %v4374, %v4368
    %v4909 = vpack.c.b16 %v4375, %v4369
    %v4910 = vpack.c.b16 %v4376, %v4370
    %v4911 = vpack.c.b16 %v4377, %v4371
    %v4912 = vpack.c.b16 %v4378, %v4372
    %v4913 = vpack.c.b16 %v4379, %v4373
    %v4914 = vpack.c.b16 %v4386, %v4380
    %v4915 = vpack.c.b16 %v4387, %v4381
    %v4916 = vpack.c.b16 %v4388, %v4382
    %v4917 = vpack.c.b16 %v4389, %v4383
    %v4918 = vpack.c.b16 %v4390, %v4384
    %v4919 = vpack.c.b16 %v4391, %v4385
    %v4920 = vpack.c.b16 %v4398, %v4392
    %v4921 = vpack.c.b16 %v4399, %v4393
    %v4922 = vpack.c.b16 %v4400, %v4394
    %v4923 = vpack.c.b16 %v4401, %v4395
    %v4924 = vpack.c.b16 %v4402, %v4396
    %v4925 = vpack.c.b16 %v4403, %v4397
    %v4926 = vpack.c.b16 %v4410, %v4404
    %v4927 = vpack.c.b16 %v4411, %v4405
    %v4928 = vpack.c.b16 %v4412, %v4406
    %v4929 = vpack.c.b16 %v4413, %v4407
    %v4930 = vpack.c.b16 %v4414, %v4408
    %v4931 = vpack.c.b16 %v4415, %v4409
    %v4932 = vpack.c.b16 %v4422, %v4416
    %v4933 = vpack.c.b16 %v4423, %v4417
    %v4934 = vpack.c.b16 %v4424, %v4418
    %v4935 = vpack.c.b16 %v4425, %v4419
    %v4936 = vpack.c.b16 %v4426, %v4420
    %v4937 = vpack.c.b16 %v4427, %v4421
    %v4938 = vpack.c.b16 %v4434, %v4428
    %v4939 = vpack.c.b16 %v4435, %v4429
    %v4940 = vpack.c.b16 %v4436, %v4430
    %v4941 = vpack.c.b16 %v4437, %v4431
    %v4942 = vpack.c.b16 %v4438, %v4432
    %v4943 = vpack.c.b16 %v4439, %v4433
    %v4944 = vpack.c.b16 %v4446, %v4440
    %v4945 = vpack.c.b16 %v4447, %v4441
    %v4946 = vpack.c.b16 %v4448, %v4442
    %v4947 = vpack.c.b16 %v4449, %v4443
    %v4948 = vpack.c.b16 %v4450, %v4444
    %v4949 = vpack.c.b16 %v4451, %v4445
    %v4950 = vpack.c.b16 %v4458, %v4452
    %v4951 = vpack.c.b16 %v4459, %v4453
    %v4952 = vpack.c.b16 %v4460, %v4454
    %v4953 = vpack.c.b16 %v4461, %v4455
    %v4954 = vpack.c.b16 %v4462, %v4456
    %v4955 = vpack.c.b16 %v4463, %v4457
    %v4956 = vpack.c.b16 %v4470, %v4464
    %v4957 = vpack.c.b16 %v4471, %v4465
    %v4958 = vpack.c.b16 %v4472, %v4466
    %v4959 = vpack.c.b16 %v4473, %v4467
    %v4960 = vpack.c.b16 %v4474, %v4468
    %v4961 = vpack.c.b16 %v4475, %v4469
    %v4962 = vpack.c.b16 %v4482, %v4476
    %v4963 = vpack.c.b16 %v4483, %v4477
    %v4964 = vpack.c.b16 %v4484, %v4478
    %v4965 = vpack.c.b16 %v4485, %v4479
    %v4966 = vpack.c.b16 %v4486, %v4480
    %v4967 = vpack.c.b16 %v4487, %v4481
    %v4968 = vpack.c.b16 %v4494, %v4488
    %v4969 = vpack.c.b16 %v4495, %v4489
    %v4970 = vpack.c.b16 %v4496, %v4490
    %v4971 = vpack.c.b16 %v4497, %v4491
    %v4972 = vpack.c.b16 %v4498, %v4492
    %v4973 = vpack.c.b16 %v4499, %v4493
    %v4974 = vpack.c.b16 %v4506, %v4500
    %v4975 = vpack.c.b16 %v4507, %v4501
    %v4976 = vpack.c.b16 %v4508, %v4502
    %v4977 = vpack.c.b16 %v4509, %v4503
    %v4978 = vpack.c.b16 %v4510, %v4504
    %v4979 = vpack.c.b16 %v4511, %v4505
    %v4980 = vpack.c.b16 %v4518, %v4512
    %v4981 = vpack.c.b16 %v4519, %v4513
    %v4982 = vpack.c.b16 %v4520, %v4514
    %v4983 = vpack.c.b16 %v4521, %v4515
    %v4984 = vpack.c.b16 %v4522, %v4516
    %v4985 = vpack.c.b16 %v4523, %v4517
    %v4986 = vpack.c.b16 %v4530, %v4524
    %v4987 = vpack.c.b16 %v4531, %v4525
    %v4988 = vpack.c.b16 %v4532, %v4526
    %v4989 = vpack.c.b16 %v4533, %v4527
    %v4990 = vpack.c.b16 %v4534, %v4528
    %v4991 = vpack.c.b16 %v4535, %v4529
    %v4992 = vpack.c.b16 %v4542, %v4536
    %v4993 = vpack.c.b16 %v4543, %v4537
    %v4994 = vpack.c.b16 %v4544, %v4538
    %v4995 = vpack.c.b16 %v4545, %v4539
    %v4996 = vpack.c.b16 %v4546, %v4540
    %v4997 = vpack.c.b16 %v4547, %v4541
    %v4998 = vpack.c.b16 %v4554, %v4548
    %v4999 = vpack.c.b16 %v4555, %v4549
    %v5000 = vpack.c.b16 %v4556, %v4550
    %v5001 = vpack.c.b16 %v4557, %v4551
    %v5002 = vpack.c.b16 %v4558, %v4552
    %v5003 = vpack.c.b16 %v4559, %v4553
    %v5004 = vpack.c.b16 %v4566, %v4560
    %v5005 = vpack.c.b16 %v4567, %v4561
    %v5006 = vpack.c.b16 %v4568, %v4562
    %v5007 = vpack.c.b16 %v4569, %v4563
    %v5008 = vpack.c.b16 %v4570, %v4564
    %v5009 = vpack.c.b16 %v4571, %v4565
    %v5010 = vpack.c.b16 %v4578, %v4572
    %v5011 = vpack.c.b16 %v4579, %v4573
    %v5012 = vpack.c.b16 %v4580, %v4574
    %v5013 = vpack.c.b16 %v4581, %v4575
    %v5014 = vpack.c.b16 %v4582, %v4576
    %v5015 = vpack.c.b16 %v4583, %v4577
    %v5016 = vpack.c.b16 %v4590, %v4584
    %v5017 = vpack.c.b16 %v4591, %v4585
    %v5018 = vpack.c.b16 %v4592, %v4586
    %v5019 = vpack.c.b16 %v4593, %v4587
    %v5020 = vpack.c.b16 %v4594, %v4588
    %v5021 = vpack.c.b16 %v4595, %v4589
    %v5022 = vpack.c.b16 %v4602, %v4596
    %v5023 = vpack.c.b16 %v4603, %v4597
    %v5024 = vpack.c.b16 %v4604, %v4598
    %v5025 = vpack.c.b16 %v4605, %v4599
    %v5026 = vpack.c.b16 %v4606, %v4600
    %v5027 = vpack.c.b16 %v4607, %v4601
    %v5028 = vpack.c.b16 %v4614, %v4608
    %v5029 = vpack.c.b16 %v4615, %v4609
    %v5030 = vpack.c.b16 %v4616, %v4610
    %v5031 = vpack.c.b16 %v4617, %v4611
    %v5032 = vpack.c.b16 %v4618, %v4612
    %v5033 = vpack.c.b16 %v4619, %v4613
    %v5034 = vpack.c.b16 %v4626, %v4620
    %v5035 = vpack.c.b16 %v4627, %v4621
    %v5036 = vpack.c.b16 %v4628, %v4622
    %v5037 = vpack.c.b16 %v4629, %v4623
    %v5038 = vpack.c.b16 %v4630, %v4624
    %v5039 = vpack.c.b16 %v4631, %v4625
    %v5040 = vpack.c.b16 %v4638, %v4632
    %v5041 = vpack.c.b16 %v4639, %v4633
    %v5042 = vpack.c.b16 %v4640, %v4634
    %v5043 = vpack.c.b16 %v4641, %v4635
    %v5044 = vpack.c.b16 %v4642, %v4636
    %v5045 = vpack.c.b16 %v4643, %v4637
    %v5046 = vpack.c.b16 %v4650, %v4644
    %v5047 = vpack.c.b16 %v4651, %v4645
    %v5048 = vpack.c.b16 %v4652, %v4646
    %v5049 = vpack.c.b16 %v4653, %v4647
    %v5050 = vpack.c.b16 %v4654, %v4648
    %v5051 = vpack.c.b16 %v4655, %v4649
    %v5052 = vpack.c.b16 %v4662, %v4656
    %v5053 = vpack.c.b16 %v4663, %v4657
    %v5054 = vpack.c.b16 %v4664, %v4658
    %v5055 = vpack.c.b16 %v4665, %v4659
    %v5056 = vpack.c.b16 %v4666, %v4660
    %v5057 = vpack.c.b16 %v4667, %v4661
    %v5058 = vpack.c.b16 %v4674, %v4668
    %v5059 = vpack.c.b16 %v4675, %v4669
    %v5060 = vpack.c.b16 %v4676, %v4670
    %v5061 = vpack.c.b16 %v4677, %v4671
    %v5062 = vpack.c.b16 %v4678, %v4672
    %v5063 = vpack.c.b16 %v4679, %v4673
    %v5064 = vpack.c.b16 %v4686, %v4680
    %v5065 = vpack.c.b16 %v4687, %v4681
    %v5066 = vpack.c.b16 %v4688, %v4682
    %v5067 = vpack.c.b16 %v4689, %v4683
    %v5068 = vpack.c.b16 %v4690, %v4684
    %v5069 = vpack.c.b16 %v4691, %v4685
    %v5070 = vpack.c.b16 %v4698, %v4692
    %v5071 = vpack.c.b16 %v4699, %v4693
    %v5072 = vpack.c.b16 %v4700, %v4694
    %v5073 = vpack.c.b16 %v4701, %v4695
    %v5074 = vpack.c.b16 %v4702, %v4696
    %v5075 = vpack.c.b16 %v4703, %v4697
    %v5076 = vpack.c.b16 %v4710, %v4704
    %v5077 = vpack.c.b16 %v4711, %v4705
    %v5078 = vpack.c.b16 %v4712, %v4706
    %v5079 = vpack.c.b16 %v4713, %v4707
    %v5080 = vpack.c.b16 %v4714, %v4708
    %v5081 = vpack.c.b16 %v4715, %v4709
    %v5082 = vpack.c.b16 %v4722, %v4716
    %v5083 = vpack.c.b16 %v4723, %v4717
    %v5084 = vpack.c.b16 %v4724, %v4718
    %v5085 = vpack.c.b16 %v4725, %v4719
    %v5086 = vpack.c.b16 %v4726, %v4720
    %v5087 = vpack.c.b16 %v4727, %v4721
    %v5088 = vpack.c.b16 %v4734, %v4728
    %v5089 = vpack.c.b16 %v4735, %v4729
    %v5090 = vpack.c.b16 %v4736, %v4730
    %v5091 = vpack.c.b16 %v4737, %v4731
    %v5092 = vpack.c.b16 %v4738, %v4732
    %v5093 = vpack.c.b16 %v4739, %v4733
    %v5094 = vpack.c.b16 %v4746, %v4740
    %v5095 = vpack.c.b16 %v4747, %v4741
    %v5096 = vpack.c.b16 %v4748, %v4742
    %v5097 = vpack.c.b16 %v4749, %v4743
    %v5098 = vpack.c.b16 %v4750, %v4744
    %v5099 = vpack.c.b16 %v4751, %v4745
    %v5100 = vpack.c.b16 %v4758, %v4752
    %v5101 = vpack.c.b16 %v4759, %v4753
    %v5102 = vpack.c.b16 %v4760, %v4754
    %v5103 = vpack.c.b16 %v4761, %v4755
    %v5104 = vpack.c.b16 %v4762, %v4756
    %v5105 = vpack.c.b16 %v4763, %v4757
    %v5106 = vpack.c.b16 %v4770, %v4764
    %v5107 = vpack.c.b16 %v4771, %v4765
    %v5108 = vpack.c.b16 %v4772, %v4766
    %v5109 = vpack.c.b16 %v4773, %v4767
    %v5110 = vpack.c.b16 %v4774, %v4768
    %v5111 = vpack.c.b16 %v4775, %v4769
    %v5112 = vpack.c.b16 %v4782, %v4776
    %v5113 = vpack.c.b16 %v4783, %v4777
    %v5114 = vpack.c.b16 %v4784, %v4778
    %v5115 = vpack.c.b16 %v4785, %v4779
    %v5116 = vpack.c.b16 %v4786, %v4780
    %v5117 = vpack.c.b16 %v4787, %v4781
    %v5118 = vpack.c.b16 %v4794, %v4788
    %v5119 = vpack.c.b16 %v4795, %v4789
    %v5120 = vpack.c.b16 %v4796, %v4790
    %v5121 = vpack.c.b16 %v4797, %v4791
    %v5122 = vpack.c.b16 %v4798, %v4792
    %v5123 = vpack.c.b16 %v4799, %v4793
    %v5124 = vpack.c.b16 %v4806, %v4800
    %v5125 = vpack.c.b16 %v4807, %v4801
    %v5126 = vpack.c.b16 %v4808, %v4802
    %v5127 = vpack.c.b16 %v4809, %v4803
    %v5128 = vpack.c.b16 %v4810, %v4804
    %v5129 = vpack.c.b16 %v4811, %v4805
    %v5130 = vpack.c.b16 %v4818, %v4812
    %v5131 = vpack.c.b16 %v4819, %v4813
    %v5132 = vpack.c.b16 %v4820, %v4814
    %v5133 = vpack.c.b16 %v4821, %v4815
    %v5134 = vpack.c.b16 %v4822, %v4816
    %v5135 = vpack.c.b16 %v4823, %v4817
    %v5136 = vpack.c.b16 %v4830, %v4824
    %v5137 = vpack.c.b16 %v4831, %v4825
    %v5138 = vpack.c.b16 %v4832, %v4826
    %v5139 = vpack.c.b16 %v4833, %v4827
    %v5140 = vpack.c.b16 %v4834, %v4828
    %v5141 = vpack.c.b16 %v4835, %v4829
    %v5142 = vpack.c.b16 %v4842, %v4836
    %v5143 = vpack.c.b16 %v4843, %v4837
    %v5144 = vpack.c.b16 %v4844, %v4838
    %v5145 = vpack.c.b16 %v4845, %v4839
    %v5146 = vpack.c.b16 %v4846, %v4840
    %v5147 = vpack.c.b16 %v4847, %v4841
    %v5148 = vpack.c.b16 %v4854, %v4848
    %v5149 = vpack.c.b16 %v4855, %v4849
    %v5150 = vpack.c.b16 %v4856, %v4850
    %v5151 = vpack.c.b16 %v4857, %v4851
    %v5152 = vpack.c.b16 %v4858, %v4852
    %v5153 = vpack.c.b16 %v4859, %v4853
    %v5154 = vpack.c.b16 %v4866, %v4860
    %v5155 = vpack.c.b16 %v4867, %v4861
    %v5156 = vpack.c.b16 %v4868, %v4862
    %v5157 = vpack.c.b16 %v4869, %v4863
    %v5158 = vpack.c.b16 %v4870, %v4864
    %v5159 = vpack.c.b16 %v4871, %v4865
    %5448 = vmatprep.subr.bf16.mxu0 %v4873
    %5449 = vmatpush1.bf16.msra.mxu0 %v4872
    %5450 = vmatprep.subr.bf16.mxu0 %v4879
    %5451 = vmatpush1.bf16.msra.mxu0 %v4878
    %5452 = vmatprep.subr.bf16.mxu0 %v4885
    %5453 = vmatpush1.bf16.msra.mxu0 %v4884
    %5454 = vmatprep.subr.bf16.mxu0 %v4891
    %5455 = vmatpush1.bf16.msra.mxu0 %v4890
    %5456 = vmatprep.subr.bf16.mxu0 %v4897
    %5457 = vmatpush1.bf16.msra.mxu0 %v4896
    %5458 = vmatprep.subr.bf16.mxu0 %v4903
    %5459 = vmatpush1.bf16.msra.mxu0 %v4902
    %5460 = vmatprep.subr.bf16.mxu0 %v4909
    %5461 = vmatpush1.bf16.msra.mxu0 %v4908
    %5462 = vmatprep.subr.bf16.mxu0 %v4915
    %5463 = vmatpush1.bf16.msra.mxu0 %v4914
    %5464 = vmatprep.subr.bf16.mxu0 %v4921
    %5465 = vmatpush1.bf16.msra.mxu0 %v4920
    %5466 = vmatprep.subr.bf16.mxu0 %v4927
    %5467 = vmatpush1.bf16.msra.mxu0 %v4926
    %5468 = vmatprep.subr.bf16.mxu0 %v4933
    %5469 = vmatpush1.bf16.msra.mxu0 %v4932
    %5470 = vmatprep.subr.bf16.mxu0 %v4939
    %5471 = vmatpush1.bf16.msra.mxu0 %v4938
    %5472 = vmatprep.subr.bf16.mxu0 %v4945
    %5473 = vmatpush1.bf16.msra.mxu0 %v4944
    %5474 = vmatprep.subr.bf16.mxu0 %v4951
    %5475 = vmatpush1.bf16.msra.mxu0 %v4950
    %5476 = vmatprep.subr.bf16.mxu0 %v4957
    %5477 = vmatpush1.bf16.msra.mxu0 %v4956
    %5478 = vmatprep.subr.bf16.mxu0 %v4963
    %5479 = vmatpush1.bf16.msra.mxu0 %v4962
    %5480 = vmatprep.mubr.bf16.mxu0 %v3684
    %5481 = vmatmul.mubr.bf16.gmra.mrb[0].mxu0 %v3683
    %v5482 = vpop.f32.mrb[0].mxu0
    %v5483 = vadd.f32 %v3981, %v5482
    %v5484 = vpop.f32.mrb[0].mxu0
    %v5485 = vadd.f32 %v3985, %v5484
    %v5486 = vpop.f32.mrb[0].mxu0
    %v5487 = vpop.f32.mrb[0].mxu0
    %5488 = vdwg.mxu0
    %5489 = vmatprep.subr.bf16.mxu0 %v4969
    %5490 = vmatpush1.bf16.msra.mxu0 %v4968
    %5491 = vmatprep.subr.bf16.mxu0 %v4975
    %5492 = vmatpush1.bf16.msra.mxu0 %v4974
    %5493 = vmatprep.subr.bf16.mxu0 %v4981
    %5494 = vmatpush1.bf16.msra.mxu0 %v4980
    %5495 = vmatprep.subr.bf16.mxu0 %v4987
    %5496 = vmatpush1.bf16.msra.mxu0 %v4986
    %5497 = vmatprep.subr.bf16.mxu0 %v4993
    %5498 = vmatpush1.bf16.msra.mxu0 %v4992
    %5499 = vmatprep.subr.bf16.mxu0 %v4999
    %5500 = vmatpush1.bf16.msra.mxu0 %v4998
    %5501 = vmatprep.subr.bf16.mxu0 %v5005
    %5502 = vmatpush1.bf16.msra.mxu0 %v5004
    %5503 = vmatprep.subr.bf16.mxu0 %v5011
    %5504 = vmatpush1.bf16.msra.mxu0 %v5010
    %5505 = vmatprep.subr.bf16.mxu0 %v5017
    %5506 = vmatpush1.bf16.msra.mxu0 %v5016
    %5507 = vmatprep.subr.bf16.mxu0 %v5023
    %5508 = vmatpush1.bf16.msra.mxu0 %v5022
    %5509 = vmatprep.subr.bf16.mxu0 %v5029
    %5510 = vmatpush1.bf16.msra.mxu0 %v5028
    %5511 = vmatprep.subr.bf16.mxu0 %v5035
    %5512 = vmatpush1.bf16.msra.mxu0 %v5034
    %5513 = vmatprep.subr.bf16.mxu0 %v5041
    %5514 = vmatpush1.bf16.msra.mxu0 %v5040
    %5515 = vmatprep.subr.bf16.mxu0 %v5047
    %5516 = vmatpush1.bf16.msra.mxu0 %v5046
    %5517 = vmatprep.subr.bf16.mxu0 %v5053
    %5518 = vmatpush1.bf16.msra.mxu0 %v5052
    %5519 = vmatprep.subr.bf16.mxu0 %v5059
    %5520 = vmatpush1.bf16.msra.mxu0 %v5058
    %5521 = vmatprep.mubr.bf16.mxu0 %v3686
    %5522 = vmatmul.mubr.bf16.gmra.mrb[0].mxu0 %v3685
    %v5523 = vpop.f32.mrb[0].mxu0
    %v5524 = vadd.f32 %v5483, %v5523
    %v5525 = vpop.f32.mrb[0].mxu0
    %v5526 = vadd.f32 %v5485, %v5525
    %v5527 = vpop.f32.mrb[0].mxu0
    %v5528 = vpop.f32.mrb[0].mxu0
    %5529 = vdwg.mxu0
    %5530 = vmatprep.subr.bf16.mxu0 %v5065
    %5531 = vmatpush1.bf16.msra.mxu0 %v5064
    %5532 = vmatprep.subr.bf16.mxu0 %v5071
    %5533 = vmatpush1.bf16.msra.mxu0 %v5070
    %5534 = vmatprep.subr.bf16.mxu0 %v5077
    %5535 = vmatpush1.bf16.msra.mxu0 %v5076
    %5536 = vmatprep.subr.bf16.mxu0 %v5083
    %5537 = vmatpush1.bf16.msra.mxu0 %v5082
    %5538 = vmatprep.subr.bf16.mxu0 %v5089
    %5539 = vmatpush1.bf16.msra.mxu0 %v5088
    %5540 = vmatprep.subr.bf16.mxu0 %v5095
    %5541 = vmatpush1.bf16.msra.mxu0 %v5094
    %5542 = vmatprep.subr.bf16.mxu0 %v5101
    %5543 = vmatpush1.bf16.msra.mxu0 %v5100
    %5544 = vmatprep.subr.bf16.mxu0 %v5107
    %5545 = vmatpush1.bf16.msra.mxu0 %v5106
    %5546 = vmatprep.subr.bf16.mxu0 %v5113
    %5547 = vmatpush1.bf16.msra.mxu0 %v5112
    %5548 = vmatprep.subr.bf16.mxu0 %v5119
    %5549 = vmatpush1.bf16.msra.mxu0 %v5118
    %5550 = vmatprep.subr.bf16.mxu0 %v5125
    %5551 = vmatpush1.bf16.msra.mxu0 %v5124
    %5552 = vmatprep.subr.bf16.mxu0 %v5131
    %5553 = vmatpush1.bf16.msra.mxu0 %v5130
    %5554 = vmatprep.subr.bf16.mxu0 %v5137
    %5555 = vmatpush1.bf16.msra.mxu0 %v5136
    %5556 = vmatprep.subr.bf16.mxu0 %v5143
    %5557 = vmatpush1.bf16.msra.mxu0 %v5142
    %5558 = vmatprep.subr.bf16.mxu0 %v5149
    %5559 = vmatpush1.bf16.msra.mxu0 %v5148
    %5560 = vmatprep.subr.bf16.mxu0 %v5155
    %5561 = vmatpush1.bf16.msra.mxu0 %v5154
    %5562 = vmatprep.mubr.bf16.mxu0 %v3688
    %5563 = vmatmul.mubr.bf16.gmra.mrb[0].mxu0 %v3687
    %v5564 = vpop.f32.mrb[0].mxu0
    %v5565 = vadd.f32 %v5524, %v5564
    %v5566 = vpop.f32.mrb[0].mxu0
    %v5567 = vadd.f32 %v5526, %v5566
    %v5568 = vpop.f32.mrb[0].mxu0
    %v5569 = vpop.f32.mrb[0].mxu0
    %5570 = vdwg.mxu0
    %5571 = vmatprep.subr.bf16.mxu0 %v4875
    %5572 = vmatpush1.bf16.msra.mxu0 %v4874
    %5573 = vmatprep.subr.bf16.mxu0 %v4881
    %5574 = vmatpush1.bf16.msra.mxu0 %v4880
    %5575 = vmatprep.subr.bf16.mxu0 %v4887
    %5576 = vmatpush1.bf16.msra.mxu0 %v4886
    %5577 = vmatprep.subr.bf16.mxu0 %v4893
    %5578 = vmatpush1.bf16.msra.mxu0 %v4892
    %5579 = vmatprep.subr.bf16.mxu0 %v4899
    %5580 = vmatpush1.bf16.msra.mxu0 %v4898
    %5581 = vmatprep.subr.bf16.mxu0 %v4905
    %5582 = vmatpush1.bf16.msra.mxu0 %v4904
    %5583 = vmatprep.subr.bf16.mxu0 %v4911
    %5584 = vmatpush1.bf16.msra.mxu0 %v4910
    %5585 = vmatprep.subr.bf16.mxu0 %v4917
    %5586 = vmatpush1.bf16.msra.mxu0 %v4916
    %5587 = vmatprep.subr.bf16.mxu0 %v4923
    %5588 = vmatpush1.bf16.msra.mxu0 %v4922
    %5589 = vmatprep.subr.bf16.mxu0 %v4929
    %5590 = vmatpush1.bf16.msra.mxu0 %v4928
    %5591 = vmatprep.subr.bf16.mxu0 %v4935
    %5592 = vmatpush1.bf16.msra.mxu0 %v4934
    %5593 = vmatprep.subr.bf16.mxu0 %v4941
    %5594 = vmatpush1.bf16.msra.mxu0 %v4940
    %5595 = vmatprep.subr.bf16.mxu0 %v4947
    %5596 = vmatpush1.bf16.msra.mxu0 %v4946
    %5597 = vmatprep.subr.bf16.mxu0 %v4953
    %5598 = vmatpush1.bf16.msra.mxu0 %v4952
    %5599 = vmatprep.subr.bf16.mxu0 %v4959
    %5600 = vmatpush1.bf16.msra.mxu0 %v4958
    %5601 = vmatprep.subr.bf16.mxu0 %v4965
    %5602 = vmatpush1.bf16.msra.mxu0 %v4964
    %5603 = vmatprep.mubr.bf16.mxu0 %v3684
    %5604 = vmatmul.mubr.bf16.gmra.mrb[0].mxu0 %v3683
    %v5605 = vpop.f32.mrb[0].mxu0
    %v5606 = vadd.f32 %v3989, %v5605
    %v5607 = vpop.f32.mrb[0].mxu0
    %v5608 = vadd.f32 %v3993, %v5607
    %v5609 = vpop.f32.mrb[0].mxu0
    %v5610 = vpop.f32.mrb[0].mxu0
    %5611 = vdwg.mxu0
    %5612 = vmatprep.subr.bf16.mxu0 %v4971
    %5613 = vmatpush1.bf16.msra.mxu0 %v4970
    %5614 = vmatprep.subr.bf16.mxu0 %v4977
    %5615 = vmatpush1.bf16.msra.mxu0 %v4976
    %5616 = vmatprep.subr.bf16.mxu0 %v4983
    %5617 = vmatpush1.bf16.msra.mxu0 %v4982
    %5618 = vmatprep.subr.bf16.mxu0 %v4989
    %5619 = vmatpush1.bf16.msra.mxu0 %v4988
    %5620 = vmatprep.subr.bf16.mxu0 %v4995
    %5621 = vmatpush1.bf16.msra.mxu0 %v4994
    %5622 = vmatprep.subr.bf16.mxu0 %v5001
    %5623 = vmatpush1.bf16.msra.mxu0 %v5000
    %5624 = vmatprep.subr.bf16.mxu0 %v5007
    %5625 = vmatpush1.bf16.msra.mxu0 %v5006
    %5626 = vmatprep.subr.bf16.mxu0 %v5013
    %5627 = vmatpush1.bf16.msra.mxu0 %v5012
    %5628 = vmatprep.subr.bf16.mxu0 %v5019
    %5629 = vmatpush1.bf16.msra.mxu0 %v5018
    %5630 = vmatprep.subr.bf16.mxu0 %v5025
    %5631 = vmatpush1.bf16.msra.mxu0 %v5024
    %5632 = vmatprep.subr.bf16.mxu0 %v5031
    %5633 = vmatpush1.bf16.msra.mxu0 %v5030
    %5634 = vmatprep.subr.bf16.mxu0 %v5037
    %5635 = vmatpush1.bf16.msra.mxu0 %v5036
    %5636 = vmatprep.subr.bf16.mxu0 %v5043
    %5637 = vmatpush1.bf16.msra.mxu0 %v5042
    %5638 = vmatprep.subr.bf16.mxu0 %v5049
    %5639 = vmatpush1.bf16.msra.mxu0 %v5048
    %5640 = vmatprep.subr.bf16.mxu0 %v5055
    %5641 = vmatpush1.bf16.msra.mxu0 %v5054
    %5642 = vmatprep.subr.bf16.mxu0 %v5061
    %5643 = vmatpush1.bf16.msra.mxu0 %v5060
    %5644 = vmatprep.mubr.bf16.mxu0 %v3686
    %5645 = vmatmul.mubr.bf16.gmra.mrb[0].mxu0 %v3685
    %v5646 = vpop.f32.mrb[0].mxu0
    %v5647 = vadd.f32 %v5606, %v5646
    %v5648 = vpop.f32.mrb[0].mxu0
    %v5649 = vadd.f32 %v5608, %v5648
    %v5650 = vpop.f32.mrb[0].mxu0
    %v5651 = vpop.f32.mrb[0].mxu0
    %5652 = vdwg.mxu0
    %5653 = vmatprep.subr.bf16.mxu0 %v5067
    %5654 = vmatpush1.bf16.msra.mxu0 %v5066
    %5655 = vmatprep.subr.bf16.mxu0 %v5073
    %5656 = vmatpush1.bf16.msra.mxu0 %v5072
    %5657 = vmatprep.subr.bf16.mxu0 %v5079
    %5658 = vmatpush1.bf16.msra.mxu0 %v5078
    %5659 = vmatprep.subr.bf16.mxu0 %v5085
    %5660 = vmatpush1.bf16.msra.mxu0 %v5084
    %5661 = vmatprep.subr.bf16.mxu0 %v5091
    %5662 = vmatpush1.bf16.msra.mxu0 %v5090
    %5663 = vmatprep.subr.bf16.mxu0 %v5097
    %5664 = vmatpush1.bf16.msra.mxu0 %v5096
    %5665 = vmatprep.subr.bf16.mxu0 %v5103
    %5666 = vmatpush1.bf16.msra.mxu0 %v5102
    %5667 = vmatprep.subr.bf16.mxu0 %v5109
    %5668 = vmatpush1.bf16.msra.mxu0 %v5108
    %5669 = vmatprep.subr.bf16.mxu0 %v5115
    %5670 = vmatpush1.bf16.msra.mxu0 %v5114
    %5671 = vmatprep.subr.bf16.mxu0 %v5121
    %5672 = vmatpush1.bf16.msra.mxu0 %v5120
    %5673 = vmatprep.subr.bf16.mxu0 %v5127
    %5674 = vmatpush1.bf16.msra.mxu0 %v5126
    %5675 = vmatprep.subr.bf16.mxu0 %v5133
    %5676 = vmatpush1.bf16.msra.mxu0 %v5132
    %5677 = vmatprep.subr.bf16.mxu0 %v5139
    %5678 = vmatpush1.bf16.msra.mxu0 %v5138
    %5679 = vmatprep.subr.bf16.mxu0 %v5145
    %5680 = vmatpush1.bf16.msra.mxu0 %v5144
    %5681 = vmatprep.subr.bf16.mxu0 %v5151
    %5682 = vmatpush1.bf16.msra.mxu0 %v5150
    %5683 = vmatprep.subr.bf16.mxu0 %v5157
    %5684 = vmatpush1.bf16.msra.mxu0 %v5156
    %5685 = vmatprep.mubr.bf16.mxu0 %v3688
    %5686 = vmatmul.mubr.bf16.gmra.mrb[0].mxu0 %v3687
    %v5687 = vpop.f32.mrb[0].mxu0
    %v5688 = vadd.f32 %v5647, %v5687
    %v5689 = vpop.f32.mrb[0].mxu0
    %v5690 = vadd.f32 %v5649, %v5689
    %v5691 = vpop.f32.mrb[0].mxu0
    %v5692 = vpop.f32.mrb[0].mxu0
    %5693 = vdwg.mxu0
    %5694 = vmatprep.subr.bf16.mxu0 %v4877
    %5695 = vmatpush1.bf16.msra.mxu0 %v4876
    %5696 = vmatprep.subr.bf16.mxu0 %v4883
    %5697 = vmatpush1.bf16.msra.mxu0 %v4882
    %5698 = vmatprep.subr.bf16.mxu0 %v4889
    %5699 = vmatpush1.bf16.msra.mxu0 %v4888
    %5700 = vmatprep.subr.bf16.mxu0 %v4895
    %5701 = vmatpush1.bf16.msra.mxu0 %v4894
    %5702 = vmatprep.subr.bf16.mxu0 %v4901
    %5703 = vmatpush1.bf16.msra.mxu0 %v4900
    %5704 = vmatprep.subr.bf16.mxu0 %v4907
    %5705 = vmatpush1.bf16.msra.mxu0 %v4906
    %5706 = vmatprep.subr.bf16.mxu0 %v4913
    %5707 = vmatpush1.bf16.msra.mxu0 %v4912
    %5708 = vmatprep.subr.bf16.mxu0 %v4919
    %5709 = vmatpush1.bf16.msra.mxu0 %v4918
    %5710 = vmatprep.subr.bf16.mxu0 %v4925
    %5711 = vmatpush1.bf16.msra.mxu0 %v4924
    %5712 = vmatprep.subr.bf16.mxu0 %v4931
    %5713 = vmatpush1.bf16.msra.mxu0 %v4930
    %5714 = vmatprep.subr.bf16.mxu0 %v4937
    %5715 = vmatpush1.bf16.msra.mxu0 %v4936
    %5716 = vmatprep.subr.bf16.mxu0 %v4943
    %5717 = vmatpush1.bf16.msra.mxu0 %v4942
    %5718 = vmatprep.subr.bf16.mxu0 %v4949
    %5719 = vmatpush1.bf16.msra.mxu0 %v4948
    %5720 = vmatprep.subr.bf16.mxu0 %v4955
    %5721 = vmatpush1.bf16.msra.mxu0 %v4954
    %5722 = vmatprep.subr.bf16.mxu0 %v4961
    %5723 = vmatpush1.bf16.msra.mxu0 %v4960
    %5724 = vmatprep.subr.bf16.mxu0 %v4967
    %5725 = vmatpush1.bf16.msra.mxu0 %v4966
    %5726 = vmatprep.mubr.bf16.mxu0 %v3684
    %5727 = vmatmul.mubr.bf16.gmra.mrb[0].mxu0 %v3683
    %v5728 = vpop.f32.mrb[0].mxu0
    %v5729 = vadd.f32 %v3997, %v5728
    %v5730 = vpop.f32.mrb[0].mxu0
    %v5731 = vadd.f32 %v4001, %v5730
    %v5732 = vpop.f32.mrb[0].mxu0
    %v5733 = vpop.f32.mrb[0].mxu0
    %5734 = vdwg.mxu0
    %5735 = vmatprep.subr.bf16.mxu0 %v4973
    %5736 = vmatpush1.bf16.msra.mxu0 %v4972
    %5737 = vmatprep.subr.bf16.mxu0 %v4979
    %5738 = vmatpush1.bf16.msra.mxu0 %v4978
    %5739 = vmatprep.subr.bf16.mxu0 %v4985
    %5740 = vmatpush1.bf16.msra.mxu0 %v4984
    %5741 = vmatprep.subr.bf16.mxu0 %v4991
    %5742 = vmatpush1.bf16.msra.mxu0 %v4990
    %5743 = vmatprep.subr.bf16.mxu0 %v4997
    %5744 = vmatpush1.bf16.msra.mxu0 %v4996
    %5745 = vmatprep.subr.bf16.mxu0 %v5003
    %5746 = vmatpush1.bf16.msra.mxu0 %v5002
    %5747 = vmatprep.subr.bf16.mxu0 %v5009
    %5748 = vmatpush1.bf16.msra.mxu0 %v5008
    %5749 = vmatprep.subr.bf16.mxu0 %v5015
    %5750 = vmatpush1.bf16.msra.mxu0 %v5014
    %5751 = vmatprep.subr.bf16.mxu0 %v5021
    %5752 = vmatpush1.bf16.msra.mxu0 %v5020
    %5753 = vmatprep.subr.bf16.mxu0 %v5027
    %5754 = vmatpush1.bf16.msra.mxu0 %v5026
    %5755 = vmatprep.subr.bf16.mxu0 %v5033
    %5756 = vmatpush1.bf16.msra.mxu0 %v5032
    %5757 = vmatprep.subr.bf16.mxu0 %v5039
    %5758 = vmatpush1.bf16.msra.mxu0 %v5038
    %5759 = vmatprep.subr.bf16.mxu0 %v5045
    %5760 = vmatpush1.bf16.msra.mxu0 %v5044
    %5761 = vmatprep.subr.bf16.mxu0 %v5051
    %5762 = vmatpush1.bf16.msra.mxu0 %v5050
    %5763 = vmatprep.subr.bf16.mxu0 %v5057
    %5764 = vmatpush1.bf16.msra.mxu0 %v5056
    %5765 = vmatprep.subr.bf16.mxu0 %v5063
    %5766 = vmatpush1.bf16.msra.mxu0 %v5062
    %5767 = vmatprep.mubr.bf16.mxu0 %v3686
    %5768 = vmatmul.mubr.bf16.gmra.mrb[0].mxu0 %v3685
    %v5769 = vpop.f32.mrb[0].mxu0
    %v5770 = vadd.f32 %v5729, %v5769
    %v5771 = vpop.f32.mrb[0].mxu0
    %v5772 = vadd.f32 %v5731, %v5771
    %v5773 = vpop.f32.mrb[0].mxu0
    %v5774 = vpop.f32.mrb[0].mxu0
    %5775 = vdwg.mxu0
    %5776 = vmatprep.subr.bf16.mxu0 %v5069
    %5777 = vmatpush1.bf16.msra.mxu0 %v5068
    %5778 = vmatprep.subr.bf16.mxu0 %v5075
    %5779 = vmatpush1.bf16.msra.mxu0 %v5074
    %5780 = vmatprep.subr.bf16.mxu0 %v5081
    %5781 = vmatpush1.bf16.msra.mxu0 %v5080
    %5782 = vmatprep.subr.bf16.mxu0 %v5087
    %5783 = vmatpush1.bf16.msra.mxu0 %v5086
    %5784 = vmatprep.subr.bf16.mxu0 %v5093
    %5785 = vmatpush1.bf16.msra.mxu0 %v5092
    %5786 = vmatprep.subr.bf16.mxu0 %v5099
    %5787 = vmatpush1.bf16.msra.mxu0 %v5098
    %5788 = vmatprep.subr.bf16.mxu0 %v5105
    %5789 = vmatpush1.bf16.msra.mxu0 %v5104
    %5790 = vmatprep.subr.bf16.mxu0 %v5111
    %5791 = vmatpush1.bf16.msra.mxu0 %v5110
    %5792 = vmatprep.subr.bf16.mxu0 %v5117
    %5793 = vmatpush1.bf16.msra.mxu0 %v5116
    %5794 = vmatprep.subr.bf16.mxu0 %v5123
    %5795 = vmatpush1.bf16.msra.mxu0 %v5122
    %5796 = vmatprep.subr.bf16.mxu0 %v5129
    %5797 = vmatpush1.bf16.msra.mxu0 %v5128
    %5798 = vmatprep.subr.bf16.mxu0 %v5135
    %5799 = vmatpush1.bf16.msra.mxu0 %v5134
    %5800 = vmatprep.subr.bf16.mxu0 %v5141
    %5801 = vmatpush1.bf16.msra.mxu0 %v5140
    %5802 = vmatprep.subr.bf16.mxu0 %v5147
    %5803 = vmatpush1.bf16.msra.mxu0 %v5146
    %5804 = vmatprep.subr.bf16.mxu0 %v5153
    %5805 = vmatpush1.bf16.msra.mxu0 %v5152
    %5806 = vmatprep.subr.bf16.mxu0 %v5159
    %5807 = vmatpush1.bf16.msra.mxu0 %v5158
    %5808 = vmatprep.mubr.bf16.mxu0 %v3688
    %5809 = vmatmul.mubr.bf16.gmra.mrb[0].mxu0 %v3687
    %v5810 = vpop.f32.mrb[0].mxu0
    %v5811 = vadd.f32 %v5770, %v5810
    %v5812 = vpop.f32.mrb[0].mxu0
    %v5813 = vadd.f32 %v5772, %v5812
    %v5814 = vpop.f32.mrb[0].mxu0
    %v5815 = vpop.f32.mrb[0].mxu0
    %5816 = vdwg.mxu0
    %v5817 = vmax.f32 %v5565, 0.0
    %v5818 = vmax.f32 %v5567, 0.0
    %v5819 = vmax.f32 %v5688, 0.0
    %v5820 = vmax.f32 %v5690, 0.0
    %v5821 = vmax.f32 %v5811, 0.0
    %v5822 = vmax.f32 %v5813, 0.0
    %v5823 = vpack.c.bf16 %v5817, %v5817
    %v5824 = vpack.c.bf16 %v5818, %v5818
    %v5825 = vpack.c.bf16 %v5819, %v5819
    %v5826 = vpack.c.bf16 %v5820, %v5820
    %v5827 = vpack.c.bf16 %v5821, %v5821
    %v5828 = vpack.c.bf16 %v5822, %v5822
    %v5925 = vunpack.c.l.b16 %v297
    %v5926 = vunpack.c.l.b16 %v298
    %v5927 = vunpack.c.l.b16 %v299
    %v5928 = vunpack.c.l.b16 %v300
    %v5929 = vunpack.c.l.b16 %v301
    %v5930 = vunpack.c.l.b16 %v302
    %v5931 = vunpack.c.l.b16 %v303
    %v5932 = vunpack.c.l.b16 %v304
    %v5933 = vunpack.c.l.b16 %v305
    %v5934 = vunpack.c.l.b16 %v306
    %v5935 = vunpack.c.l.b16 %v307
    %v5936 = vunpack.c.l.b16 %v308
    %v5937 = vunpack.c.l.b16 %v309
    %v5938 = vunpack.c.l.b16 %v310
    %v5939 = vunpack.c.l.b16 %v311
    %v5940 = vunpack.c.l.b16 %v312
    %v5941 = vunpack.c.l.b16 %v313
    %v5942 = vunpack.c.l.b16 %v314
    %v5943 = vunpack.c.l.b16 %v315
    %v5944 = vunpack.c.l.b16 %v316
    %v5945 = vunpack.c.l.b16 %v317
    %v5946 = vunpack.c.l.b16 %v318
    %v5947 = vunpack.c.l.b16 %v319
    %v5948 = vunpack.c.l.b16 %v320
    %v5949 = vunpack.c.l.b16 %v321
    %v5950 = vunpack.c.l.b16 %v322
    %v5951 = vunpack.c.l.b16 %v323
    %v5952 = vunpack.c.l.b16 %v324
    %v5953 = vunpack.c.l.b16 %v325
    %v5954 = vunpack.c.l.b16 %v326
    %v5955 = vunpack.c.l.b16 %v327
    %v5956 = vunpack.c.l.b16 %v328
    %v5957 = vunpack.c.l.b16 %v329
    %v5958 = vunpack.c.l.b16 %v330
    %v5959 = vunpack.c.l.b16 %v331
    %v5960 = vunpack.c.l.b16 %v332
    %v5961 = vunpack.c.l.b16 %v333
    %v5962 = vunpack.c.l.b16 %v334
    %v5963 = vunpack.c.l.b16 %v335
    %v5964 = vunpack.c.l.b16 %v336
    %v5965 = vunpack.c.l.b16 %v337
    %v5966 = vunpack.c.l.b16 %v338
    %v5967 = vunpack.c.l.b16 %v339
    %v5968 = vunpack.c.l.b16 %v340
    %v5969 = vunpack.c.l.b16 %v341
    %v5970 = vunpack.c.l.b16 %v342
    %v5971 = vunpack.c.l.b16 %v343
    %v5972 = vunpack.c.l.b16 %v344
    %v5973 = vunpack.c.l.b16 %v345
    %v5974 = vunpack.c.l.b16 %v346
    %v5975 = vunpack.c.l.b16 %v347
    %v5976 = vunpack.c.l.b16 %v348
    %v5977 = vunpack.c.l.b16 %v349
    %v5978 = vunpack.c.l.b16 %v350
    %v5979 = vunpack.c.l.b16 %v351
    %v5980 = vunpack.c.l.b16 %v352
    %v5981 = vunpack.c.l.b16 %v353
    %v5982 = vunpack.c.l.b16 %v354
    %v5983 = vunpack.c.l.b16 %v355
    %v5984 = vunpack.c.l.b16 %v356
    %v5985 = vunpack.c.l.b16 %v357
    %v5986 = vunpack.c.l.b16 %v358
    %v5987 = vunpack.c.l.b16 %v359
    %v5988 = vunpack.c.l.b16 %v360
    %v5989 = vunpack.c.l.b16 %v361
    %v5990 = vunpack.c.l.b16 %v362
    %v5991 = vunpack.c.l.b16 %v363
    %v5992 = vunpack.c.l.b16 %v364
    %v5993 = vunpack.c.l.b16 %v365
    %v5994 = vunpack.c.l.b16 %v366
    %v5995 = vunpack.c.l.b16 %v367
    %v5996 = vunpack.c.l.b16 %v368
    %v5997 = vunpack.c.l.b16 %v369
    %v5998 = vunpack.c.l.b16 %v370
    %v5999 = vunpack.c.l.b16 %v371
    %v6000 = vunpack.c.l.b16 %v372
    %v6001 = vunpack.c.l.b16 %v373
    %v6002 = vunpack.c.l.b16 %v374
    %v6003 = vunpack.c.l.b16 %v375
    %v6004 = vunpack.c.l.b16 %v376
    %v6005 = vunpack.c.l.b16 %v377
    %v6006 = vunpack.c.l.b16 %v378
    %v6007 = vunpack.c.l.b16 %v379
    %v6008 = vunpack.c.l.b16 %v380
    %v6009 = vunpack.c.l.b16 %v381
    %v6010 = vunpack.c.l.b16 %v382
    %v6011 = vunpack.c.l.b16 %v383
    %v6012 = vunpack.c.l.b16 %v384
    %v6013 = vunpack.c.l.b16 %v385
    %v6014 = vunpack.c.l.b16 %v386
    %v6015 = vunpack.c.l.b16 %v387
    %v6016 = vunpack.c.l.b16 %v388
    %v6017 = vunpack.c.l.b16 %v389
    %v6018 = vunpack.c.l.b16 %v390
    %v6019 = vunpack.c.l.b16 %v391
    %v6020 = vunpack.c.l.b16 %v392
    %v6021 = vpack.c.b16 %v5926, %v5925
    %v6022 = vpack.c.b16 %v5928, %v5927
    %v6023 = vpack.c.b16 %v5930, %v5929
    %v6024 = vpack.c.b16 %v5932, %v5931
    %v6025 = vpack.c.b16 %v5934, %v5933
    %v6026 = vpack.c.b16 %v5936, %v5935
    %v6027 = vpack.c.b16 %v5938, %v5937
    %v6028 = vpack.c.b16 %v5940, %v5939
    %v6029 = vpack.c.b16 %v5942, %v5941
    %v6030 = vpack.c.b16 %v5944, %v5943
    %v6031 = vpack.c.b16 %v5946, %v5945
    %v6032 = vpack.c.b16 %v5948, %v5947
    %v6033 = vpack.c.b16 %v5950, %v5949
    %v6034 = vpack.c.b16 %v5952, %v5951
    %v6035 = vpack.c.b16 %v5954, %v5953
    %v6036 = vpack.c.b16 %v5956, %v5955
    %v6037 = vpack.c.b16 %v5958, %v5957
    %v6038 = vpack.c.b16 %v5960, %v5959
    %v6039 = vpack.c.b16 %v5962, %v5961
    %v6040 = vpack.c.b16 %v5964, %v5963
    %v6041 = vpack.c.b16 %v5966, %v5965
    %v6042 = vpack.c.b16 %v5968, %v5967
    %v6043 = vpack.c.b16 %v5970, %v5969
    %v6044 = vpack.c.b16 %v5972, %v5971
    %v6045 = vpack.c.b16 %v5974, %v5973
    %v6046 = vpack.c.b16 %v5976, %v5975
    %v6047 = vpack.c.b16 %v5978, %v5977
    %v6048 = vpack.c.b16 %v5980, %v5979
    %v6049 = vpack.c.b16 %v5982, %v5981
    %v6050 = vpack.c.b16 %v5984, %v5983
    %v6051 = vpack.c.b16 %v5986, %v5985
    %v6052 = vpack.c.b16 %v5988, %v5987
    %v6053 = vpack.c.b16 %v5990, %v5989
    %v6054 = vpack.c.b16 %v5992, %v5991
    %v6055 = vpack.c.b16 %v5994, %v5993
    %v6056 = vpack.c.b16 %v5996, %v5995
    %v6057 = vpack.c.b16 %v5998, %v5997
    %v6058 = vpack.c.b16 %v6000, %v5999
    %v6059 = vpack.c.b16 %v6002, %v6001
    %v6060 = vpack.c.b16 %v6004, %v6003
    %v6061 = vpack.c.b16 %v6006, %v6005
    %v6062 = vpack.c.b16 %v6008, %v6007
    %v6063 = vpack.c.b16 %v6010, %v6009
    %v6064 = vpack.c.b16 %v6012, %v6011
    %v6065 = vpack.c.b16 %v6014, %v6013
    %v6066 = vpack.c.b16 %v6016, %v6015
    %v6067 = vpack.c.b16 %v6018, %v6017
    %v6068 = vpack.c.b16 %v6020, %v6019
    %6117 = vmatprep.subr.bf16.mxu0 0
    %6118 = vmatpush1.bf16.msra.mxu0 %v6021
    %6119 = vmatprep.subr.bf16.mxu0 0
    %6120 = vmatpush1.bf16.msra.mxu0 %v6022
    %6121 = vmatprep.subr.bf16.mxu0 0
    %6122 = vmatpush1.bf16.msra.mxu0 %v6023
    %6123 = vmatprep.subr.bf16.mxu0 0
    %6124 = vmatpush1.bf16.msra.mxu0 %v6024
    %6125 = vmatprep.subr.bf16.mxu0 0
    %6126 = vmatpush1.bf16.msra.mxu0 %v6025
    %6127 = vmatprep.subr.bf16.mxu0 0
    %6128 = vmatpush1.bf16.msra.mxu0 %v6026
    %6129 = vmatprep.subr.bf16.mxu0 0
    %6130 = vmatpush1.bf16.msra.mxu0 %v6027
    %6131 = vmatprep.subr.bf16.mxu0 0
    %6132 = vmatpush1.bf16.msra.mxu0 %v6028
    %6133 = vmatprep.subr.bf16.mxu0 0
    %6134 = vmatpush1.bf16.msra.mxu0 %v6029
    %6135 = vmatprep.subr.bf16.mxu0 0
    %6136 = vmatpush1.bf16.msra.mxu0 %v6030
    %6137 = vmatprep.subr.bf16.mxu0 0
    %6138 = vmatpush1.bf16.msra.mxu0 %v6031
    %6139 = vmatprep.subr.bf16.mxu0 0
    %6140 = vmatpush1.bf16.msra.mxu0 %v6032
    %6141 = vmatprep.subr.bf16.mxu0 0
    %6142 = vmatpush1.bf16.msra.mxu0 %v6033
    %6143 = vmatprep.subr.bf16.mxu0 0
    %6144 = vmatpush1.bf16.msra.mxu0 %v6034
    %6145 = vmatprep.subr.bf16.mxu0 0
    %6146 = vmatpush1.bf16.msra.mxu0 %v6035
    %6147 = vmatprep.subr.bf16.mxu0 0
    %6148 = vmatpush1.bf16.msra.mxu0 %v6036
    %6149 = vmatprep.mubr.bf16.mxu0 %v5824
    %6150 = vmatmul.mubr.bf16.gmra.mrb[0].mxu0 %v5823
    %v6151 = vpop.f32.mrb[0].mxu0
    %v6152 = vadd.f32 %v200, %v6151
    %v6153 = vpop.f32.mrb[0].mxu0
    %v6154 = vpop.f32.mrb[0].mxu0
    %v6155 = vpop.f32.mrb[0].mxu0
    %6156 = vdwg.mxu0
    %6157 = vmatprep.subr.bf16.mxu0 0
    %6158 = vmatpush1.bf16.msra.mxu0 %v6037
    %6159 = vmatprep.subr.bf16.mxu0 0
    %6160 = vmatpush1.bf16.msra.mxu0 %v6038
    %6161 = vmatprep.subr.bf16.mxu0 0
    %6162 = vmatpush1.bf16.msra.mxu0 %v6039
    %6163 = vmatprep.subr.bf16.mxu0 0
    %6164 = vmatpush1.bf16.msra.mxu0 %v6040
    %6165 = vmatprep.subr.bf16.mxu0 0
    %6166 = vmatpush1.bf16.msra.mxu0 %v6041
    %6167 = vmatprep.subr.bf16.mxu0 0
    %6168 = vmatpush1.bf16.msra.mxu0 %v6042
    %6169 = vmatprep.subr.bf16.mxu0 0
    %6170 = vmatpush1.bf16.msra.mxu0 %v6043
    %6171 = vmatprep.subr.bf16.mxu0 0
    %6172 = vmatpush1.bf16.msra.mxu0 %v6044
    %6173 = vmatprep.subr.bf16.mxu0 0
    %6174 = vmatpush1.bf16.msra.mxu0 %v6045
    %6175 = vmatprep.subr.bf16.mxu0 0
    %6176 = vmatpush1.bf16.msra.mxu0 %v6046
    %6177 = vmatprep.subr.bf16.mxu0 0
    %6178 = vmatpush1.bf16.msra.mxu0 %v6047
    %6179 = vmatprep.subr.bf16.mxu0 0
    %6180 = vmatpush1.bf16.msra.mxu0 %v6048
    %6181 = vmatprep.subr.bf16.mxu0 0
    %6182 = vmatpush1.bf16.msra.mxu0 %v6049
    %6183 = vmatprep.subr.bf16.mxu0 0
    %6184 = vmatpush1.bf16.msra.mxu0 %v6050
    %6185 = vmatprep.subr.bf16.mxu0 0
    %6186 = vmatpush1.bf16.msra.mxu0 %v6051
    %6187 = vmatprep.subr.bf16.mxu0 0
    %6188 = vmatpush1.bf16.msra.mxu0 %v6052
    %6189 = vmatprep.mubr.bf16.mxu0 %v5826
    %6190 = vmatmul.mubr.bf16.gmra.mrb[0].mxu0 %v5825
    %v6191 = vpop.f32.mrb[0].mxu0
    %v6192 = vadd.f32 %v6152, %v6191
    %v6193 = vpop.f32.mrb[0].mxu0
    %v6194 = vpop.f32.mrb[0].mxu0
    %v6195 = vpop.f32.mrb[0].mxu0
    %6196 = vdwg.mxu0
    %6197 = vmatprep.subr.bf16.mxu0 0
    %6198 = vmatpush1.bf16.msra.mxu0 %v6053
    %6199 = vmatprep.subr.bf16.mxu0 0
    %6200 = vmatpush1.bf16.msra.mxu0 %v6054
    %6201 = vmatprep.subr.bf16.mxu0 0
    %6202 = vmatpush1.bf16.msra.mxu0 %v6055
    %6203 = vmatprep.subr.bf16.mxu0 0
    %6204 = vmatpush1.bf16.msra.mxu0 %v6056
    %6205 = vmatprep.subr.bf16.mxu0 0
    %6206 = vmatpush1.bf16.msra.mxu0 %v6057
    %6207 = vmatprep.subr.bf16.mxu0 0
    %6208 = vmatpush1.bf16.msra.mxu0 %v6058
    %6209 = vmatprep.subr.bf16.mxu0 0
    %6210 = vmatpush1.bf16.msra.mxu0 %v6059
    %6211 = vmatprep.subr.bf16.mxu0 0
    %6212 = vmatpush1.bf16.msra.mxu0 %v6060
    %6213 = vmatprep.subr.bf16.mxu0 0
    %6214 = vmatpush1.bf16.msra.mxu0 %v6061
    %6215 = vmatprep.subr.bf16.mxu0 0
    %6216 = vmatpush1.bf16.msra.mxu0 %v6062
    %6217 = vmatprep.subr.bf16.mxu0 0
    %6218 = vmatpush1.bf16.msra.mxu0 %v6063
    %6219 = vmatprep.subr.bf16.mxu0 0
    %6220 = vmatpush1.bf16.msra.mxu0 %v6064
    %6221 = vmatprep.subr.bf16.mxu0 0
    %6222 = vmatpush1.bf16.msra.mxu0 %v6065
    %6223 = vmatprep.subr.bf16.mxu0 0
    %6224 = vmatpush1.bf16.msra.mxu0 %v6066
    %6225 = vmatprep.subr.bf16.mxu0 0
    %6226 = vmatpush1.bf16.msra.mxu0 %v6067
    %6227 = vmatprep.subr.bf16.mxu0 0
    %6228 = vmatpush1.bf16.msra.mxu0 %v6068
    %6229 = vmatprep.mubr.bf16.mxu0 %v5828
    %6230 = vmatmul.mubr.bf16.gmra.mrb[0].mxu0 %v5827
    %v6231 = vpop.f32.mrb[0].mxu0
    %v6232 = vadd.f32 %v6192, %v6231
    %v6233 = vpop.f32.mrb[0].mxu0
    %v6234 = vpop.f32.mrb[0].mxu0
    %v6235 = vpop.f32.mrb[0].mxu0
    %6236 = vdwg.mxu0
    %6237 = vst [vmem:[#allocation13] sm:$0xff] 0.0
    %6238 = vst [vmem:[#allocation13 + $0x8] sm:$0xff] 0.0
    %6239 = vst [vmem:[#allocation13 + $0x10] sm:$0xff] 0.0
    %vm6240 = vcmask 48128
    %6241 = vst.msk [vmem:[#allocation13] sm:$0xff] %vm6240, %v6232
    %6242 = vst.msk [vmem:[#allocation13 + $0x8] sm:$0xff] %vm3347, %v3334
    %6243 = vst.msk [vmem:[#allocation13 + $0x10] sm:$0xff] %vm3347, %v3343
    // Predicated region
    $region50: #{tpu_custom_call.1} parent=1 // pred_check
      _
    $region51: #{tpu_custom_call.1} parent=1 // pred_check_branch
      %6245 = sbr.rel (0) target = $region53
    $region52: #{tpu_custom_call.1} parent=1 // pred_region
      %s6247 = ssub.s32 384, 384
      %6248 = vsyncadd [#allocation4], %s6247
      %s6250 = sshll.u32 [#allocation13], 4
      %s6251 = int_to_ptr.vmem [resolvable:$true] %s6250
      %6253 = dma.vmem_to_hbm [thread:$0]  %s6251, 384, %s6, [#allocation4]
    $region53: #{tpu_custom_call.1} parent=1 // pred_fallthru
      _
    // Predicated region
    $region54: #{tpu_custom_call.1} parent=1 // pred_check
      _
    $region55: #{tpu_custom_call.1} parent=1 // pred_check_branch
      %6255 = sbr.rel (0) target = $region57
    $region56: #{tpu_custom_call.1} parent=1 // pred_region
      %6256 = dma.done [#allocation4], 384
    $region57: #{tpu_custom_call.1} parent=1 // pred_fallthru
      _
    %6257 = vsyncpa [#allocation3], 1
    %6258 = vsyncpa [#allocation6], 1
    %6259 = vsyncpa [#allocation9], 1
    %6260 = vsyncpa [#allocation12], 1
    %6261 = vsyncpa [#allocation4], 1

</llo_original>
